<compile_context>
chip_gen: v5e
topology: v5e:2x2
jax: 0.10.0
libtpu: 0.0.40
codegen_flags: <defaults>
</compile_context>

<pallas_src>
import math

import jax
import jax.numpy as jnp
from jax.experimental import pallas as pl
from jax.experimental.pallas import tpu as pltpu

LN_EPS = 1e-5


def _round_up(x, m):
    return ((x + m - 1) // m) * m


# ----------------------------- kernel body ---------------------------------
def _cell(x2, w_ih_f, w_ih_b, b, w_hh, w_fc, v_fc, *, H, GW, L, B, last):
    """One bidirectional LSTMCell (+ LayerNorm + Linear) on (L*B, Din) input.

    Lane layout (per gate block of width GW = round_up(2H, 128)):
      lanes [0:H)   -> forward direction
      lanes [H:2H)  -> backward direction
      lanes [2H:GW) -> zero padding (stays exactly zero through the recurrence)
    """
    f32 = jnp.float32

    # Bulk input projections for all timesteps / both directions (off-chain).
    gxf = jnp.dot(x2, w_ih_f, preferred_element_type=f32)          # (L*B, 4GW)
    gxb = jnp.dot(x2, w_ih_b, preferred_element_type=f32)          # (L*B, 4GW)
    # Combined per-step pre-activation: step k uses fwd(time k) + bwd(time L-1-k).
    gxc = gxf + jnp.concatenate(
        [gxb[(L - 1 - t) * B:(L - t) * B, :] for t in range(L)], axis=0) + b

    lane = jax.lax.broadcasted_iota(jnp.int32, (B, GW), 1)
    mask_f = (lane < H).astype(f32)
    mask_b = jnp.logical_and(lane >= H, lane < 2 * H).astype(f32)

    def sig(z):                                  # sigmoid via one EUP tanh
        return 0.5 * jnp.tanh(0.5 * z) + 0.5

    h = jnp.zeros((B, GW), f32)
    c = jnp.zeros((B, GW), f32)
    hs = []
    for k in range(L):
        # Single fused recurrent matmul for both directions (block-diag w_hh).
        g = gxc[k * B:(k + 1) * B, :] + jnp.dot(h, w_hh, preferred_element_type=f32)
        i = sig(g[:, 0:GW])                      # whole-vreg gate slices
        f = sig(g[:, GW:2 * GW])
        gg = jnp.tanh(g[:, 2 * GW:3 * GW])
        o = sig(g[:, 3 * GW:4 * GW])
        c = f * c + i * gg
        h = o * jnp.tanh(c)
        if (not last) or k == 0:
            hs.append(h)

    if last:
        # Only t = L-1 is needed: fwd state after the final step, bwd state
        # after the first step (it consumed x_{L-1}).
        y = h * mask_f + hs[0] * mask_b                               # (B, GW)
    else:
        # y[t] = [h_f(t) | h_b(t) | 0]; bwd(t) was produced at step L-1-t.
        y = jnp.concatenate(
            [hs[t] * mask_f + hs[L - 1 - t] * mask_b for t in range(L)], axis=0)

    # LayerNorm + Linear, decomposed. Padded lanes are exactly zero so sums
    # over GW lanes equal sums over the 2H real features. ln_g is folded into
    # w_fc and ln_b into the bias wrapper-side.
    r = 1.0 / (2.0 * H)
    mu = jnp.sum(y, axis=-1, keepdims=True) * r
    var = jnp.sum(y * y, axis=-1, keepdims=True) * r - mu * mu
    inv = jax.lax.rsqrt(var + LN_EPS)
    proj = jnp.dot(y, w_fc, preferred_element_type=f32)               # (rows, Hout)
    csum = jnp.broadcast_to(v_fc[0:1, :], proj.shape)
    bias = jnp.broadcast_to(v_fc[1:2, :], proj.shape)
    # Dropout == identity (eval mode).
    return inv * (proj - mu * csum) + bias


def _make_stack_kernel(n_cells, L, B, hs_list):
    def kernel(*refs):
        x_ref = refs[0]
        o_ref = refs[-1]
        w = refs[1:-1]
        x = x_ref[...].astype(jnp.float32)                            # (L*B, Din)
        for ci in range(n_cells):
            w_ih_f, w_ih_b, b, w_hh, w_fc, v_fc = (r[...] for r in w[6 * ci:6 * ci + 6])
            x = _cell(x, w_ih_f, w_ih_b, b, w_hh, w_fc, v_fc,
                      H=hs_list[ci], GW=w_hh.shape[0], L=L, B=B,
                      last=(ci == n_cells - 1))
        o_ref[...] = x.astype(o_ref.dtype)
    return kernel


# --------------------------- wrapper / packing ------------------------------
def _pack_cell(p, d_in):
    """Pack one cell's weights into the lane-padded fused layout."""
    H = p["w_hh_f"].shape[0]
    Hout = p["fc_w"].shape[1]
    GW = _round_up(2 * H, 128)
    hi = jax.lax.Precision.HIGHEST

    w_ih_f = jnp.zeros((d_in, 4 * GW), jnp.float32)
    w_ih_b = jnp.zeros((d_in, 4 * GW), jnp.float32)
    b = jnp.zeros((1, 4 * GW), jnp.float32)
    w_hh = jnp.zeros((GW, 4 * GW), jnp.float32)
    for g in range(4):                            # gate order (i, f, g, o)
        lo = g * GW
        w_ih_f = w_ih_f.at[:, lo:lo + H].set(p["w_ih_f"][:, g * H:(g + 1) * H])
        w_ih_b = w_ih_b.at[:, lo + H:lo + 2 * H].set(p["w_ih_b"][:, g * H:(g + 1) * H])
        b = b.at[:, lo:lo + H].set(p["b_f"][:, g * H:(g + 1) * H])
        b = b.at[:, lo + H:lo + 2 * H].set(p["b_b"][:, g * H:(g + 1) * H])
        w_hh = w_hh.at[0:H, lo:lo + H].set(p["w_hh_f"][:, g * H:(g + 1) * H])
        w_hh = w_hh.at[H:2 * H, lo + H:lo + 2 * H].set(p["w_hh_b"][:, g * H:(g + 1) * H])

    # Fold LayerNorm affine into the FC: out = inv*(y@W' - mu*csum) + b_eff.
    fc_scaled = p["ln_g"].reshape(2 * H, 1) * p["fc_w"]               # (2H, Hout)
    w_fc = jnp.zeros((GW, Hout), jnp.float32).at[0:2 * H, :].set(fc_scaled)
    csum = jnp.sum(fc_scaled, axis=0, keepdims=True)                  # (1, Hout)
    fc_b_eff = p["fc_b"] + jnp.dot(p["ln_b"], p["fc_w"], precision=hi)
    v_fc = jnp.concatenate([csum, fc_b_eff], axis=0)                  # (2, Hout)
    return [w_ih_f, w_ih_b, b, w_hh, w_fc, v_fc]


def lstm_layer_forward(x, params):
    """x: (B, L, in_ch) -> (B, h_sizes[-1]). Single grid-less pallas_call."""
    B, L, d_in = x.shape
    # Layout plumbing outside the kernel: time-major, flattened to (L*B, Din).
    x_flat = jnp.transpose(x, (1, 0, 2)).reshape(L * B, d_in)

    args = [x_flat]
    hs_list = []
    din = d_in
    for p in params:
        args += _pack_cell(p, din)
        hs_list.append(p["w_hh_f"].shape[0])
        din = p["fc_w"].shape[1]

    h_last = params[-1]["fc_w"].shape[1]
    return pl.pallas_call(
        _make_stack_kernel(len(params), L, B, tuple(hs_list)),
        out_shape=jax.ShapeDtypeStruct((B, h_last), x.dtype),
        in_specs=[pl.BlockSpec(memory_space=pltpu.MemorySpace.VMEM) for _ in args],
        out_specs=pl.BlockSpec(memory_space=pltpu.MemorySpace.VMEM),
    )(*args)


# ------------------------- pure-JAX reference ------------------------------
def _sigmoid(z):
    return 1.0 / (1.0 + jnp.exp(-z))


def _ref_cell(x, p):
    B, L, _ = x.shape
    H = p["w_hh_f"].shape[0]
    hi = jax.lax.Precision.HIGHEST

    def run_direction(w_ih, w_hh, b, reverse):
        h = jnp.zeros((B, H), jnp.float32)
        c = jnp.zeros((B, H), jnp.float32)
        outs = [None] * L
        order = range(L - 1, -1, -1) if reverse else range(L)
        for t in order:
            g = (jnp.dot(x[:, t, :], w_ih, precision=hi)
                 + jnp.dot(h, w_hh, precision=hi) + b)
            i = _sigmoid(g[:, 0:H])
            f = _sigmoid(g[:, H:2 * H])
            gg = jnp.tanh(g[:, 2 * H:3 * H])
            o = _sigmoid(g[:, 3 * H:4 * H])
            c = f * c + i * gg
            h = o * jnp.tanh(c)
            outs[t] = h
        return jnp.stack(outs, axis=1)                           # (B, L, H)

    h_f = run_direction(p["w_ih_f"], p["w_hh_f"], p["b_f"], False)
    h_b = run_direction(p["w_ih_b"], p["w_hh_b"], p["b_b"], True)
    y = jnp.concatenate([h_f, h_b], axis=-1)                     # (B, L, 2H)
    mu = jnp.mean(y, axis=-1, keepdims=True)
    var = jnp.mean((y - mu) ** 2, axis=-1, keepdims=True)
    y = (y - mu) / jnp.sqrt(var + LN_EPS) * p["ln_g"] + p["ln_b"]
    return jnp.dot(y, p["fc_w"], precision=hi) + p["fc_b"]       # (B, L, H)


def reference_jax(x, params):
    for p in params:
        x = _ref_cell(x, p)
    return x[:, -1, :]


def make_params(key, in_ch, h_sizes):
    params = []
    d_in = in_ch
    for hs in h_sizes:
        key, *ks = jax.random.split(key, 13)
        k = 1.0 / math.sqrt(hs)

        def u(rng, shape, scale=k):
            return jax.random.uniform(rng, shape, jnp.float32, -scale, scale)

        params.append({
            # weights stored as (in, out) so kernels compute x @ W (== PyTorch x @ W.T)
            "w_ih_f": u(ks[0], (d_in, 4 * hs)),
            "w_hh_f": u(ks[1], (hs, 4 * hs)),
            "b_f":    u(ks[2], (1, 4 * hs)) + u(ks[3], (1, 4 * hs)),   # b_ih + b_hh
            "w_ih_b": u(ks[4], (d_in, 4 * hs)),
            "w_hh_b": u(ks[5], (hs, 4 * hs)),
            "b_b":    u(ks[6], (1, 4 * hs)) + u(ks[7], (1, 4 * hs)),
            "ln_g":   1.0 + 0.1 * jax.random.normal(ks[8], (1, 2 * hs), jnp.float32),
            "ln_b":   0.1 * jax.random.normal(ks[9], (1, 2 * hs), jnp.float32),
            "fc_w":   u(ks[10], (2 * hs, hs), 1.0 / math.sqrt(2 * hs)),
            "fc_b":   u(ks[11], (1, hs), 1.0 / math.sqrt(2 * hs)),
        })
        d_in = hs
    return params


if __name__ == "__main__":
    key = jax.random.PRNGKey(0)
    kx, kp = jax.random.split(key)
    B, L, IN_CH = 8, 8, 32
    H_SIZES = [32, 16]          # two stacked bidirectional LSTM cells

    x = jax.random.normal(kx, (B, L, IN_CH), jnp.float32)
    params = make_params(kp, IN_CH, H_SIZES)

    out = lstm_layer_forward(x, params)
    out = jax.block_until_ready(out)

    ref = reference_jax(x, params)
    assert out.shape == (B, H_SIZES[-1])
    err = float(jnp.max(jnp.abs(out - ref)))
    assert jnp.allclose(out, ref, atol=1e-3, rtol=1e-3), f"mismatch vs reference (max abs err {err})"
    print("KERNEL_OK")
</pallas_src>

<mosaic_0001>
module attributes {stable_mosaic.version = 11 : i64} {
  func.func @kernel(%arg0: memref<64x32xf32, #tpu.memory_space<vmem>>, %arg1: memref<32x512xf32, #tpu.memory_space<vmem>>, %arg2: memref<32x512xf32, #tpu.memory_space<vmem>>, %arg3: memref<1x512xf32, #tpu.memory_space<vmem>>, %arg4: memref<128x512xf32, #tpu.memory_space<vmem>>, %arg5: memref<128x32xf32, #tpu.memory_space<vmem>>, %arg6: memref<2x32xf32, #tpu.memory_space<vmem>>, %arg7: memref<32x512xf32, #tpu.memory_space<vmem>>, %arg8: memref<32x512xf32, #tpu.memory_space<vmem>>, %arg9: memref<1x512xf32, #tpu.memory_space<vmem>>, %arg10: memref<128x512xf32, #tpu.memory_space<vmem>>, %arg11: memref<128x16xf32, #tpu.memory_space<vmem>>, %arg12: memref<2x16xf32, #tpu.memory_space<vmem>>, %arg13: memref<8x16xf32, #tpu.memory_space<vmem>>) attributes {dimension_semantics = [], scalar_prefetch = 0 : i64, scratch_operands = 0 : i64, tpu.core_type = #tpu.core_type<tc>} {
    %c0 = arith.constant 0 : index
    %c0_0 = arith.constant 0 : index
    %0 = vector.load %arg0[%c0, %c0_0] : memref<64x32xf32, #tpu.memory_space<vmem>>, vector<64x32xf32>
    %c0_1 = arith.constant 0 : index
    %c0_2 = arith.constant 0 : index
    %1 = vector.load %arg1[%c0_1, %c0_2] : memref<32x512xf32, #tpu.memory_space<vmem>>, vector<32x512xf32>
    %c0_3 = arith.constant 0 : index
    %c0_4 = arith.constant 0 : index
    %2 = vector.load %arg2[%c0_3, %c0_4] : memref<32x512xf32, #tpu.memory_space<vmem>>, vector<32x512xf32>
    %c0_5 = arith.constant 0 : index
    %c0_6 = arith.constant 0 : index
    %3 = vector.load %arg3[%c0_5, %c0_6] : memref<1x512xf32, #tpu.memory_space<vmem>>, vector<1x512xf32>
    %c0_7 = arith.constant 0 : index
    %c0_8 = arith.constant 0 : index
    %4 = vector.load %arg4[%c0_7, %c0_8] : memref<128x512xf32, #tpu.memory_space<vmem>>, vector<128x512xf32>
    %c0_9 = arith.constant 0 : index
    %c0_10 = arith.constant 0 : index
    %5 = vector.load %arg5[%c0_9, %c0_10] : memref<128x32xf32, #tpu.memory_space<vmem>>, vector<128x32xf32>
    %c0_11 = arith.constant 0 : index
    %c0_12 = arith.constant 0 : index
    %6 = vector.load %arg6[%c0_11, %c0_12] : memref<2x32xf32, #tpu.memory_space<vmem>>, vector<2x32xf32>
    %cst = arith.constant dense<0.000000e+00> : vector<64x512xf32>
    %7 = tpu.matmul %0, %1, %cst {dimension_numbers = #tpu.dot_dimension_numbers<[1], [0], [0], [1], [0, 0, 1, 1], [], []>} : vector<64x32xf32>, vector<32x512xf32>, vector<64x512xf32> -> vector<64x512xf32>
    %cst_13 = arith.constant dense<0.000000e+00> : vector<64x512xf32>
    %8 = tpu.matmul %0, %2, %cst_13 {dimension_numbers = #tpu.dot_dimension_numbers<[1], [0], [0], [1], [0, 0, 1, 1], [], []>} : vector<64x32xf32>, vector<32x512xf32>, vector<64x512xf32> -> vector<64x512xf32>
    %9 = vector.extract_strided_slice %8 {offsets = [56, 0], sizes = [8, 512], strides = [1, 1]} : vector<64x512xf32> to vector<8x512xf32>
    %10 = vector.extract_strided_slice %8 {offsets = [48, 0], sizes = [8, 512], strides = [1, 1]} : vector<64x512xf32> to vector<8x512xf32>
    %11 = vector.extract_strided_slice %8 {offsets = [40, 0], sizes = [8, 512], strides = [1, 1]} : vector<64x512xf32> to vector<8x512xf32>
    %12 = vector.extract_strided_slice %8 {offsets = [32, 0], sizes = [8, 512], strides = [1, 1]} : vector<64x512xf32> to vector<8x512xf32>
    %13 = vector.extract_strided_slice %8 {offsets = [24, 0], sizes = [8, 512], strides = [1, 1]} : vector<64x512xf32> to vector<8x512xf32>
    %14 = vector.extract_strided_slice %8 {offsets = [16, 0], sizes = [8, 512], strides = [1, 1]} : vector<64x512xf32> to vector<8x512xf32>
    %15 = vector.extract_strided_slice %8 {offsets = [8, 0], sizes = [8, 512], strides = [1, 1]} : vector<64x512xf32> to vector<8x512xf32>
    %16 = vector.extract_strided_slice %8 {offsets = [0, 0], sizes = [8, 512], strides = [1, 1]} : vector<64x512xf32> to vector<8x512xf32>
    %17 = tpu.concatenate %9, %10, %11, %12, %13, %14, %15, %16 in 0 : vector<8x512xf32>, vector<8x512xf32>, vector<8x512xf32>, vector<8x512xf32>, vector<8x512xf32>, vector<8x512xf32>, vector<8x512xf32>, vector<8x512xf32> -> vector<64x512xf32>
    %18 = arith.addf %7, %17 : vector<64x512xf32>
    %19 = vector.broadcast %3 : vector<1x512xf32> to vector<64x512xf32>
    %20 = arith.addf %18, %19 : vector<64x512xf32>
    %21 = tpu.iota {dimensions = array<i32: 1>} : vector<8x128xi32>
    %c32_i32 = arith.constant 32 : i32
    %22 = vector.broadcast %c32_i32 : i32 to vector<8x128xi32>
    %23 = arith.cmpi slt, %21, %22 : vector<8x128xi32>
    %24 = arith.extui %23 : vector<8x128xi1> to vector<8x128xi32>
    %25 = arith.sitofp %24 : vector<8x128xi32> to vector<8x128xf32>
    %c32_i32_14 = arith.constant 32 : i32
    %26 = vector.broadcast %c32_i32_14 : i32 to vector<8x128xi32>
    %27 = arith.cmpi sge, %21, %26 : vector<8x128xi32>
    %c64_i32 = arith.constant 64 : i32
    %28 = vector.broadcast %c64_i32 : i32 to vector<8x128xi32>
    %29 = arith.cmpi slt, %21, %28 : vector<8x128xi32>
    %30 = arith.andi %27, %29 : vector<8x128xi1>
    %31 = arith.extui %30 : vector<8x128xi1> to vector<8x128xi32>
    %32 = arith.sitofp %31 : vector<8x128xi32> to vector<8x128xf32>
    %cst_15 = arith.constant 0.000000e+00 : f32
    %33 = vector.broadcast %cst_15 : f32 to vector<8x128xf32>
    %cst_16 = arith.constant 0.000000e+00 : f32
    %34 = vector.broadcast %cst_16 : f32 to vector<8x128xf32>
    %35 = vector.extract_strided_slice %20 {offsets = [0, 0], sizes = [8, 512], strides = [1, 1]} : vector<64x512xf32> to vector<8x512xf32>
    %cst_17 = arith.constant dense<0.000000e+00> : vector<8x512xf32>
    %36 = tpu.matmul %33, %4, %cst_17 {dimension_numbers = #tpu.dot_dimension_numbers<[1], [0], [0], [1], [0, 0, 1, 1], [], []>} : vector<8x128xf32>, vector<128x512xf32>, vector<8x512xf32> -> vector<8x512xf32>
    %37 = arith.addf %35, %36 : vector<8x512xf32>
    %38 = vector.extract_strided_slice %37 {offsets = [0, 0], sizes = [8, 128], strides = [1, 1]} : vector<8x512xf32> to vector<8x128xf32>
    %cst_18 = arith.constant 5.000000e-01 : f32
    %39 = vector.broadcast %cst_18 : f32 to vector<8x128xf32>
    %40 = arith.mulf %39, %38 : vector<8x128xf32>
    %41 = math.tanh %40 : vector<8x128xf32>
    %cst_19 = arith.constant 5.000000e-01 : f32
    %42 = vector.broadcast %cst_19 : f32 to vector<8x128xf32>
    %43 = arith.mulf %42, %41 : vector<8x128xf32>
    %cst_20 = arith.constant 5.000000e-01 : f32
    %44 = vector.broadcast %cst_20 : f32 to vector<8x128xf32>
    %45 = arith.addf %43, %44 : vector<8x128xf32>
    %46 = vector.extract_strided_slice %37 {offsets = [0, 128], sizes = [8, 128], strides = [1, 1]} : vector<8x512xf32> to vector<8x128xf32>
    %cst_21 = arith.constant 5.000000e-01 : f32
    %47 = vector.broadcast %cst_21 : f32 to vector<8x128xf32>
    %48 = arith.mulf %47, %46 : vector<8x128xf32>
    %49 = math.tanh %48 : vector<8x128xf32>
    %cst_22 = arith.constant 5.000000e-01 : f32
    %50 = vector.broadcast %cst_22 : f32 to vector<8x128xf32>
    %51 = arith.mulf %50, %49 : vector<8x128xf32>
    %cst_23 = arith.constant 5.000000e-01 : f32
    %52 = vector.broadcast %cst_23 : f32 to vector<8x128xf32>
    %53 = arith.addf %51, %52 : vector<8x128xf32>
    %54 = vector.extract_strided_slice %37 {offsets = [0, 256], sizes = [8, 128], strides = [1, 1]} : vector<8x512xf32> to vector<8x128xf32>
    %55 = math.tanh %54 : vector<8x128xf32>
    %56 = vector.extract_strided_slice %37 {offsets = [0, 384], sizes = [8, 128], strides = [1, 1]} : vector<8x512xf32> to vector<8x128xf32>
    %cst_24 = arith.constant 5.000000e-01 : f32
    %57 = vector.broadcast %cst_24 : f32 to vector<8x128xf32>
    %58 = arith.mulf %57, %56 : vector<8x128xf32>
    %59 = math.tanh %58 : vector<8x128xf32>
    %cst_25 = arith.constant 5.000000e-01 : f32
    %60 = vector.broadcast %cst_25 : f32 to vector<8x128xf32>
    %61 = arith.mulf %60, %59 : vector<8x128xf32>
    %cst_26 = arith.constant 5.000000e-01 : f32
    %62 = vector.broadcast %cst_26 : f32 to vector<8x128xf32>
    %63 = arith.addf %61, %62 : vector<8x128xf32>
    %64 = arith.mulf %53, %34 : vector<8x128xf32>
    %65 = arith.mulf %45, %55 : vector<8x128xf32>
    %66 = arith.addf %64, %65 : vector<8x128xf32>
    %67 = math.tanh %66 : vector<8x128xf32>
    %68 = arith.mulf %63, %67 : vector<8x128xf32>
    %69 = vector.extract_strided_slice %20 {offsets = [8, 0], sizes = [8, 512], strides = [1, 1]} : vector<64x512xf32> to vector<8x512xf32>
    %cst_27 = arith.constant dense<0.000000e+00> : vector<8x512xf32>
    %70 = tpu.matmul %68, %4, %cst_27 {dimension_numbers = #tpu.dot_dimension_numbers<[1], [0], [0], [1], [0, 0, 1, 1], [], []>} : vector<8x128xf32>, vector<128x512xf32>, vector<8x512xf32> -> vector<8x512xf32>
    %71 = arith.addf %69, %70 : vector<8x512xf32>
    %72 = vector.extract_strided_slice %71 {offsets = [0, 0], sizes = [8, 128], strides = [1, 1]} : vector<8x512xf32> to vector<8x128xf32>
    %cst_28 = arith.constant 5.000000e-01 : f32
    %73 = vector.broadcast %cst_28 : f32 to vector<8x128xf32>
    %74 = arith.mulf %73, %72 : vector<8x128xf32>
    %75 = math.tanh %74 : vector<8x128xf32>
    %cst_29 = arith.constant 5.000000e-01 : f32
    %76 = vector.broadcast %cst_29 : f32 to vector<8x128xf32>
    %77 = arith.mulf %76, %75 : vector<8x128xf32>
    %cst_30 = arith.constant 5.000000e-01 : f32
    %78 = vector.broadcast %cst_30 : f32 to vector<8x128xf32>
    %79 = arith.addf %77, %78 : vector<8x128xf32>
    %80 = vector.extract_strided_slice %71 {offsets = [0, 128], sizes = [8, 128], strides = [1, 1]} : vector<8x512xf32> to vector<8x128xf32>
    %cst_31 = arith.constant 5.000000e-01 : f32
    %81 = vector.broadcast %cst_31 : f32 to vector<8x128xf32>
    %82 = arith.mulf %81, %80 : vector<8x128xf32>
    %83 = math.tanh %82 : vector<8x128xf32>
    %cst_32 = arith.constant 5.000000e-01 : f32
    %84 = vector.broadcast %cst_32 : f32 to vector<8x128xf32>
    %85 = arith.mulf %84, %83 : vector<8x128xf32>
    %cst_33 = arith.constant 5.000000e-01 : f32
    %86 = vector.broadcast %cst_33 : f32 to vector<8x128xf32>
    %87 = arith.addf %85, %86 : vector<8x128xf32>
    %88 = vector.extract_strided_slice %71 {offsets = [0, 256], sizes = [8, 128], strides = [1, 1]} : vector<8x512xf32> to vector<8x128xf32>
    %89 = math.tanh %88 : vector<8x128xf32>
    %90 = vector.extract_strided_slice %71 {offsets = [0, 384], sizes = [8, 128], strides = [1, 1]} : vector<8x512xf32> to vector<8x128xf32>
    %cst_34 = arith.constant 5.000000e-01 : f32
    %91 = vector.broadcast %cst_34 : f32 to vector<8x128xf32>
    %92 = arith.mulf %91, %90 : vector<8x128xf32>
    %93 = math.tanh %92 : vector<8x128xf32>
    %cst_35 = arith.constant 5.000000e-01 : f32
    %94 = vector.broadcast %cst_35 : f32 to vector<8x128xf32>
    %95 = arith.mulf %94, %93 : vector<8x128xf32>
    %cst_36 = arith.constant 5.000000e-01 : f32
    %96 = vector.broadcast %cst_36 : f32 to vector<8x128xf32>
    %97 = arith.addf %95, %96 : vector<8x128xf32>
    %98 = arith.mulf %87, %66 : vector<8x128xf32>
    %99 = arith.mulf %79, %89 : vector<8x128xf32>
    %100 = arith.addf %98, %99 : vector<8x128xf32>
    %101 = math.tanh %100 : vector<8x128xf32>
    %102 = arith.mulf %97, %101 : vector<8x128xf32>
    %103 = vector.extract_strided_slice %20 {offsets = [16, 0], sizes = [8, 512], strides = [1, 1]} : vector<64x512xf32> to vector<8x512xf32>
    %cst_37 = arith.constant dense<0.000000e+00> : vector<8x512xf32>
    %104 = tpu.matmul %102, %4, %cst_37 {dimension_numbers = #tpu.dot_dimension_numbers<[1], [0], [0], [1], [0, 0, 1, 1], [], []>} : vector<8x128xf32>, vector<128x512xf32>, vector<8x512xf32> -> vector<8x512xf32>
    %105 = arith.addf %103, %104 : vector<8x512xf32>
    %106 = vector.extract_strided_slice %105 {offsets = [0, 0], sizes = [8, 128], strides = [1, 1]} : vector<8x512xf32> to vector<8x128xf32>
    %cst_38 = arith.constant 5.000000e-01 : f32
    %107 = vector.broadcast %cst_38 : f32 to vector<8x128xf32>
    %108 = arith.mulf %107, %106 : vector<8x128xf32>
    %109 = math.tanh %108 : vector<8x128xf32>
    %cst_39 = arith.constant 5.000000e-01 : f32
    %110 = vector.broadcast %cst_39 : f32 to vector<8x128xf32>
    %111 = arith.mulf %110, %109 : vector<8x128xf32>
    %cst_40 = arith.constant 5.000000e-01 : f32
    %112 = vector.broadcast %cst_40 : f32 to vector<8x128xf32>
    %113 = arith.addf %111, %112 : vector<8x128xf32>
    %114 = vector.extract_strided_slice %105 {offsets = [0, 128], sizes = [8, 128], strides = [1, 1]} : vector<8x512xf32> to vector<8x128xf32>
    %cst_41 = arith.constant 5.000000e-01 : f32
    %115 = vector.broadcast %cst_41 : f32 to vector<8x128xf32>
    %116 = arith.mulf %115, %114 : vector<8x128xf32>
    %117 = math.tanh %116 : vector<8x128xf32>
    %cst_42 = arith.constant 5.000000e-01 : f32
    %118 = vector.broadcast %cst_42 : f32 to vector<8x128xf32>
    %119 = arith.mulf %118, %117 : vector<8x128xf32>
    %cst_43 = arith.constant 5.000000e-01 : f32
    %120 = vector.broadcast %cst_43 : f32 to vector<8x128xf32>
    %121 = arith.addf %119, %120 : vector<8x128xf32>
    %122 = vector.extract_strided_slice %105 {offsets = [0, 256], sizes = [8, 128], strides = [1, 1]} : vector<8x512xf32> to vector<8x128xf32>
    %123 = math.tanh %122 : vector<8x128xf32>
    %124 = vector.extract_strided_slice %105 {offsets = [0, 384], sizes = [8, 128], strides = [1, 1]} : vector<8x512xf32> to vector<8x128xf32>
    %cst_44 = arith.constant 5.000000e-01 : f32
    %125 = vector.broadcast %cst_44 : f32 to vector<8x128xf32>
    %126 = arith.mulf %125, %124 : vector<8x128xf32>
    %127 = math.tanh %126 : vector<8x128xf32>
    %cst_45 = arith.constant 5.000000e-01 : f32
    %128 = vector.broadcast %cst_45 : f32 to vector<8x128xf32>
    %129 = arith.mulf %128, %127 : vector<8x128xf32>
    %cst_46 = arith.constant 5.000000e-01 : f32
    %130 = vector.broadcast %cst_46 : f32 to vector<8x128xf32>
    %131 = arith.addf %129, %130 : vector<8x128xf32>
    %132 = arith.mulf %121, %100 : vector<8x128xf32>
    %133 = arith.mulf %113, %123 : vector<8x128xf32>
    %134 = arith.addf %132, %133 : vector<8x128xf32>
    %135 = math.tanh %134 : vector<8x128xf32>
    %136 = arith.mulf %131, %135 : vector<8x128xf32>
    %137 = vector.extract_strided_slice %20 {offsets = [24, 0], sizes = [8, 512], strides = [1, 1]} : vector<64x512xf32> to vector<8x512xf32>
    %cst_47 = arith.constant dense<0.000000e+00> : vector<8x512xf32>
    %138 = tpu.matmul %136, %4, %cst_47 {dimension_numbers = #tpu.dot_dimension_numbers<[1], [0], [0], [1], [0, 0, 1, 1], [], []>} : vector<8x128xf32>, vector<128x512xf32>, vector<8x512xf32> -> vector<8x512xf32>
    %139 = arith.addf %137, %138 : vector<8x512xf32>
    %140 = vector.extract_strided_slice %139 {offsets = [0, 0], sizes = [8, 128], strides = [1, 1]} : vector<8x512xf32> to vector<8x128xf32>
    %cst_48 = arith.constant 5.000000e-01 : f32
    %141 = vector.broadcast %cst_48 : f32 to vector<8x128xf32>
    %142 = arith.mulf %141, %140 : vector<8x128xf32>
    %143 = math.tanh %142 : vector<8x128xf32>
    %cst_49 = arith.constant 5.000000e-01 : f32
    %144 = vector.broadcast %cst_49 : f32 to vector<8x128xf32>
    %145 = arith.mulf %144, %143 : vector<8x128xf32>
    %cst_50 = arith.constant 5.000000e-01 : f32
    %146 = vector.broadcast %cst_50 : f32 to vector<8x128xf32>
    %147 = arith.addf %145, %146 : vector<8x128xf32>
    %148 = vector.extract_strided_slice %139 {offsets = [0, 128], sizes = [8, 128], strides = [1, 1]} : vector<8x512xf32> to vector<8x128xf32>
    %cst_51 = arith.constant 5.000000e-01 : f32
    %149 = vector.broadcast %cst_51 : f32 to vector<8x128xf32>
    %150 = arith.mulf %149, %148 : vector<8x128xf32>
    %151 = math.tanh %150 : vector<8x128xf32>
    %cst_52 = arith.constant 5.000000e-01 : f32
    %152 = vector.broadcast %cst_52 : f32 to vector<8x128xf32>
    %153 = arith.mulf %152, %151 : vector<8x128xf32>
    %cst_53 = arith.constant 5.000000e-01 : f32
    %154 = vector.broadcast %cst_53 : f32 to vector<8x128xf32>
    %155 = arith.addf %153, %154 : vector<8x128xf32>
    %156 = vector.extract_strided_slice %139 {offsets = [0, 256], sizes = [8, 128], strides = [1, 1]} : vector<8x512xf32> to vector<8x128xf32>
    %157 = math.tanh %156 : vector<8x128xf32>
    %158 = vector.extract_strided_slice %139 {offsets = [0, 384], sizes = [8, 128], strides = [1, 1]} : vector<8x512xf32> to vector<8x128xf32>
    %cst_54 = arith.constant 5.000000e-01 : f32
    %159 = vector.broadcast %cst_54 : f32 to vector<8x128xf32>
    %160 = arith.mulf %159, %158 : vector<8x128xf32>
    %161 = math.tanh %160 : vector<8x128xf32>
    %cst_55 = arith.constant 5.000000e-01 : f32
    %162 = vector.broadcast %cst_55 : f32 to vector<8x128xf32>
    %163 = arith.mulf %162, %161 : vector<8x128xf32>
    %cst_56 = arith.constant 5.000000e-01 : f32
    %164 = vector.broadcast %cst_56 : f32 to vector<8x128xf32>
    %165 = arith.addf %163, %164 : vector<8x128xf32>
    %166 = arith.mulf %155, %134 : vector<8x128xf32>
    %167 = arith.mulf %147, %157 : vector<8x128xf32>
    %168 = arith.addf %166, %167 : vector<8x128xf32>
    %169 = math.tanh %168 : vector<8x128xf32>
    %170 = arith.mulf %165, %169 : vector<8x128xf32>
    %171 = vector.extract_strided_slice %20 {offsets = [32, 0], sizes = [8, 512], strides = [1, 1]} : vector<64x512xf32> to vector<8x512xf32>
    %cst_57 = arith.constant dense<0.000000e+00> : vector<8x512xf32>
    %172 = tpu.matmul %170, %4, %cst_57 {dimension_numbers = #tpu.dot_dimension_numbers<[1], [0], [0], [1], [0, 0, 1, 1], [], []>} : vector<8x128xf32>, vector<128x512xf32>, vector<8x512xf32> -> vector<8x512xf32>
    %173 = arith.addf %171, %172 : vector<8x512xf32>
    %174 = vector.extract_strided_slice %173 {offsets = [0, 0], sizes = [8, 128], strides = [1, 1]} : vector<8x512xf32> to vector<8x128xf32>
    %cst_58 = arith.constant 5.000000e-01 : f32
    %175 = vector.broadcast %cst_58 : f32 to vector<8x128xf32>
    %176 = arith.mulf %175, %174 : vector<8x128xf32>
    %177 = math.tanh %176 : vector<8x128xf32>
    %cst_59 = arith.constant 5.000000e-01 : f32
    %178 = vector.broadcast %cst_59 : f32 to vector<8x128xf32>
    %179 = arith.mulf %178, %177 : vector<8x128xf32>
    %cst_60 = arith.constant 5.000000e-01 : f32
    %180 = vector.broadcast %cst_60 : f32 to vector<8x128xf32>
    %181 = arith.addf %179, %180 : vector<8x128xf32>
    %182 = vector.extract_strided_slice %173 {offsets = [0, 128], sizes = [8, 128], strides = [1, 1]} : vector<8x512xf32> to vector<8x128xf32>
    %cst_61 = arith.constant 5.000000e-01 : f32
    %183 = vector.broadcast %cst_61 : f32 to vector<8x128xf32>
    %184 = arith.mulf %183, %182 : vector<8x128xf32>
    %185 = math.tanh %184 : vector<8x128xf32>
    %cst_62 = arith.constant 5.000000e-01 : f32
    %186 = vector.broadcast %cst_62 : f32 to vector<8x128xf32>
    %187 = arith.mulf %186, %185 : vector<8x128xf32>
    %cst_63 = arith.constant 5.000000e-01 : f32
    %188 = vector.broadcast %cst_63 : f32 to vector<8x128xf32>
    %189 = arith.addf %187, %188 : vector<8x128xf32>
    %190 = vector.extract_strided_slice %173 {offsets = [0, 256], sizes = [8, 128], strides = [1, 1]} : vector<8x512xf32> to vector<8x128xf32>
    %191 = math.tanh %190 : vector<8x128xf32>
    %192 = vector.extract_strided_slice %173 {offsets = [0, 384], sizes = [8, 128], strides = [1, 1]} : vector<8x512xf32> to vector<8x128xf32>
    %cst_64 = arith.constant 5.000000e-01 : f32
    %193 = vector.broadcast %cst_64 : f32 to vector<8x128xf32>
    %194 = arith.mulf %193, %192 : vector<8x128xf32>
    %195 = math.tanh %194 : vector<8x128xf32>
    %cst_65 = arith.constant 5.000000e-01 : f32
    %196 = vector.broadcast %cst_65 : f32 to vector<8x128xf32>
    %197 = arith.mulf %196, %195 : vector<8x128xf32>
    %cst_66 = arith.constant 5.000000e-01 : f32
    %198 = vector.broadcast %cst_66 : f32 to vector<8x128xf32>
    %199 = arith.addf %197, %198 : vector<8x128xf32>
    %200 = arith.mulf %189, %168 : vector<8x128xf32>
    %201 = arith.mulf %181, %191 : vector<8x128xf32>
    %202 = arith.addf %200, %201 : vector<8x128xf32>
    %203 = math.tanh %202 : vector<8x128xf32>
    %204 = arith.mulf %199, %203 : vector<8x128xf32>
    %205 = vector.extract_strided_slice %20 {offsets = [40, 0], sizes = [8, 512], strides = [1, 1]} : vector<64x512xf32> to vector<8x512xf32>
    %cst_67 = arith.constant dense<0.000000e+00> : vector<8x512xf32>
    %206 = tpu.matmul %204, %4, %cst_67 {dimension_numbers = #tpu.dot_dimension_numbers<[1], [0], [0], [1], [0, 0, 1, 1], [], []>} : vector<8x128xf32>, vector<128x512xf32>, vector<8x512xf32> -> vector<8x512xf32>
    %207 = arith.addf %205, %206 : vector<8x512xf32>
    %208 = vector.extract_strided_slice %207 {offsets = [0, 0], sizes = [8, 128], strides = [1, 1]} : vector<8x512xf32> to vector<8x128xf32>
    %cst_68 = arith.constant 5.000000e-01 : f32
    %209 = vector.broadcast %cst_68 : f32 to vector<8x128xf32>
    %210 = arith.mulf %209, %208 : vector<8x128xf32>
    %211 = math.tanh %210 : vector<8x128xf32>
    %cst_69 = arith.constant 5.000000e-01 : f32
    %212 = vector.broadcast %cst_69 : f32 to vector<8x128xf32>
    %213 = arith.mulf %212, %211 : vector<8x128xf32>
    %cst_70 = arith.constant 5.000000e-01 : f32
    %214 = vector.broadcast %cst_70 : f32 to vector<8x128xf32>
    %215 = arith.addf %213, %214 : vector<8x128xf32>
    %216 = vector.extract_strided_slice %207 {offsets = [0, 128], sizes = [8, 128], strides = [1, 1]} : vector<8x512xf32> to vector<8x128xf32>
    %cst_71 = arith.constant 5.000000e-01 : f32
    %217 = vector.broadcast %cst_71 : f32 to vector<8x128xf32>
    %218 = arith.mulf %217, %216 : vector<8x128xf32>
    %219 = math.tanh %218 : vector<8x128xf32>
    %cst_72 = arith.constant 5.000000e-01 : f32
    %220 = vector.broadcast %cst_72 : f32 to vector<8x128xf32>
    %221 = arith.mulf %220, %219 : vector<8x128xf32>
    %cst_73 = arith.constant 5.000000e-01 : f32
    %222 = vector.broadcast %cst_73 : f32 to vector<8x128xf32>
    %223 = arith.addf %221, %222 : vector<8x128xf32>
    %224 = vector.extract_strided_slice %207 {offsets = [0, 256], sizes = [8, 128], strides = [1, 1]} : vector<8x512xf32> to vector<8x128xf32>
    %225 = math.tanh %224 : vector<8x128xf32>
    %226 = vector.extract_strided_slice %207 {offsets = [0, 384], sizes = [8, 128], strides = [1, 1]} : vector<8x512xf32> to vector<8x128xf32>
    %cst_74 = arith.constant 5.000000e-01 : f32
    %227 = vector.broadcast %cst_74 : f32 to vector<8x128xf32>
    %228 = arith.mulf %227, %226 : vector<8x128xf32>
    %229 = math.tanh %228 : vector<8x128xf32>
    %cst_75 = arith.constant 5.000000e-01 : f32
    %230 = vector.broadcast %cst_75 : f32 to vector<8x128xf32>
    %231 = arith.mulf %230, %229 : vector<8x128xf32>
    %cst_76 = arith.constant 5.000000e-01 : f32
    %232 = vector.broadcast %cst_76 : f32 to vector<8x128xf32>
    %233 = arith.addf %231, %232 : vector<8x128xf32>
    %234 = arith.mulf %223, %202 : vector<8x128xf32>
    %235 = arith.mulf %215, %225 : vector<8x128xf32>
    %236 = arith.addf %234, %235 : vector<8x128xf32>
    %237 = math.tanh %236 : vector<8x128xf32>
    %238 = arith.mulf %233, %237 : vector<8x128xf32>
    %239 = vector.extract_strided_slice %20 {offsets = [48, 0], sizes = [8, 512], strides = [1, 1]} : vector<64x512xf32> to vector<8x512xf32>
    %cst_77 = arith.constant dense<0.000000e+00> : vector<8x512xf32>
    %240 = tpu.matmul %238, %4, %cst_77 {dimension_numbers = #tpu.dot_dimension_numbers<[1], [0], [0], [1], [0, 0, 1, 1], [], []>} : vector<8x128xf32>, vector<128x512xf32>, vector<8x512xf32> -> vector<8x512xf32>
    %241 = arith.addf %239, %240 : vector<8x512xf32>
    %242 = vector.extract_strided_slice %241 {offsets = [0, 0], sizes = [8, 128], strides = [1, 1]} : vector<8x512xf32> to vector<8x128xf32>
    %cst_78 = arith.constant 5.000000e-01 : f32
    %243 = vector.broadcast %cst_78 : f32 to vector<8x128xf32>
    %244 = arith.mulf %243, %242 : vector<8x128xf32>
    %245 = math.tanh %244 : vector<8x128xf32>
    %cst_79 = arith.constant 5.000000e-01 : f32
    %246 = vector.broadcast %cst_79 : f32 to vector<8x128xf32>
    %247 = arith.mulf %246, %245 : vector<8x128xf32>
    %cst_80 = arith.constant 5.000000e-01 : f32
    %248 = vector.broadcast %cst_80 : f32 to vector<8x128xf32>
    %249 = arith.addf %247, %248 : vector<8x128xf32>
    %250 = vector.extract_strided_slice %241 {offsets = [0, 128], sizes = [8, 128], strides = [1, 1]} : vector<8x512xf32> to vector<8x128xf32>
    %cst_81 = arith.constant 5.000000e-01 : f32
    %251 = vector.broadcast %cst_81 : f32 to vector<8x128xf32>
    %252 = arith.mulf %251, %250 : vector<8x128xf32>
    %253 = math.tanh %252 : vector<8x128xf32>
    %cst_82 = arith.constant 5.000000e-01 : f32
    %254 = vector.broadcast %cst_82 : f32 to vector<8x128xf32>
    %255 = arith.mulf %254, %253 : vector<8x128xf32>
    %cst_83 = arith.constant 5.000000e-01 : f32
    %256 = vector.broadcast %cst_83 : f32 to vector<8x128xf32>
    %257 = arith.addf %255, %256 : vector<8x128xf32>
    %258 = vector.extract_strided_slice %241 {offsets = [0, 256], sizes = [8, 128], strides = [1, 1]} : vector<8x512xf32> to vector<8x128xf32>
    %259 = math.tanh %258 : vector<8x128xf32>
    %260 = vector.extract_strided_slice %241 {offsets = [0, 384], sizes = [8, 128], strides = [1, 1]} : vector<8x512xf32> to vector<8x128xf32>
    %cst_84 = arith.constant 5.000000e-01 : f32
    %261 = vector.broadcast %cst_84 : f32 to vector<8x128xf32>
    %262 = arith.mulf %261, %260 : vector<8x128xf32>
    %263 = math.tanh %262 : vector<8x128xf32>
    %cst_85 = arith.constant 5.000000e-01 : f32
    %264 = vector.broadcast %cst_85 : f32 to vector<8x128xf32>
    %265 = arith.mulf %264, %263 : vector<8x128xf32>
    %cst_86 = arith.constant 5.000000e-01 : f32
    %266 = vector.broadcast %cst_86 : f32 to vector<8x128xf32>
    %267 = arith.addf %265, %266 : vector<8x128xf32>
    %268 = arith.mulf %257, %236 : vector<8x128xf32>
    %269 = arith.mulf %249, %259 : vector<8x128xf32>
    %270 = arith.addf %268, %269 : vector<8x128xf32>
    %271 = math.tanh %270 : vector<8x128xf32>
    %272 = arith.mulf %267, %271 : vector<8x128xf32>
    %273 = vector.extract_strided_slice %20 {offsets = [56, 0], sizes = [8, 512], strides = [1, 1]} : vector<64x512xf32> to vector<8x512xf32>
    %cst_87 = arith.constant dense<0.000000e+00> : vector<8x512xf32>
    %274 = tpu.matmul %272, %4, %cst_87 {dimension_numbers = #tpu.dot_dimension_numbers<[1], [0], [0], [1], [0, 0, 1, 1], [], []>} : vector<8x128xf32>, vector<128x512xf32>, vector<8x512xf32> -> vector<8x512xf32>
    %275 = arith.addf %273, %274 : vector<8x512xf32>
    %276 = vector.extract_strided_slice %275 {offsets = [0, 0], sizes = [8, 128], strides = [1, 1]} : vector<8x512xf32> to vector<8x128xf32>
    %cst_88 = arith.constant 5.000000e-01 : f32
    %277 = vector.broadcast %cst_88 : f32 to vector<8x128xf32>
    %278 = arith.mulf %277, %276 : vector<8x128xf32>
    %279 = math.tanh %278 : vector<8x128xf32>
    %cst_89 = arith.constant 5.000000e-01 : f32
    %280 = vector.broadcast %cst_89 : f32 to vector<8x128xf32>
    %281 = arith.mulf %280, %279 : vector<8x128xf32>
    %cst_90 = arith.constant 5.000000e-01 : f32
    %282 = vector.broadcast %cst_90 : f32 to vector<8x128xf32>
    %283 = arith.addf %281, %282 : vector<8x128xf32>
    %284 = vector.extract_strided_slice %275 {offsets = [0, 128], sizes = [8, 128], strides = [1, 1]} : vector<8x512xf32> to vector<8x128xf32>
    %cst_91 = arith.constant 5.000000e-01 : f32
    %285 = vector.broadcast %cst_91 : f32 to vector<8x128xf32>
    %286 = arith.mulf %285, %284 : vector<8x128xf32>
    %287 = math.tanh %286 : vector<8x128xf32>
    %cst_92 = arith.constant 5.000000e-01 : f32
    %288 = vector.broadcast %cst_92 : f32 to vector<8x128xf32>
    %289 = arith.mulf %288, %287 : vector<8x128xf32>
    %cst_93 = arith.constant 5.000000e-01 : f32
    %290 = vector.broadcast %cst_93 : f32 to vector<8x128xf32>
    %291 = arith.addf %289, %290 : vector<8x128xf32>
    %292 = vector.extract_strided_slice %275 {offsets = [0, 256], sizes = [8, 128], strides = [1, 1]} : vector<8x512xf32> to vector<8x128xf32>
    %293 = math.tanh %292 : vector<8x128xf32>
    %294 = vector.extract_strided_slice %275 {offsets = [0, 384], sizes = [8, 128], strides = [1, 1]} : vector<8x512xf32> to vector<8x128xf32>
    %cst_94 = arith.constant 5.000000e-01 : f32
    %295 = vector.broadcast %cst_94 : f32 to vector<8x128xf32>
    %296 = arith.mulf %295, %294 : vector<8x128xf32>
    %297 = math.tanh %296 : vector<8x128xf32>
    %cst_95 = arith.constant 5.000000e-01 : f32
    %298 = vector.broadcast %cst_95 : f32 to vector<8x128xf32>
    %299 = arith.mulf %298, %297 : vector<8x128xf32>
    %cst_96 = arith.constant 5.000000e-01 : f32
    %300 = vector.broadcast %cst_96 : f32 to vector<8x128xf32>
    %301 = arith.addf %299, %300 : vector<8x128xf32>
    %302 = arith.mulf %291, %270 : vector<8x128xf32>
    %303 = arith.mulf %283, %293 : vector<8x128xf32>
    %304 = arith.addf %302, %303 : vector<8x128xf32>
    %305 = math.tanh %304 : vector<8x128xf32>
    %306 = arith.mulf %301, %305 : vector<8x128xf32>
    %307 = arith.mulf %68, %25 : vector<8x128xf32>
    %308 = arith.mulf %306, %32 : vector<8x128xf32>
    %309 = arith.addf %307, %308 : vector<8x128xf32>
    %310 = arith.mulf %102, %25 : vector<8x128xf32>
    %311 = arith.mulf %272, %32 : vector<8x128xf32>
    %312 = arith.addf %310, %311 : vector<8x128xf32>
    %313 = arith.mulf %136, %25 : vector<8x128xf32>
    %314 = arith.mulf %238, %32 : vector<8x128xf32>
    %315 = arith.addf %313, %314 : vector<8x128xf32>
    %316 = arith.mulf %170, %25 : vector<8x128xf32>
    %317 = arith.mulf %204, %32 : vector<8x128xf32>
    %318 = arith.addf %316, %317 : vector<8x128xf32>
    %319 = arith.mulf %204, %25 : vector<8x128xf32>
    %320 = arith.mulf %170, %32 : vector<8x128xf32>
    %321 = arith.addf %319, %320 : vector<8x128xf32>
    %322 = arith.mulf %238, %25 : vector<8x128xf32>
    %323 = arith.mulf %136, %32 : vector<8x128xf32>
    %324 = arith.addf %322, %323 : vector<8x128xf32>
    %325 = arith.mulf %272, %25 : vector<8x128xf32>
    %326 = arith.mulf %102, %32 : vector<8x128xf32>
    %327 = arith.addf %325, %326 : vector<8x128xf32>
    %328 = arith.mulf %306, %25 : vector<8x128xf32>
    %329 = arith.mulf %68, %32 : vector<8x128xf32>
    %330 = arith.addf %328, %329 : vector<8x128xf32>
    %331 = tpu.concatenate %309, %312, %315, %318, %321, %324, %327, %330 in 0 : vector<8x128xf32>, vector<8x128xf32>, vector<8x128xf32>, vector<8x128xf32>, vector<8x128xf32>, vector<8x128xf32>, vector<8x128xf32>, vector<8x128xf32> -> vector<64x128xf32>
    %cst_97 = arith.constant dense<0.000000e+00> : vector<64xf32>
    %332 = vector.multi_reduction <add>, %331, %cst_97 [1] : vector<64x128xf32> to vector<64xf32>
    %333 = vector.shape_cast %332 : vector<64xf32> to vector<64x1xf32>
    %cst_98 = arith.constant 1.562500e-02 : f32
    %334 = vector.broadcast %cst_98 : f32 to vector<64x1xf32>
    %335 = arith.mulf %333, %334 : vector<64x1xf32>
    %336 = arith.mulf %331, %331 : vector<64x128xf32>
    %cst_99 = arith.constant dense<0.000000e+00> : vector<64xf32>
    %337 = vector.multi_reduction <add>, %336, %cst_99 [1] : vector<64x128xf32> to vector<64xf32>
    %338 = vector.shape_cast %337 : vector<64xf32> to vector<64x1xf32>
    %cst_100 = arith.constant 1.562500e-02 : f32
    %339 = vector.broadcast %cst_100 : f32 to vector<64x1xf32>
    %340 = arith.mulf %338, %339 : vector<64x1xf32>
    %341 = arith.mulf %335, %335 : vector<64x1xf32>
    %342 = arith.subf %340, %341 : vector<64x1xf32>
    %cst_101 = arith.constant 9.99999974E-6 : f32
    %343 = vector.broadcast %cst_101 : f32 to vector<64x1xf32>
    %344 = arith.addf %342, %343 : vector<64x1xf32>
    %345 = math.rsqrt %344 : vector<64x1xf32>
    %cst_102 = arith.constant dense<0.000000e+00> : vector<64x32xf32>
    %346 = tpu.matmul %331, %5, %cst_102 {dimension_numbers = #tpu.dot_dimension_numbers<[1], [0], [0], [1], [0, 0, 1, 1], [], []>} : vector<64x128xf32>, vector<128x32xf32>, vector<64x32xf32> -> vector<64x32xf32>
    %347 = vector.extract_strided_slice %6 {offsets = [0, 0], sizes = [1, 32], strides = [1, 1]} : vector<2x32xf32> to vector<1x32xf32>
    %348 = vector.shape_cast %347 : vector<1x32xf32> to vector<1x32xf32>
    %349 = vector.broadcast %348 : vector<1x32xf32> to vector<64x32xf32>
    %350 = vector.extract_strided_slice %6 {offsets = [1, 0], sizes = [1, 32], strides = [1, 1]} : vector<2x32xf32> to vector<1x32xf32>
    %351 = vector.shape_cast %350 : vector<1x32xf32> to vector<1x32xf32>
    %352 = vector.broadcast %351 : vector<1x32xf32> to vector<64x32xf32>
    %353 = vector.broadcast %335 : vector<64x1xf32> to vector<64x32xf32>
    %354 = arith.mulf %353, %349 : vector<64x32xf32>
    %355 = arith.subf %346, %354 : vector<64x32xf32>
    %356 = vector.broadcast %345 : vector<64x1xf32> to vector<64x32xf32>
    %357 = arith.mulf %356, %355 : vector<64x32xf32>
    %358 = arith.addf %357, %352 : vector<64x32xf32>
    %c0_103 = arith.constant 0 : index
    %c0_104 = arith.constant 0 : index
    %359 = vector.load %arg7[%c0_103, %c0_104] : memref<32x512xf32, #tpu.memory_space<vmem>>, vector<32x512xf32>
    %c0_105 = arith.constant 0 : index
    %c0_106 = arith.constant 0 : index
    %360 = vector.load %arg8[%c0_105, %c0_106] : memref<32x512xf32, #tpu.memory_space<vmem>>, vector<32x512xf32>
    %c0_107 = arith.constant 0 : index
    %c0_108 = arith.constant 0 : index
    %361 = vector.load %arg9[%c0_107, %c0_108] : memref<1x512xf32, #tpu.memory_space<vmem>>, vector<1x512xf32>
    %c0_109 = arith.constant 0 : index
    %c0_110 = arith.constant 0 : index
    %362 = vector.load %arg10[%c0_109, %c0_110] : memref<128x512xf32, #tpu.memory_space<vmem>>, vector<128x512xf32>
    %c0_111 = arith.constant 0 : index
    %c0_112 = arith.constant 0 : index
    %363 = vector.load %arg11[%c0_111, %c0_112] : memref<128x16xf32, #tpu.memory_space<vmem>>, vector<128x16xf32>
    %c0_113 = arith.constant 0 : index
    %c0_114 = arith.constant 0 : index
    %364 = vector.load %arg12[%c0_113, %c0_114] : memref<2x16xf32, #tpu.memory_space<vmem>>, vector<2x16xf32>
    %cst_115 = arith.constant dense<0.000000e+00> : vector<64x512xf32>
    %365 = tpu.matmul %358, %359, %cst_115 {dimension_numbers = #tpu.dot_dimension_numbers<[1], [0], [0], [1], [0, 0, 1, 1], [], []>} : vector<64x32xf32>, vector<32x512xf32>, vector<64x512xf32> -> vector<64x512xf32>
    %cst_116 = arith.constant dense<0.000000e+00> : vector<64x512xf32>
    %366 = tpu.matmul %358, %360, %cst_116 {dimension_numbers = #tpu.dot_dimension_numbers<[1], [0], [0], [1], [0, 0, 1, 1], [], []>} : vector<64x32xf32>, vector<32x512xf32>, vector<64x512xf32> -> vector<64x512xf32>
    %367 = vector.extract_strided_slice %366 {offsets = [56, 0], sizes = [8, 512], strides = [1, 1]} : vector<64x512xf32> to vector<8x512xf32>
    %368 = vector.extract_strided_slice %366 {offsets = [48, 0], sizes = [8, 512], strides = [1, 1]} : vector<64x512xf32> to vector<8x512xf32>
    %369 = vector.extract_strided_slice %366 {offsets = [40, 0], sizes = [8, 512], strides = [1, 1]} : vector<64x512xf32> to vector<8x512xf32>
    %370 = vector.extract_strided_slice %366 {offsets = [32, 0], sizes = [8, 512], strides = [1, 1]} : vector<64x512xf32> to vector<8x512xf32>
    %371 = vector.extract_strided_slice %366 {offsets = [24, 0], sizes = [8, 512], strides = [1, 1]} : vector<64x512xf32> to vector<8x512xf32>
    %372 = vector.extract_strided_slice %366 {offsets = [16, 0], sizes = [8, 512], strides = [1, 1]} : vector<64x512xf32> to vector<8x512xf32>
    %373 = vector.extract_strided_slice %366 {offsets = [8, 0], sizes = [8, 512], strides = [1, 1]} : vector<64x512xf32> to vector<8x512xf32>
    %374 = vector.extract_strided_slice %366 {offsets = [0, 0], sizes = [8, 512], strides = [1, 1]} : vector<64x512xf32> to vector<8x512xf32>
    %375 = tpu.concatenate %367, %368, %369, %370, %371, %372, %373, %374 in 0 : vector<8x512xf32>, vector<8x512xf32>, vector<8x512xf32>, vector<8x512xf32>, vector<8x512xf32>, vector<8x512xf32>, vector<8x512xf32>, vector<8x512xf32> -> vector<64x512xf32>
    %376 = arith.addf %365, %375 : vector<64x512xf32>
    %377 = vector.broadcast %361 : vector<1x512xf32> to vector<64x512xf32>
    %378 = arith.addf %376, %377 : vector<64x512xf32>
    %379 = tpu.iota {dimensions = array<i32: 1>} : vector<8x128xi32>
    %c16_i32 = arith.constant 16 : i32
    %380 = vector.broadcast %c16_i32 : i32 to vector<8x128xi32>
    %381 = arith.cmpi slt, %379, %380 : vector<8x128xi32>
    %382 = arith.extui %381 : vector<8x128xi1> to vector<8x128xi32>
    %383 = arith.sitofp %382 : vector<8x128xi32> to vector<8x128xf32>
    %c16_i32_117 = arith.constant 16 : i32
    %384 = vector.broadcast %c16_i32_117 : i32 to vector<8x128xi32>
    %385 = arith.cmpi sge, %379, %384 : vector<8x128xi32>
    %c32_i32_118 = arith.constant 32 : i32
    %386 = vector.broadcast %c32_i32_118 : i32 to vector<8x128xi32>
    %387 = arith.cmpi slt, %379, %386 : vector<8x128xi32>
    %388 = arith.andi %385, %387 : vector<8x128xi1>
    %389 = arith.extui %388 : vector<8x128xi1> to vector<8x128xi32>
    %390 = arith.sitofp %389 : vector<8x128xi32> to vector<8x128xf32>
    %cst_119 = arith.constant 0.000000e+00 : f32
    %391 = vector.broadcast %cst_119 : f32 to vector<8x128xf32>
    %cst_120 = arith.constant 0.000000e+00 : f32
    %392 = vector.broadcast %cst_120 : f32 to vector<8x128xf32>
    %393 = vector.extract_strided_slice %378 {offsets = [0, 0], sizes = [8, 512], strides = [1, 1]} : vector<64x512xf32> to vector<8x512xf32>
    %cst_121 = arith.constant dense<0.000000e+00> : vector<8x512xf32>
    %394 = tpu.matmul %391, %362, %cst_121 {dimension_numbers = #tpu.dot_dimension_numbers<[1], [0], [0], [1], [0, 0, 1, 1], [], []>} : vector<8x128xf32>, vector<128x512xf32>, vector<8x512xf32> -> vector<8x512xf32>
    %395 = arith.addf %393, %394 : vector<8x512xf32>
    %396 = vector.extract_strided_slice %395 {offsets = [0, 0], sizes = [8, 128], strides = [1, 1]} : vector<8x512xf32> to vector<8x128xf32>
    %cst_122 = arith.constant 5.000000e-01 : f32
    %397 = vector.broadcast %cst_122 : f32 to vector<8x128xf32>
    %398 = arith.mulf %397, %396 : vector<8x128xf32>
    %399 = math.tanh %398 : vector<8x128xf32>
    %cst_123 = arith.constant 5.000000e-01 : f32
    %400 = vector.broadcast %cst_123 : f32 to vector<8x128xf32>
    %401 = arith.mulf %400, %399 : vector<8x128xf32>
    %cst_124 = arith.constant 5.000000e-01 : f32
    %402 = vector.broadcast %cst_124 : f32 to vector<8x128xf32>
    %403 = arith.addf %401, %402 : vector<8x128xf32>
    %404 = vector.extract_strided_slice %395 {offsets = [0, 128], sizes = [8, 128], strides = [1, 1]} : vector<8x512xf32> to vector<8x128xf32>
    %cst_125 = arith.constant 5.000000e-01 : f32
    %405 = vector.broadcast %cst_125 : f32 to vector<8x128xf32>
    %406 = arith.mulf %405, %404 : vector<8x128xf32>
    %407 = math.tanh %406 : vector<8x128xf32>
    %cst_126 = arith.constant 5.000000e-01 : f32
    %408 = vector.broadcast %cst_126 : f32 to vector<8x128xf32>
    %409 = arith.mulf %408, %407 : vector<8x128xf32>
    %cst_127 = arith.constant 5.000000e-01 : f32
    %410 = vector.broadcast %cst_127 : f32 to vector<8x128xf32>
    %411 = arith.addf %409, %410 : vector<8x128xf32>
    %412 = vector.extract_strided_slice %395 {offsets = [0, 256], sizes = [8, 128], strides = [1, 1]} : vector<8x512xf32> to vector<8x128xf32>
    %413 = math.tanh %412 : vector<8x128xf32>
    %414 = vector.extract_strided_slice %395 {offsets = [0, 384], sizes = [8, 128], strides = [1, 1]} : vector<8x512xf32> to vector<8x128xf32>
    %cst_128 = arith.constant 5.000000e-01 : f32
    %415 = vector.broadcast %cst_128 : f32 to vector<8x128xf32>
    %416 = arith.mulf %415, %414 : vector<8x128xf32>
    %417 = math.tanh %416 : vector<8x128xf32>
    %cst_129 = arith.constant 5.000000e-01 : f32
    %418 = vector.broadcast %cst_129 : f32 to vector<8x128xf32>
    %419 = arith.mulf %418, %417 : vector<8x128xf32>
    %cst_130 = arith.constant 5.000000e-01 : f32
    %420 = vector.broadcast %cst_130 : f32 to vector<8x128xf32>
    %421 = arith.addf %419, %420 : vector<8x128xf32>
    %422 = arith.mulf %411, %392 : vector<8x128xf32>
    %423 = arith.mulf %403, %413 : vector<8x128xf32>
    %424 = arith.addf %422, %423 : vector<8x128xf32>
    %425 = math.tanh %424 : vector<8x128xf32>
    %426 = arith.mulf %421, %425 : vector<8x128xf32>
    %427 = vector.extract_strided_slice %378 {offsets = [8, 0], sizes = [8, 512], strides = [1, 1]} : vector<64x512xf32> to vector<8x512xf32>
    %cst_131 = arith.constant dense<0.000000e+00> : vector<8x512xf32>
    %428 = tpu.matmul %426, %362, %cst_131 {dimension_numbers = #tpu.dot_dimension_numbers<[1], [0], [0], [1], [0, 0, 1, 1], [], []>} : vector<8x128xf32>, vector<128x512xf32>, vector<8x512xf32> -> vector<8x512xf32>
    %429 = arith.addf %427, %428 : vector<8x512xf32>
    %430 = vector.extract_strided_slice %429 {offsets = [0, 0], sizes = [8, 128], strides = [1, 1]} : vector<8x512xf32> to vector<8x128xf32>
    %cst_132 = arith.constant 5.000000e-01 : f32
    %431 = vector.broadcast %cst_132 : f32 to vector<8x128xf32>
    %432 = arith.mulf %431, %430 : vector<8x128xf32>
    %433 = math.tanh %432 : vector<8x128xf32>
    %cst_133 = arith.constant 5.000000e-01 : f32
    %434 = vector.broadcast %cst_133 : f32 to vector<8x128xf32>
    %435 = arith.mulf %434, %433 : vector<8x128xf32>
    %cst_134 = arith.constant 5.000000e-01 : f32
    %436 = vector.broadcast %cst_134 : f32 to vector<8x128xf32>
    %437 = arith.addf %435, %436 : vector<8x128xf32>
    %438 = vector.extract_strided_slice %429 {offsets = [0, 128], sizes = [8, 128], strides = [1, 1]} : vector<8x512xf32> to vector<8x128xf32>
    %cst_135 = arith.constant 5.000000e-01 : f32
    %439 = vector.broadcast %cst_135 : f32 to vector<8x128xf32>
    %440 = arith.mulf %439, %438 : vector<8x128xf32>
    %441 = math.tanh %440 : vector<8x128xf32>
    %cst_136 = arith.constant 5.000000e-01 : f32
    %442 = vector.broadcast %cst_136 : f32 to vector<8x128xf32>
    %443 = arith.mulf %442, %441 : vector<8x128xf32>
    %cst_137 = arith.constant 5.000000e-01 : f32
    %444 = vector.broadcast %cst_137 : f32 to vector<8x128xf32>
    %445 = arith.addf %443, %444 : vector<8x128xf32>
    %446 = vector.extract_strided_slice %429 {offsets = [0, 256], sizes = [8, 128], strides = [1, 1]} : vector<8x512xf32> to vector<8x128xf32>
    %447 = math.tanh %446 : vector<8x128xf32>
    %448 = vector.extract_strided_slice %429 {offsets = [0, 384], sizes = [8, 128], strides = [1, 1]} : vector<8x512xf32> to vector<8x128xf32>
    %cst_138 = arith.constant 5.000000e-01 : f32
    %449 = vector.broadcast %cst_138 : f32 to vector<8x128xf32>
    %450 = arith.mulf %449, %448 : vector<8x128xf32>
    %451 = math.tanh %450 : vector<8x128xf32>
    %cst_139 = arith.constant 5.000000e-01 : f32
    %452 = vector.broadcast %cst_139 : f32 to vector<8x128xf32>
    %453 = arith.mulf %452, %451 : vector<8x128xf32>
    %cst_140 = arith.constant 5.000000e-01 : f32
    %454 = vector.broadcast %cst_140 : f32 to vector<8x128xf32>
    %455 = arith.addf %453, %454 : vector<8x128xf32>
    %456 = arith.mulf %445, %424 : vector<8x128xf32>
    %457 = arith.mulf %437, %447 : vector<8x128xf32>
    %458 = arith.addf %456, %457 : vector<8x128xf32>
    %459 = math.tanh %458 : vector<8x128xf32>
    %460 = arith.mulf %455, %459 : vector<8x128xf32>
    %461 = vector.extract_strided_slice %378 {offsets = [16, 0], sizes = [8, 512], strides = [1, 1]} : vector<64x512xf32> to vector<8x512xf32>
    %cst_141 = arith.constant dense<0.000000e+00> : vector<8x512xf32>
    %462 = tpu.matmul %460, %362, %cst_141 {dimension_numbers = #tpu.dot_dimension_numbers<[1], [0], [0], [1], [0, 0, 1, 1], [], []>} : vector<8x128xf32>, vector<128x512xf32>, vector<8x512xf32> -> vector<8x512xf32>
    %463 = arith.addf %461, %462 : vector<8x512xf32>
    %464 = vector.extract_strided_slice %463 {offsets = [0, 0], sizes = [8, 128], strides = [1, 1]} : vector<8x512xf32> to vector<8x128xf32>
    %cst_142 = arith.constant 5.000000e-01 : f32
    %465 = vector.broadcast %cst_142 : f32 to vector<8x128xf32>
    %466 = arith.mulf %465, %464 : vector<8x128xf32>
    %467 = math.tanh %466 : vector<8x128xf32>
    %cst_143 = arith.constant 5.000000e-01 : f32
    %468 = vector.broadcast %cst_143 : f32 to vector<8x128xf32>
    %469 = arith.mulf %468, %467 : vector<8x128xf32>
    %cst_144 = arith.constant 5.000000e-01 : f32
    %470 = vector.broadcast %cst_144 : f32 to vector<8x128xf32>
    %471 = arith.addf %469, %470 : vector<8x128xf32>
    %472 = vector.extract_strided_slice %463 {offsets = [0, 128], sizes = [8, 128], strides = [1, 1]} : vector<8x512xf32> to vector<8x128xf32>
    %cst_145 = arith.constant 5.000000e-01 : f32
    %473 = vector.broadcast %cst_145 : f32 to vector<8x128xf32>
    %474 = arith.mulf %473, %472 : vector<8x128xf32>
    %475 = math.tanh %474 : vector<8x128xf32>
    %cst_146 = arith.constant 5.000000e-01 : f32
    %476 = vector.broadcast %cst_146 : f32 to vector<8x128xf32>
    %477 = arith.mulf %476, %475 : vector<8x128xf32>
    %cst_147 = arith.constant 5.000000e-01 : f32
    %478 = vector.broadcast %cst_147 : f32 to vector<8x128xf32>
    %479 = arith.addf %477, %478 : vector<8x128xf32>
    %480 = vector.extract_strided_slice %463 {offsets = [0, 256], sizes = [8, 128], strides = [1, 1]} : vector<8x512xf32> to vector<8x128xf32>
    %481 = math.tanh %480 : vector<8x128xf32>
    %482 = vector.extract_strided_slice %463 {offsets = [0, 384], sizes = [8, 128], strides = [1, 1]} : vector<8x512xf32> to vector<8x128xf32>
    %cst_148 = arith.constant 5.000000e-01 : f32
    %483 = vector.broadcast %cst_148 : f32 to vector<8x128xf32>
    %484 = arith.mulf %483, %482 : vector<8x128xf32>
    %485 = math.tanh %484 : vector<8x128xf32>
    %cst_149 = arith.constant 5.000000e-01 : f32
    %486 = vector.broadcast %cst_149 : f32 to vector<8x128xf32>
    %487 = arith.mulf %486, %485 : vector<8x128xf32>
    %cst_150 = arith.constant 5.000000e-01 : f32
    %488 = vector.broadcast %cst_150 : f32 to vector<8x128xf32>
    %489 = arith.addf %487, %488 : vector<8x128xf32>
    %490 = arith.mulf %479, %458 : vector<8x128xf32>
    %491 = arith.mulf %471, %481 : vector<8x128xf32>
    %492 = arith.addf %490, %491 : vector<8x128xf32>
    %493 = math.tanh %492 : vector<8x128xf32>
    %494 = arith.mulf %489, %493 : vector<8x128xf32>
    %495 = vector.extract_strided_slice %378 {offsets = [24, 0], sizes = [8, 512], strides = [1, 1]} : vector<64x512xf32> to vector<8x512xf32>
    %cst_151 = arith.constant dense<0.000000e+00> : vector<8x512xf32>
    %496 = tpu.matmul %494, %362, %cst_151 {dimension_numbers = #tpu.dot_dimension_numbers<[1], [0], [0], [1], [0, 0, 1, 1], [], []>} : vector<8x128xf32>, vector<128x512xf32>, vector<8x512xf32> -> vector<8x512xf32>
    %497 = arith.addf %495, %496 : vector<8x512xf32>
    %498 = vector.extract_strided_slice %497 {offsets = [0, 0], sizes = [8, 128], strides = [1, 1]} : vector<8x512xf32> to vector<8x128xf32>
    %cst_152 = arith.constant 5.000000e-01 : f32
    %499 = vector.broadcast %cst_152 : f32 to vector<8x128xf32>
    %500 = arith.mulf %499, %498 : vector<8x128xf32>
    %501 = math.tanh %500 : vector<8x128xf32>
    %cst_153 = arith.constant 5.000000e-01 : f32
    %502 = vector.broadcast %cst_153 : f32 to vector<8x128xf32>
    %503 = arith.mulf %502, %501 : vector<8x128xf32>
    %cst_154 = arith.constant 5.000000e-01 : f32
    %504 = vector.broadcast %cst_154 : f32 to vector<8x128xf32>
    %505 = arith.addf %503, %504 : vector<8x128xf32>
    %506 = vector.extract_strided_slice %497 {offsets = [0, 128], sizes = [8, 128], strides = [1, 1]} : vector<8x512xf32> to vector<8x128xf32>
    %cst_155 = arith.constant 5.000000e-01 : f32
    %507 = vector.broadcast %cst_155 : f32 to vector<8x128xf32>
    %508 = arith.mulf %507, %506 : vector<8x128xf32>
    %509 = math.tanh %508 : vector<8x128xf32>
    %cst_156 = arith.constant 5.000000e-01 : f32
    %510 = vector.broadcast %cst_156 : f32 to vector<8x128xf32>
    %511 = arith.mulf %510, %509 : vector<8x128xf32>
    %cst_157 = arith.constant 5.000000e-01 : f32
    %512 = vector.broadcast %cst_157 : f32 to vector<8x128xf32>
    %513 = arith.addf %511, %512 : vector<8x128xf32>
    %514 = vector.extract_strided_slice %497 {offsets = [0, 256], sizes = [8, 128], strides = [1, 1]} : vector<8x512xf32> to vector<8x128xf32>
    %515 = math.tanh %514 : vector<8x128xf32>
    %516 = vector.extract_strided_slice %497 {offsets = [0, 384], sizes = [8, 128], strides = [1, 1]} : vector<8x512xf32> to vector<8x128xf32>
    %cst_158 = arith.constant 5.000000e-01 : f32
    %517 = vector.broadcast %cst_158 : f32 to vector<8x128xf32>
    %518 = arith.mulf %517, %516 : vector<8x128xf32>
    %519 = math.tanh %518 : vector<8x128xf32>
    %cst_159 = arith.constant 5.000000e-01 : f32
    %520 = vector.broadcast %cst_159 : f32 to vector<8x128xf32>
    %521 = arith.mulf %520, %519 : vector<8x128xf32>
    %cst_160 = arith.constant 5.000000e-01 : f32
    %522 = vector.broadcast %cst_160 : f32 to vector<8x128xf32>
    %523 = arith.addf %521, %522 : vector<8x128xf32>
    %524 = arith.mulf %513, %492 : vector<8x128xf32>
    %525 = arith.mulf %505, %515 : vector<8x128xf32>
    %526 = arith.addf %524, %525 : vector<8x128xf32>
    %527 = math.tanh %526 : vector<8x128xf32>
    %528 = arith.mulf %523, %527 : vector<8x128xf32>
    %529 = vector.extract_strided_slice %378 {offsets = [32, 0], sizes = [8, 512], strides = [1, 1]} : vector<64x512xf32> to vector<8x512xf32>
    %cst_161 = arith.constant dense<0.000000e+00> : vector<8x512xf32>
    %530 = tpu.matmul %528, %362, %cst_161 {dimension_numbers = #tpu.dot_dimension_numbers<[1], [0], [0], [1], [0, 0, 1, 1], [], []>} : vector<8x128xf32>, vector<128x512xf32>, vector<8x512xf32> -> vector<8x512xf32>
    %531 = arith.addf %529, %530 : vector<8x512xf32>
    %532 = vector.extract_strided_slice %531 {offsets = [0, 0], sizes = [8, 128], strides = [1, 1]} : vector<8x512xf32> to vector<8x128xf32>
    %cst_162 = arith.constant 5.000000e-01 : f32
    %533 = vector.broadcast %cst_162 : f32 to vector<8x128xf32>
    %534 = arith.mulf %533, %532 : vector<8x128xf32>
    %535 = math.tanh %534 : vector<8x128xf32>
    %cst_163 = arith.constant 5.000000e-01 : f32
    %536 = vector.broadcast %cst_163 : f32 to vector<8x128xf32>
    %537 = arith.mulf %536, %535 : vector<8x128xf32>
    %cst_164 = arith.constant 5.000000e-01 : f32
    %538 = vector.broadcast %cst_164 : f32 to vector<8x128xf32>
    %539 = arith.addf %537, %538 : vector<8x128xf32>
    %540 = vector.extract_strided_slice %531 {offsets = [0, 128], sizes = [8, 128], strides = [1, 1]} : vector<8x512xf32> to vector<8x128xf32>
    %cst_165 = arith.constant 5.000000e-01 : f32
    %541 = vector.broadcast %cst_165 : f32 to vector<8x128xf32>
    %542 = arith.mulf %541, %540 : vector<8x128xf32>
    %543 = math.tanh %542 : vector<8x128xf32>
    %cst_166 = arith.constant 5.000000e-01 : f32
    %544 = vector.broadcast %cst_166 : f32 to vector<8x128xf32>
    %545 = arith.mulf %544, %543 : vector<8x128xf32>
    %cst_167 = arith.constant 5.000000e-01 : f32
    %546 = vector.broadcast %cst_167 : f32 to vector<8x128xf32>
    %547 = arith.addf %545, %546 : vector<8x128xf32>
    %548 = vector.extract_strided_slice %531 {offsets = [0, 256], sizes = [8, 128], strides = [1, 1]} : vector<8x512xf32> to vector<8x128xf32>
    %549 = math.tanh %548 : vector<8x128xf32>
    %550 = vector.extract_strided_slice %531 {offsets = [0, 384], sizes = [8, 128], strides = [1, 1]} : vector<8x512xf32> to vector<8x128xf32>
    %cst_168 = arith.constant 5.000000e-01 : f32
    %551 = vector.broadcast %cst_168 : f32 to vector<8x128xf32>
    %552 = arith.mulf %551, %550 : vector<8x128xf32>
    %553 = math.tanh %552 : vector<8x128xf32>
    %cst_169 = arith.constant 5.000000e-01 : f32
    %554 = vector.broadcast %cst_169 : f32 to vector<8x128xf32>
    %555 = arith.mulf %554, %553 : vector<8x128xf32>
    %cst_170 = arith.constant 5.000000e-01 : f32
    %556 = vector.broadcast %cst_170 : f32 to vector<8x128xf32>
    %557 = arith.addf %555, %556 : vector<8x128xf32>
    %558 = arith.mulf %547, %526 : vector<8x128xf32>
    %559 = arith.mulf %539, %549 : vector<8x128xf32>
    %560 = arith.addf %558, %559 : vector<8x128xf32>
    %561 = math.tanh %560 : vector<8x128xf32>
    %562 = arith.mulf %557, %561 : vector<8x128xf32>
    %563 = vector.extract_strided_slice %378 {offsets = [40, 0], sizes = [8, 512], strides = [1, 1]} : vector<64x512xf32> to vector<8x512xf32>
    %cst_171 = arith.constant dense<0.000000e+00> : vector<8x512xf32>
    %564 = tpu.matmul %562, %362, %cst_171 {dimension_numbers = #tpu.dot_dimension_numbers<[1], [0], [0], [1], [0, 0, 1, 1], [], []>} : vector<8x128xf32>, vector<128x512xf32>, vector<8x512xf32> -> vector<8x512xf32>
    %565 = arith.addf %563, %564 : vector<8x512xf32>
    %566 = vector.extract_strided_slice %565 {offsets = [0, 0], sizes = [8, 128], strides = [1, 1]} : vector<8x512xf32> to vector<8x128xf32>
    %cst_172 = arith.constant 5.000000e-01 : f32
    %567 = vector.broadcast %cst_172 : f32 to vector<8x128xf32>
    %568 = arith.mulf %567, %566 : vector<8x128xf32>
    %569 = math.tanh %568 : vector<8x128xf32>
    %cst_173 = arith.constant 5.000000e-01 : f32
    %570 = vector.broadcast %cst_173 : f32 to vector<8x128xf32>
    %571 = arith.mulf %570, %569 : vector<8x128xf32>
    %cst_174 = arith.constant 5.000000e-01 : f32
    %572 = vector.broadcast %cst_174 : f32 to vector<8x128xf32>
    %573 = arith.addf %571, %572 : vector<8x128xf32>
    %574 = vector.extract_strided_slice %565 {offsets = [0, 128], sizes = [8, 128], strides = [1, 1]} : vector<8x512xf32> to vector<8x128xf32>
    %cst_175 = arith.constant 5.000000e-01 : f32
    %575 = vector.broadcast %cst_175 : f32 to vector<8x128xf32>
    %576 = arith.mulf %575, %574 : vector<8x128xf32>
    %577 = math.tanh %576 : vector<8x128xf32>
    %cst_176 = arith.constant 5.000000e-01 : f32
    %578 = vector.broadcast %cst_176 : f32 to vector<8x128xf32>
    %579 = arith.mulf %578, %577 : vector<8x128xf32>
    %cst_177 = arith.constant 5.000000e-01 : f32
    %580 = vector.broadcast %cst_177 : f32 to vector<8x128xf32>
    %581 = arith.addf %579, %580 : vector<8x128xf32>
    %582 = vector.extract_strided_slice %565 {offsets = [0, 256], sizes = [8, 128], strides = [1, 1]} : vector<8x512xf32> to vector<8x128xf32>
    %583 = math.tanh %582 : vector<8x128xf32>
    %584 = vector.extract_strided_slice %565 {offsets = [0, 384], sizes = [8, 128], strides = [1, 1]} : vector<8x512xf32> to vector<8x128xf32>
    %cst_178 = arith.constant 5.000000e-01 : f32
    %585 = vector.broadcast %cst_178 : f32 to vector<8x128xf32>
    %586 = arith.mulf %585, %584 : vector<8x128xf32>
    %587 = math.tanh %586 : vector<8x128xf32>
    %cst_179 = arith.constant 5.000000e-01 : f32
    %588 = vector.broadcast %cst_179 : f32 to vector<8x128xf32>
    %589 = arith.mulf %588, %587 : vector<8x128xf32>
    %cst_180 = arith.constant 5.000000e-01 : f32
    %590 = vector.broadcast %cst_180 : f32 to vector<8x128xf32>
    %591 = arith.addf %589, %590 : vector<8x128xf32>
    %592 = arith.mulf %581, %560 : vector<8x128xf32>
    %593 = arith.mulf %573, %583 : vector<8x128xf32>
    %594 = arith.addf %592, %593 : vector<8x128xf32>
    %595 = math.tanh %594 : vector<8x128xf32>
    %596 = arith.mulf %591, %595 : vector<8x128xf32>
    %597 = vector.extract_strided_slice %378 {offsets = [48, 0], sizes = [8, 512], strides = [1, 1]} : vector<64x512xf32> to vector<8x512xf32>
    %cst_181 = arith.constant dense<0.000000e+00> : vector<8x512xf32>
    %598 = tpu.matmul %596, %362, %cst_181 {dimension_numbers = #tpu.dot_dimension_numbers<[1], [0], [0], [1], [0, 0, 1, 1], [], []>} : vector<8x128xf32>, vector<128x512xf32>, vector<8x512xf32> -> vector<8x512xf32>
    %599 = arith.addf %597, %598 : vector<8x512xf32>
    %600 = vector.extract_strided_slice %599 {offsets = [0, 0], sizes = [8, 128], strides = [1, 1]} : vector<8x512xf32> to vector<8x128xf32>
    %cst_182 = arith.constant 5.000000e-01 : f32
    %601 = vector.broadcast %cst_182 : f32 to vector<8x128xf32>
    %602 = arith.mulf %601, %600 : vector<8x128xf32>
    %603 = math.tanh %602 : vector<8x128xf32>
    %cst_183 = arith.constant 5.000000e-01 : f32
    %604 = vector.broadcast %cst_183 : f32 to vector<8x128xf32>
    %605 = arith.mulf %604, %603 : vector<8x128xf32>
    %cst_184 = arith.constant 5.000000e-01 : f32
    %606 = vector.broadcast %cst_184 : f32 to vector<8x128xf32>
    %607 = arith.addf %605, %606 : vector<8x128xf32>
    %608 = vector.extract_strided_slice %599 {offsets = [0, 128], sizes = [8, 128], strides = [1, 1]} : vector<8x512xf32> to vector<8x128xf32>
    %cst_185 = arith.constant 5.000000e-01 : f32
    %609 = vector.broadcast %cst_185 : f32 to vector<8x128xf32>
    %610 = arith.mulf %609, %608 : vector<8x128xf32>
    %611 = math.tanh %610 : vector<8x128xf32>
    %cst_186 = arith.constant 5.000000e-01 : f32
    %612 = vector.broadcast %cst_186 : f32 to vector<8x128xf32>
    %613 = arith.mulf %612, %611 : vector<8x128xf32>
    %cst_187 = arith.constant 5.000000e-01 : f32
    %614 = vector.broadcast %cst_187 : f32 to vector<8x128xf32>
    %615 = arith.addf %613, %614 : vector<8x128xf32>
    %616 = vector.extract_strided_slice %599 {offsets = [0, 256], sizes = [8, 128], strides = [1, 1]} : vector<8x512xf32> to vector<8x128xf32>
    %617 = math.tanh %616 : vector<8x128xf32>
    %618 = vector.extract_strided_slice %599 {offsets = [0, 384], sizes = [8, 128], strides = [1, 1]} : vector<8x512xf32> to vector<8x128xf32>
    %cst_188 = arith.constant 5.000000e-01 : f32
    %619 = vector.broadcast %cst_188 : f32 to vector<8x128xf32>
    %620 = arith.mulf %619, %618 : vector<8x128xf32>
    %621 = math.tanh %620 : vector<8x128xf32>
    %cst_189 = arith.constant 5.000000e-01 : f32
    %622 = vector.broadcast %cst_189 : f32 to vector<8x128xf32>
    %623 = arith.mulf %622, %621 : vector<8x128xf32>
    %cst_190 = arith.constant 5.000000e-01 : f32
    %624 = vector.broadcast %cst_190 : f32 to vector<8x128xf32>
    %625 = arith.addf %623, %624 : vector<8x128xf32>
    %626 = arith.mulf %615, %594 : vector<8x128xf32>
    %627 = arith.mulf %607, %617 : vector<8x128xf32>
    %628 = arith.addf %626, %627 : vector<8x128xf32>
    %629 = math.tanh %628 : vector<8x128xf32>
    %630 = arith.mulf %625, %629 : vector<8x128xf32>
    %631 = vector.extract_strided_slice %378 {offsets = [56, 0], sizes = [8, 512], strides = [1, 1]} : vector<64x512xf32> to vector<8x512xf32>
    %cst_191 = arith.constant dense<0.000000e+00> : vector<8x512xf32>
    %632 = tpu.matmul %630, %362, %cst_191 {dimension_numbers = #tpu.dot_dimension_numbers<[1], [0], [0], [1], [0, 0, 1, 1], [], []>} : vector<8x128xf32>, vector<128x512xf32>, vector<8x512xf32> -> vector<8x512xf32>
    %633 = arith.addf %631, %632 : vector<8x512xf32>
    %634 = vector.extract_strided_slice %633 {offsets = [0, 0], sizes = [8, 128], strides = [1, 1]} : vector<8x512xf32> to vector<8x128xf32>
    %cst_192 = arith.constant 5.000000e-01 : f32
    %635 = vector.broadcast %cst_192 : f32 to vector<8x128xf32>
    %636 = arith.mulf %635, %634 : vector<8x128xf32>
    %637 = math.tanh %636 : vector<8x128xf32>
    %cst_193 = arith.constant 5.000000e-01 : f32
    %638 = vector.broadcast %cst_193 : f32 to vector<8x128xf32>
    %639 = arith.mulf %638, %637 : vector<8x128xf32>
    %cst_194 = arith.constant 5.000000e-01 : f32
    %640 = vector.broadcast %cst_194 : f32 to vector<8x128xf32>
    %641 = arith.addf %639, %640 : vector<8x128xf32>
    %642 = vector.extract_strided_slice %633 {offsets = [0, 128], sizes = [8, 128], strides = [1, 1]} : vector<8x512xf32> to vector<8x128xf32>
    %cst_195 = arith.constant 5.000000e-01 : f32
    %643 = vector.broadcast %cst_195 : f32 to vector<8x128xf32>
    %644 = arith.mulf %643, %642 : vector<8x128xf32>
    %645 = math.tanh %644 : vector<8x128xf32>
    %cst_196 = arith.constant 5.000000e-01 : f32
    %646 = vector.broadcast %cst_196 : f32 to vector<8x128xf32>
    %647 = arith.mulf %646, %645 : vector<8x128xf32>
    %cst_197 = arith.constant 5.000000e-01 : f32
    %648 = vector.broadcast %cst_197 : f32 to vector<8x128xf32>
    %649 = arith.addf %647, %648 : vector<8x128xf32>
    %650 = vector.extract_strided_slice %633 {offsets = [0, 256], sizes = [8, 128], strides = [1, 1]} : vector<8x512xf32> to vector<8x128xf32>
    %651 = math.tanh %650 : vector<8x128xf32>
    %652 = vector.extract_strided_slice %633 {offsets = [0, 384], sizes = [8, 128], strides = [1, 1]} : vector<8x512xf32> to vector<8x128xf32>
    %cst_198 = arith.constant 5.000000e-01 : f32
    %653 = vector.broadcast %cst_198 : f32 to vector<8x128xf32>
    %654 = arith.mulf %653, %652 : vector<8x128xf32>
    %655 = math.tanh %654 : vector<8x128xf32>
    %cst_199 = arith.constant 5.000000e-01 : f32
    %656 = vector.broadcast %cst_199 : f32 to vector<8x128xf32>
    %657 = arith.mulf %656, %655 : vector<8x128xf32>
    %cst_200 = arith.constant 5.000000e-01 : f32
    %658 = vector.broadcast %cst_200 : f32 to vector<8x128xf32>
    %659 = arith.addf %657, %658 : vector<8x128xf32>
    %660 = arith.mulf %649, %628 : vector<8x128xf32>
    %661 = arith.mulf %641, %651 : vector<8x128xf32>
    %662 = arith.addf %660, %661 : vector<8x128xf32>
    %663 = math.tanh %662 : vector<8x128xf32>
    %664 = arith.mulf %659, %663 : vector<8x128xf32>
    %665 = arith.mulf %664, %383 : vector<8x128xf32>
    %666 = arith.mulf %426, %390 : vector<8x128xf32>
    %667 = arith.addf %665, %666 : vector<8x128xf32>
    %cst_201 = arith.constant dense<0.000000e+00> : vector<8xf32>
    %668 = vector.multi_reduction <add>, %667, %cst_201 [1] : vector<8x128xf32> to vector<8xf32>
    %669 = vector.shape_cast %668 : vector<8xf32> to vector<8x1xf32>
    %cst_202 = arith.constant 3.125000e-02 : f32
    %670 = vector.broadcast %cst_202 : f32 to vector<8x1xf32>
    %671 = arith.mulf %669, %670 : vector<8x1xf32>
    %672 = arith.mulf %667, %667 : vector<8x128xf32>
    %cst_203 = arith.constant dense<0.000000e+00> : vector<8xf32>
    %673 = vector.multi_reduction <add>, %672, %cst_203 [1] : vector<8x128xf32> to vector<8xf32>
    %674 = vector.shape_cast %673 : vector<8xf32> to vector<8x1xf32>
    %cst_204 = arith.constant 3.125000e-02 : f32
    %675 = vector.broadcast %cst_204 : f32 to vector<8x1xf32>
    %676 = arith.mulf %674, %675 : vector<8x1xf32>
    %677 = arith.mulf %671, %671 : vector<8x1xf32>
    %678 = arith.subf %676, %677 : vector<8x1xf32>
    %cst_205 = arith.constant 9.99999974E-6 : f32
    %679 = vector.broadcast %cst_205 : f32 to vector<8x1xf32>
    %680 = arith.addf %678, %679 : vector<8x1xf32>
    %681 = math.rsqrt %680 : vector<8x1xf32>
    %cst_206 = arith.constant dense<0.000000e+00> : vector<8x16xf32>
    %682 = tpu.matmul %667, %363, %cst_206 {dimension_numbers = #tpu.dot_dimension_numbers<[1], [0], [0], [1], [0, 0, 1, 1], [], []>} : vector<8x128xf32>, vector<128x16xf32>, vector<8x16xf32> -> vector<8x16xf32>
    %683 = vector.extract_strided_slice %364 {offsets = [0, 0], sizes = [1, 16], strides = [1, 1]} : vector<2x16xf32> to vector<1x16xf32>
    %684 = vector.shape_cast %683 : vector<1x16xf32> to vector<1x16xf32>
    %685 = vector.broadcast %684 : vector<1x16xf32> to vector<8x16xf32>
    %686 = vector.extract_strided_slice %364 {offsets = [1, 0], sizes = [1, 16], strides = [1, 1]} : vector<2x16xf32> to vector<1x16xf32>
    %687 = vector.shape_cast %686 : vector<1x16xf32> to vector<1x16xf32>
    %688 = vector.broadcast %687 : vector<1x16xf32> to vector<8x16xf32>
    %689 = vector.broadcast %671 : vector<8x1xf32> to vector<8x16xf32>
    %690 = arith.mulf %689, %685 : vector<8x16xf32>
    %691 = arith.subf %682, %690 : vector<8x16xf32>
    %692 = vector.broadcast %681 : vector<8x1xf32> to vector<8x16xf32>
    %693 = arith.mulf %692, %691 : vector<8x16xf32>
    %694 = arith.addf %693, %688 : vector<8x16xf32>
    %c0_207 = arith.constant 0 : index
    %c0_208 = arith.constant 0 : index
    %695 = vector.load %arg13[%c0_207, %c0_208] : memref<8x16xf32, #tpu.memory_space<vmem>>, vector<8x16xf32>
    tpu.vector_store %arg13[%c0_207, %c0_208], %694 {strides = array<i32>} : memref<8x16xf32, #tpu.memory_space<vmem>>, vector<8x16xf32>,
    return
  }
}

</mosaic_0001>

<llo_original>
// kernel: tpu_custom_call.1
$region0: #{tpu_custom_call.1}
  #allocation0 [shape = 'u32[]', space=smem, size = 0x4, offset = 0x4, fixed_abs, tag = 'smem constant byte address 0x4 - core index']
  #allocation1 [shape = 'u32[72,128]{1,0:T(1,128)}', space=vmem, size = 0x9000, scoped, tag = 'internal scratch']
  %s0 = inlined_call_operand.vmem [shape: f32[64,32], index: 0, kind: input, shape index: {}]
  %s1 = inlined_call_operand.vmem [shape: f32[32,512], index: 1, kind: input, shape index: {}]
  %s2 = inlined_call_operand.vmem [shape: f32[32,512], index: 2, kind: input, shape index: {}]
  %s3 = inlined_call_operand.vmem [shape: f32[1,512], index: 3, kind: input, shape index: {}]
  %s4 = inlined_call_operand.hbm [shape: f32[128,512], index: 4, kind: input, shape index: {}]
  %s5 = inlined_call_operand.vmem [shape: f32[128,32], index: 5, kind: input, shape index: {}]
  %s6 = inlined_call_operand.vmem [shape: f32[2,32], index: 6, kind: input, shape index: {}]
  %s7 = inlined_call_operand.hbm [shape: f32[32,512], index: 7, kind: input, shape index: {}]
  %s8 = inlined_call_operand.hbm [shape: f32[32,512], index: 8, kind: input, shape index: {}]
  %s9 = inlined_call_operand.vmem [shape: f32[1,512], index: 9, kind: input, shape index: {}]
  %s10 = inlined_call_operand.hbm [shape: f32[128,512], index: 10, kind: input, shape index: {}]
  %s11 = inlined_call_operand.vmem [shape: f32[128,16], index: 11, kind: input, shape index: {}]
  %s12 = inlined_call_operand.vmem [shape: f32[2,16], index: 12, kind: input, shape index: {}]
  %s13 = inlined_call_operand.hbm [shape: f32[8,16], index: 13, kind: output, shape index: {}]
  %s14 = sld [smem:[#allocation0]]
  $region78: #{tpu_custom_call.1} parent=0
    _
  %s16 = ssub.s32 1, %s14
  %s17 = scalar_select 0, %s16, %s14
  $region1: #{tpu_custom_call.1} parent=0
    #allocation2 [shape = 'u8[262144]{0}', space=vmem, size = 0x40000, scoped, tag = 'input window, operand 4, single buffered']
    #allocation3 [shape = 's32[1]{0}', space=sflag, size = 0x4, scoped, tag = 'scoped memory for tpu_custom_call.1']
    #allocation4 [shape = 's32[1]{0}', space=sflag, size = 0x4, scoped, tag = 'scoped memory for tpu_custom_call.1']
    #allocation5 [shape = 'u8[65536]{0}', space=vmem, size = 0x10000, scoped, tag = 'input window, operand 7, single buffered']
    #allocation6 [shape = 's32[1]{0}', space=sflag, size = 0x4, scoped, tag = 'scoped memory for tpu_custom_call.1']
    #allocation7 [shape = 'u8[65536]{0}', space=vmem, size = 0x10000, scoped, tag = 'input window, operand 8, single buffered']
    #allocation8 [shape = 'u8[262144]{0}', space=vmem, size = 0x40000, scoped, tag = 'input window, operand 10, single buffered']
    #allocation9 [shape = 's32[1]{0}', space=sflag, size = 0x4, scoped, tag = 'scoped memory for tpu_custom_call.1']
    #allocation10 [shape = 'u8[4096]{0}', space=vmem, size = 0x1000, scoped, tag = 'output window, operand 0, single buffered']
    %18 = vsyncpa [#allocation3], 0
    %19 = vsyncpa [#allocation6], 0
    %20 = vsyncpa [#allocation9], 0
    %21 = vsyncpa [#allocation4], 0
    // Predicated region
    $region2: #{tpu_custom_call.1} parent=1 // pred_check
      _
    $region3: #{tpu_custom_call.1} parent=1 // pred_check_branch
      %23 = sbr.rel (0) target = $region5
    $region4: #{tpu_custom_call.1} parent=1 // pred_region
      _
    $region5: #{tpu_custom_call.1} parent=1 // pred_fallthru
      _
    // Predicated region
    $region6: #{tpu_custom_call.1} parent=1 // pred_check
      _
    $region7: #{tpu_custom_call.1} parent=1 // pred_check_branch
      %25 = sbr.rel (0) target = $region9
    $region8: #{tpu_custom_call.1} parent=1 // pred_region
      _
    $region9: #{tpu_custom_call.1} parent=1 // pred_fallthru
      _
    // Predicated region
    $region10: #{tpu_custom_call.1} parent=1 // pred_check
      _
    $region11: #{tpu_custom_call.1} parent=1 // pred_check_branch
      %27 = sbr.rel (0) target = $region13
    $region12: #{tpu_custom_call.1} parent=1 // pred_region
      _
    $region13: #{tpu_custom_call.1} parent=1 // pred_fallthru
      _
    // Predicated region
    $region14: #{tpu_custom_call.1} parent=1 // pred_check
      _
    $region15: #{tpu_custom_call.1} parent=1 // pred_check_branch
      %29 = sbr.rel (0) target = $region17
    $region16: #{tpu_custom_call.1} parent=1 // pred_region
      _
    $region17: #{tpu_custom_call.1} parent=1 // pred_fallthru
      _
    // Predicated region
    $region18: #{tpu_custom_call.1} parent=1 // pred_check
      _
    $region19: #{tpu_custom_call.1} parent=1 // pred_check_branch
      %31 = sbr.rel (0) target = $region21
    $region20: #{tpu_custom_call.1} parent=1 // pred_region
      %33 = vsyncadd [#allocation3], 0
      %s34 = sshll.u32 %s4, 4
      %s35 = int_to_ptr.hbm [resolvable:$true] %s34
      %s36 = sshll.u32 [#allocation2], 4
      %s37 = int_to_ptr.vmem [resolvable:$true] %s36
      %42 = dma.hbm_to_vmem [thread:$0]  %s35, 8192, %s37, [#allocation3], 512, 512, 32
    $region21: #{tpu_custom_call.1} parent=1 // pred_fallthru
      _
    // Predicated region
    $region22: #{tpu_custom_call.1} parent=1 // pred_check
      _
    $region23: #{tpu_custom_call.1} parent=1 // pred_check_branch
      %44 = sbr.rel (0) target = $region25
    $region24: #{tpu_custom_call.1} parent=1 // pred_region
      _
    $region25: #{tpu_custom_call.1} parent=1 // pred_fallthru
      _
    // Predicated region
    $region26: #{tpu_custom_call.1} parent=1 // pred_check
      _
    $region27: #{tpu_custom_call.1} parent=1 // pred_check_branch
      %46 = sbr.rel (0) target = $region29
    $region28: #{tpu_custom_call.1} parent=1 // pred_region
      _
    $region29: #{tpu_custom_call.1} parent=1 // pred_fallthru
      _
    // Predicated region
    $region30: #{tpu_custom_call.1} parent=1 // pred_check
      _
    $region31: #{tpu_custom_call.1} parent=1 // pred_check_branch
      %48 = sbr.rel (0) target = $region33
    $region32: #{tpu_custom_call.1} parent=1 // pred_region
      %50 = vsyncadd [#allocation6], 0
      %s51 = sshll.u32 %s7, 4
      %s52 = int_to_ptr.hbm [resolvable:$true] %s51
      %s53 = sshll.u32 [#allocation5], 4
      %s54 = int_to_ptr.vmem [resolvable:$true] %s53
      %59 = dma.hbm_to_vmem [thread:$0]  %s52, 2048, %s54, [#allocation6], 512, 512, 32
    $region33: #{tpu_custom_call.1} parent=1 // pred_fallthru
      _
    // Predicated region
    $region34: #{tpu_custom_call.1} parent=1 // pred_check
      _
    $region35: #{tpu_custom_call.1} parent=1 // pred_check_branch
      %61 = sbr.rel (0) target = $region37
    $region36: #{tpu_custom_call.1} parent=1 // pred_region
      %63 = vsyncadd [#allocation6], 0
      %s64 = sshll.u32 %s8, 4
      %s65 = int_to_ptr.hbm [resolvable:$true] %s64
      %s66 = sshll.u32 [#allocation7], 4
      %s67 = int_to_ptr.vmem [resolvable:$true] %s66
      %72 = dma.hbm_to_vmem [thread:$0]  %s65, 2048, %s67, [#allocation6], 512, 512, 32
    $region37: #{tpu_custom_call.1} parent=1 // pred_fallthru
      _
    // Predicated region
    $region38: #{tpu_custom_call.1} parent=1 // pred_check
      _
    $region39: #{tpu_custom_call.1} parent=1 // pred_check_branch
      %74 = sbr.rel (0) target = $region41
    $region40: #{tpu_custom_call.1} parent=1 // pred_region
      _
    $region41: #{tpu_custom_call.1} parent=1 // pred_fallthru
      _
    // Predicated region
    $region42: #{tpu_custom_call.1} parent=1 // pred_check
      _
    $region43: #{tpu_custom_call.1} parent=1 // pred_check_branch
      %76 = sbr.rel (0) target = $region45
    $region44: #{tpu_custom_call.1} parent=1 // pred_region
      %78 = vsyncadd [#allocation9], 0
      %s79 = sshll.u32 %s10, 4
      %s80 = int_to_ptr.hbm [resolvable:$true] %s79
      %s81 = sshll.u32 [#allocation8], 4
      %s82 = int_to_ptr.vmem [resolvable:$true] %s81
      %87 = dma.hbm_to_vmem [thread:$0]  %s80, 8192, %s82, [#allocation9], 512, 512, 32
    $region45: #{tpu_custom_call.1} parent=1 // pred_fallthru
      _
    // Predicated region
    $region46: #{tpu_custom_call.1} parent=1 // pred_check
      _
    $region47: #{tpu_custom_call.1} parent=1 // pred_check_branch
      %89 = sbr.rel (0) target = $region49
    $region48: #{tpu_custom_call.1} parent=1 // pred_region
      _
    $region49: #{tpu_custom_call.1} parent=1 // pred_fallthru
      _
    // Predicated region
    $region50: #{tpu_custom_call.1} parent=1 // pred_check
      _
    $region51: #{tpu_custom_call.1} parent=1 // pred_check_branch
      %91 = sbr.rel (0) target = $region53
    $region52: #{tpu_custom_call.1} parent=1 // pred_region
      _
    $region53: #{tpu_custom_call.1} parent=1 // pred_fallthru
      _
    // Predicated region
    $region54: #{tpu_custom_call.1} parent=1 // pred_check
      _
    $region55: #{tpu_custom_call.1} parent=1 // pred_check_branch
      %93 = sbr.rel (0) target = $region57
    $region56: #{tpu_custom_call.1} parent=1 // pred_region
      %95 = dma.done [#allocation3], 8192
    $region57: #{tpu_custom_call.1} parent=1 // pred_fallthru
      _
    // Predicated region
    $region58: #{tpu_custom_call.1} parent=1 // pred_check
      _
    $region59: #{tpu_custom_call.1} parent=1 // pred_check_branch
      %97 = sbr.rel (0) target = $region61
    $region60: #{tpu_custom_call.1} parent=1 // pred_region
      %99 = dma.done [#allocation6], 2048
    $region61: #{tpu_custom_call.1} parent=1 // pred_fallthru
      _
    // Predicated region
    $region62: #{tpu_custom_call.1} parent=1 // pred_check
      _
    $region63: #{tpu_custom_call.1} parent=1 // pred_check_branch
      %101 = sbr.rel (0) target = $region65
    $region64: #{tpu_custom_call.1} parent=1 // pred_region
      %103 = dma.done [#allocation6], 2048
    $region65: #{tpu_custom_call.1} parent=1 // pred_fallthru
      _
    // Predicated region
    $region66: #{tpu_custom_call.1} parent=1 // pred_check
      _
    $region67: #{tpu_custom_call.1} parent=1 // pred_check_branch
      %105 = sbr.rel (0) target = $region69
    $region68: #{tpu_custom_call.1} parent=1 // pred_region
      %107 = dma.done [#allocation9], 8192
    $region69: #{tpu_custom_call.1} parent=1 // pred_fallthru
      _
    %v108 = vld [vmem:[%s0] sm:$0xff]
    %v109 = vld [vmem:[%s0 + $0x8] sm:$0xff]
    %v110 = vld [vmem:[%s0 + $0x10] sm:$0xff]
    %v111 = vld [vmem:[%s0 + $0x18] sm:$0xff]
    %v112 = vld [vmem:[%s0 + $0x20] sm:$0xff]
    %v113 = vld [vmem:[%s0 + $0x28] sm:$0xff]
    %v114 = vld [vmem:[%s0 + $0x30] sm:$0xff]
    %v115 = vld [vmem:[%s0 + $0x38] sm:$0xff]
    %v116 = vld [vmem:[%s1] sm:$0xff]
    %v117 = vld [vmem:[%s1 + $0x8] sm:$0xff]
    %v118 = vld [vmem:[%s1 + $0x10] sm:$0xff]
    %v119 = vld [vmem:[%s1 + $0x18] sm:$0xff]
    %v120 = vld [vmem:[%s1 + $0x20] sm:$0xff]
    %v121 = vld [vmem:[%s1 + $0x28] sm:$0xff]
    %v122 = vld [vmem:[%s1 + $0x30] sm:$0xff]
    %v123 = vld [vmem:[%s1 + $0x38] sm:$0xff]
    %v124 = vld [vmem:[%s1 + $0x40] sm:$0xff]
    %v125 = vld [vmem:[%s1 + $0x48] sm:$0xff]
    %v126 = vld [vmem:[%s1 + $0x50] sm:$0xff]
    %v127 = vld [vmem:[%s1 + $0x58] sm:$0xff]
    %v128 = vld [vmem:[%s1 + $0x60] sm:$0xff]
    %v129 = vld [vmem:[%s1 + $0x68] sm:$0xff]
    %v130 = vld [vmem:[%s1 + $0x70] sm:$0xff]
    %v131 = vld [vmem:[%s1 + $0x78] sm:$0xff]
    %v132 = vld [vmem:[%s2] sm:$0xff]
    %v133 = vld [vmem:[%s2 + $0x8] sm:$0xff]
    %v134 = vld [vmem:[%s2 + $0x10] sm:$0xff]
    %v135 = vld [vmem:[%s2 + $0x18] sm:$0xff]
    %v136 = vld [vmem:[%s2 + $0x20] sm:$0xff]
    %v137 = vld [vmem:[%s2 + $0x28] sm:$0xff]
    %v138 = vld [vmem:[%s2 + $0x30] sm:$0xff]
    %v139 = vld [vmem:[%s2 + $0x38] sm:$0xff]
    %v140 = vld [vmem:[%s2 + $0x40] sm:$0xff]
    %v141 = vld [vmem:[%s2 + $0x48] sm:$0xff]
    %v142 = vld [vmem:[%s2 + $0x50] sm:$0xff]
    %v143 = vld [vmem:[%s2 + $0x58] sm:$0xff]
    %v144 = vld [vmem:[%s2 + $0x60] sm:$0xff]
    %v145 = vld [vmem:[%s2 + $0x68] sm:$0xff]
    %v146 = vld [vmem:[%s2 + $0x70] sm:$0xff]
    %v147 = vld [vmem:[%s2 + $0x78] sm:$0xff]
    %v148 = vld [vmem:[%s3] sm:$0xf]
    %v149 = vld [vmem:[#allocation2] sm:$0xff]
    %v150 = vld [vmem:[#allocation2 + $0x8] sm:$0xff]
    %v151 = vld [vmem:[#allocation2 + $0x10] sm:$0xff]
    %v152 = vld [vmem:[#allocation2 + $0x18] sm:$0xff]
    %v153 = vld [vmem:[#allocation2 + $0x20] sm:$0xff]
    %v154 = vld [vmem:[#allocation2 + $0x28] sm:$0xff]
    %v155 = vld [vmem:[#allocation2 + $0x30] sm:$0xff]
    %v156 = vld [vmem:[#allocation2 + $0x38] sm:$0xff]
    %v157 = vld [vmem:[#allocation2 + $0x40] sm:$0xff]
    %v158 = vld [vmem:[#allocation2 + $0x48] sm:$0xff]
    %v159 = vld [vmem:[#allocation2 + $0x50] sm:$0xff]
    %v160 = vld [vmem:[#allocation2 + $0x58] sm:$0xff]
    %v161 = vld [vmem:[#allocation2 + $0x60] sm:$0xff]
    %v162 = vld [vmem:[#allocation2 + $0x68] sm:$0xff]
    %v163 = vld [vmem:[#allocation2 + $0x70] sm:$0xff]
    %v164 = vld [vmem:[#allocation2 + $0x78] sm:$0xff]
    %v165 = vld [vmem:[#allocation2 + $0x80] sm:$0xff]
    %v166 = vld [vmem:[#allocation2 + $0x88] sm:$0xff]
    %v167 = vld [vmem:[#allocation2 + $0x90] sm:$0xff]
    %v168 = vld [vmem:[#allocation2 + $0x98] sm:$0xff]
    %v169 = vld [vmem:[#allocation2 + $0xa0] sm:$0xff]
    %v170 = vld [vmem:[#allocation2 + $0xa8] sm:$0xff]
    %v171 = vld [vmem:[#allocation2 + $0xb0] sm:$0xff]
    %v172 = vld [vmem:[#allocation2 + $0xb8] sm:$0xff]
    %v173 = vld [vmem:[#allocation2 + $0xc0] sm:$0xff]
    %v174 = vld [vmem:[#allocation2 + $0xc8] sm:$0xff]
    %v175 = vld [vmem:[#allocation2 + $0xd0] sm:$0xff]
    %v176 = vld [vmem:[#allocation2 + $0xd8] sm:$0xff]
    %v177 = vld [vmem:[#allocation2 + $0xe0] sm:$0xff]
    %v178 = vld [vmem:[#allocation2 + $0xe8] sm:$0xff]
    %v179 = vld [vmem:[#allocation2 + $0xf0] sm:$0xff]
    %v180 = vld [vmem:[#allocation2 + $0xf8] sm:$0xff]
    %v181 = vld [vmem:[#allocation2 + $0x100] sm:$0xff]
    %v182 = vld [vmem:[#allocation2 + $0x108] sm:$0xff]
    %v183 = vld [vmem:[#allocation2 + $0x110] sm:$0xff]
    %v184 = vld [vmem:[#allocation2 + $0x118] sm:$0xff]
    %v185 = vld [vmem:[#allocation2 + $0x120] sm:$0xff]
    %v186 = vld [vmem:[#allocation2 + $0x128] sm:$0xff]
    %v187 = vld [vmem:[#allocation2 + $0x130] sm:$0xff]
    %v188 = vld [vmem:[#allocation2 + $0x138] sm:$0xff]
    %v189 = vld [vmem:[#allocation2 + $0x140] sm:$0xff]
    %v190 = vld [vmem:[#allocation2 + $0x148] sm:$0xff]
    %v191 = vld [vmem:[#allocation2 + $0x150] sm:$0xff]
    %v192 = vld [vmem:[#allocation2 + $0x158] sm:$0xff]
    %v193 = vld [vmem:[#allocation2 + $0x160] sm:$0xff]
    %v194 = vld [vmem:[#allocation2 + $0x168] sm:$0xff]
    %v195 = vld [vmem:[#allocation2 + $0x170] sm:$0xff]
    %v196 = vld [vmem:[#allocation2 + $0x178] sm:$0xff]
    %v197 = vld [vmem:[#allocation2 + $0x180] sm:$0xff]
    %v198 = vld [vmem:[#allocation2 + $0x188] sm:$0xff]
    %v199 = vld [vmem:[#allocation2 + $0x190] sm:$0xff]
    %v200 = vld [vmem:[#allocation2 + $0x198] sm:$0xff]
    %v201 = vld [vmem:[#allocation2 + $0x1a0] sm:$0xff]
    %v202 = vld [vmem:[#allocation2 + $0x1a8] sm:$0xff]
    %v203 = vld [vmem:[#allocation2 + $0x1b0] sm:$0xff]
    %v204 = vld [vmem:[#allocation2 + $0x1b8] sm:$0xff]
    %v205 = vld [vmem:[#allocation2 + $0x1c0] sm:$0xff]
    %v206 = vld [vmem:[#allocation2 + $0x1c8] sm:$0xff]
    %v207 = vld [vmem:[#allocation2 + $0x1d0] sm:$0xff]
    %v208 = vld [vmem:[#allocation2 + $0x1d8] sm:$0xff]
    %v209 = vld [vmem:[#allocation2 + $0x1e0] sm:$0xff]
    %v210 = vld [vmem:[#allocation2 + $0x1e8] sm:$0xff]
    %v211 = vld [vmem:[#allocation2 + $0x1f0] sm:$0xff]
    %v212 = vld [vmem:[#allocation2 + $0x1f8] sm:$0xff]
    %v213 = vld [vmem:[%s5] sm:$0xff]
    %v214 = vld [vmem:[%s5 + $0x8] sm:$0xff]
    %v215 = vld [vmem:[%s5 + $0x10] sm:$0xff]
    %v216 = vld [vmem:[%s5 + $0x18] sm:$0xff]
    %v217 = vld [vmem:[%s5 + $0x20] sm:$0xff]
    %v218 = vld [vmem:[%s5 + $0x28] sm:$0xff]
    %v219 = vld [vmem:[%s5 + $0x30] sm:$0xff]
    %v220 = vld [vmem:[%s5 + $0x38] sm:$0xff]
    %v221 = vld [vmem:[%s5 + $0x40] sm:$0xff]
    %v222 = vld [vmem:[%s5 + $0x48] sm:$0xff]
    %v223 = vld [vmem:[%s5 + $0x50] sm:$0xff]
    %v224 = vld [vmem:[%s5 + $0x58] sm:$0xff]
    %v225 = vld [vmem:[%s5 + $0x60] sm:$0xff]
    %v226 = vld [vmem:[%s5 + $0x68] sm:$0xff]
    %v227 = vld [vmem:[%s5 + $0x70] sm:$0xff]
    %v228 = vld [vmem:[%s5 + $0x78] sm:$0xff]
    %v229 = vld [vmem:[%s6] sm:$0x3]
    %vm230 = vcmask 261120
    %v232 = vsel %vm230, %v108, 0
    %v235 = vsel %vm230, %v109, 0
    %v238 = vsel %vm230, %v110, 0
    %v241 = vsel %vm230, %v111, 0
    %v244 = vsel %vm230, %v112, 0
    %v247 = vsel %vm230, %v113, 0
    %v250 = vsel %vm230, %v114, 0
    %v253 = vsel %vm230, %v115, 0
    %255 = vmatpush.msra.mxu0 0.0
    %256 = vmatpush.msra.mxu0 0.0
    %257 = vmatpush.msra.mxu0 0.0
    %258 = vmatpush.msra.mxu0 0.0
    %259 = vmatpush.msra.mxu0 0.0
    %260 = vmatpush.msra.mxu0 0.0
    %261 = vmatpush.msra.mxu0 0.0
    %262 = vmatpush.msra.mxu0 0.0
    %263 = vmatpush.msra.mxu0 0.0
    %264 = vmatpush.msra.mxu0 0.0
    %265 = vmatpush.msra.mxu0 0.0
    %266 = vmatpush.msra.mxu0 0.0
    %267 = vmatpush.msra.mxu0 %v144
    %268 = vmatpush.msra.mxu0 %v140
    %269 = vmatpush.msra.mxu0 %v136
    %270 = vmatpush.msra.mxu0 %v132
    %271 = vmatmul.f32.gmra.mxu0 %v232
    %v272 = vpop.f32.mrf.mxu0
    %v273 = vadd.f32 0.0, %v272
    %274 = vmatmul.f32.gmra.mxu0 %v235
    %v275 = vpop.f32.mrf.mxu0
    %v276 = vadd.f32 0.0, %v275
    %277 = vmatmul.f32.gmra.mxu0 %v238
    %v278 = vpop.f32.mrf.mxu0
    %v279 = vadd.f32 0.0, %v278
    %280 = vmatmul.f32.gmra.mxu0 %v241
    %v281 = vpop.f32.mrf.mxu0
    %v282 = vadd.f32 0.0, %v281
    %283 = vmatmul.f32.gmra.mxu0 %v244
    %v284 = vpop.f32.mrf.mxu0
    %v285 = vadd.f32 0.0, %v284
    %286 = vmatmul.f32.gmra.mxu0 %v247
    %v287 = vpop.f32.mrf.mxu0
    %v288 = vadd.f32 0.0, %v287
    %289 = vmatmul.f32.gmra.mxu0 %v250
    %v290 = vpop.f32.mrf.mxu0
    %v291 = vadd.f32 0.0, %v290
    %292 = vmatmul.f32.gmra.mxu0 %v253
    %v293 = vpop.f32.mrf.mxu0
    %v294 = vadd.f32 0.0, %v293
    %295 = vdwg.mxu0
    %296 = vmatpush.msra.mxu0 0.0
    %297 = vmatpush.msra.mxu0 0.0
    %298 = vmatpush.msra.mxu0 0.0
    %299 = vmatpush.msra.mxu0 0.0
    %300 = vmatpush.msra.mxu0 0.0
    %301 = vmatpush.msra.mxu0 0.0
    %302 = vmatpush.msra.mxu0 0.0
    %303 = vmatpush.msra.mxu0 0.0
    %304 = vmatpush.msra.mxu0 0.0
    %305 = vmatpush.msra.mxu0 0.0
    %306 = vmatpush.msra.mxu0 0.0
    %307 = vmatpush.msra.mxu0 0.0
    %308 = vmatpush.msra.mxu0 %v145
    %309 = vmatpush.msra.mxu0 %v141
    %310 = vmatpush.msra.mxu0 %v137
    %311 = vmatpush.msra.mxu0 %v133
    %312 = vmatmul.f32.gmra.mxu0 %v232
    %v313 = vpop.f32.mrf.mxu0
    %v314 = vadd.f32 0.0, %v313
    %315 = vmatmul.f32.gmra.mxu0 %v235
    %v316 = vpop.f32.mrf.mxu0
    %v317 = vadd.f32 0.0, %v316
    %318 = vmatmul.f32.gmra.mxu0 %v238
    %v319 = vpop.f32.mrf.mxu0
    %v320 = vadd.f32 0.0, %v319
    %321 = vmatmul.f32.gmra.mxu0 %v241
    %v322 = vpop.f32.mrf.mxu0
    %v323 = vadd.f32 0.0, %v322
    %324 = vmatmul.f32.gmra.mxu0 %v244
    %v325 = vpop.f32.mrf.mxu0
    %v326 = vadd.f32 0.0, %v325
    %327 = vmatmul.f32.gmra.mxu0 %v247
    %v328 = vpop.f32.mrf.mxu0
    %v329 = vadd.f32 0.0, %v328
    %330 = vmatmul.f32.gmra.mxu0 %v250
    %v331 = vpop.f32.mrf.mxu0
    %v332 = vadd.f32 0.0, %v331
    %333 = vmatmul.f32.gmra.mxu0 %v253
    %v334 = vpop.f32.mrf.mxu0
    %v335 = vadd.f32 0.0, %v334
    %336 = vdwg.mxu0
    %337 = vmatpush.msra.mxu0 0.0
    %338 = vmatpush.msra.mxu0 0.0
    %339 = vmatpush.msra.mxu0 0.0
    %340 = vmatpush.msra.mxu0 0.0
    %341 = vmatpush.msra.mxu0 0.0
    %342 = vmatpush.msra.mxu0 0.0
    %343 = vmatpush.msra.mxu0 0.0
    %344 = vmatpush.msra.mxu0 0.0
    %345 = vmatpush.msra.mxu0 0.0
    %346 = vmatpush.msra.mxu0 0.0
    %347 = vmatpush.msra.mxu0 0.0
    %348 = vmatpush.msra.mxu0 0.0
    %349 = vmatpush.msra.mxu0 %v146
    %350 = vmatpush.msra.mxu0 %v142
    %351 = vmatpush.msra.mxu0 %v138
    %352 = vmatpush.msra.mxu0 %v134
    %353 = vmatmul.f32.gmra.mxu0 %v232
    %v354 = vpop.f32.mrf.mxu0
    %v355 = vadd.f32 0.0, %v354
    %356 = vmatmul.f32.gmra.mxu0 %v235
    %v357 = vpop.f32.mrf.mxu0
    %v358 = vadd.f32 0.0, %v357
    %359 = vmatmul.f32.gmra.mxu0 %v238
    %v360 = vpop.f32.mrf.mxu0
    %v361 = vadd.f32 0.0, %v360
    %362 = vmatmul.f32.gmra.mxu0 %v241
    %v363 = vpop.f32.mrf.mxu0
    %v364 = vadd.f32 0.0, %v363
    %365 = vmatmul.f32.gmra.mxu0 %v244
    %v366 = vpop.f32.mrf.mxu0
    %v367 = vadd.f32 0.0, %v366
    %368 = vmatmul.f32.gmra.mxu0 %v247
    %v369 = vpop.f32.mrf.mxu0
    %v370 = vadd.f32 0.0, %v369
    %371 = vmatmul.f32.gmra.mxu0 %v250
    %v372 = vpop.f32.mrf.mxu0
    %v373 = vadd.f32 0.0, %v372
    %374 = vmatmul.f32.gmra.mxu0 %v253
    %v375 = vpop.f32.mrf.mxu0
    %v376 = vadd.f32 0.0, %v375
    %377 = vdwg.mxu0
    %378 = vmatpush.msra.mxu0 0.0
    %379 = vmatpush.msra.mxu0 0.0
    %380 = vmatpush.msra.mxu0 0.0
    %381 = vmatpush.msra.mxu0 0.0
    %382 = vmatpush.msra.mxu0 0.0
    %383 = vmatpush.msra.mxu0 0.0
    %384 = vmatpush.msra.mxu0 0.0
    %385 = vmatpush.msra.mxu0 0.0
    %386 = vmatpush.msra.mxu0 0.0
    %387 = vmatpush.msra.mxu0 0.0
    %388 = vmatpush.msra.mxu0 0.0
    %389 = vmatpush.msra.mxu0 0.0
    %390 = vmatpush.msra.mxu0 %v147
    %391 = vmatpush.msra.mxu0 %v143
    %392 = vmatpush.msra.mxu0 %v139
    %393 = vmatpush.msra.mxu0 %v135
    %394 = vmatmul.f32.gmra.mxu0 %v232
    %v395 = vpop.f32.mrf.mxu0
    %v396 = vadd.f32 0.0, %v395
    %397 = vmatmul.f32.gmra.mxu0 %v235
    %v398 = vpop.f32.mrf.mxu0
    %v399 = vadd.f32 0.0, %v398
    %400 = vmatmul.f32.gmra.mxu0 %v238
    %v401 = vpop.f32.mrf.mxu0
    %v402 = vadd.f32 0.0, %v401
    %403 = vmatmul.f32.gmra.mxu0 %v241
    %v404 = vpop.f32.mrf.mxu0
    %v405 = vadd.f32 0.0, %v404
    %406 = vmatmul.f32.gmra.mxu0 %v244
    %v407 = vpop.f32.mrf.mxu0
    %v408 = vadd.f32 0.0, %v407
    %409 = vmatmul.f32.gmra.mxu0 %v247
    %v410 = vpop.f32.mrf.mxu0
    %v411 = vadd.f32 0.0, %v410
    %412 = vmatmul.f32.gmra.mxu0 %v250
    %v413 = vpop.f32.mrf.mxu0
    %v414 = vadd.f32 0.0, %v413
    %415 = vmatmul.f32.gmra.mxu0 %v253
    %v416 = vpop.f32.mrf.mxu0
    %v417 = vadd.f32 0.0, %v416
    %418 = vdwg.mxu0
    %419 = vmatpush.msra.mxu0 0.0
    %420 = vmatpush.msra.mxu0 0.0
    %421 = vmatpush.msra.mxu0 0.0
    %422 = vmatpush.msra.mxu0 0.0
    %423 = vmatpush.msra.mxu0 0.0
    %424 = vmatpush.msra.mxu0 0.0
    %425 = vmatpush.msra.mxu0 0.0
    %426 = vmatpush.msra.mxu0 0.0
    %427 = vmatpush.msra.mxu0 0.0
    %428 = vmatpush.msra.mxu0 0.0
    %429 = vmatpush.msra.mxu0 0.0
    %430 = vmatpush.msra.mxu0 0.0
    %431 = vmatpush.msra.mxu0 %v128
    %432 = vmatpush.msra.mxu0 %v124
    %433 = vmatpush.msra.mxu0 %v120
    %434 = vmatpush.msra.mxu0 %v116
    %435 = vmatmul.f32.gmra.mxu0 %v232
    %v436 = vpop.f32.mrf.mxu0
    %v437 = vadd.f32 %v294, %v436
    %438 = vmatmul.f32.gmra.mxu0 %v235
    %v439 = vpop.f32.mrf.mxu0
    %v440 = vadd.f32 %v291, %v439
    %441 = vmatmul.f32.gmra.mxu0 %v238
    %v442 = vpop.f32.mrf.mxu0
    %v443 = vadd.f32 %v288, %v442
    %444 = vmatmul.f32.gmra.mxu0 %v241
    %v445 = vpop.f32.mrf.mxu0
    %v446 = vadd.f32 %v285, %v445
    %447 = vmatmul.f32.gmra.mxu0 %v244
    %v448 = vpop.f32.mrf.mxu0
    %v449 = vadd.f32 %v282, %v448
    %450 = vmatmul.f32.gmra.mxu0 %v247
    %v451 = vpop.f32.mrf.mxu0
    %v452 = vadd.f32 %v279, %v451
    %453 = vmatmul.f32.gmra.mxu0 %v250
    %v454 = vpop.f32.mrf.mxu0
    %v455 = vadd.f32 %v276, %v454
    %456 = vmatmul.f32.gmra.mxu0 %v253
    %v457 = vpop.f32.mrf.mxu0
    %v458 = vadd.f32 %v273, %v457
    %459 = vdwg.mxu0
    %460 = vmatpush.msra.mxu0 0.0
    %461 = vmatpush.msra.mxu0 0.0
    %462 = vmatpush.msra.mxu0 0.0
    %463 = vmatpush.msra.mxu0 0.0
    %464 = vmatpush.msra.mxu0 0.0
    %465 = vmatpush.msra.mxu0 0.0
    %466 = vmatpush.msra.mxu0 0.0
    %467 = vmatpush.msra.mxu0 0.0
    %468 = vmatpush.msra.mxu0 0.0
    %469 = vmatpush.msra.mxu0 0.0
    %470 = vmatpush.msra.mxu0 0.0
    %471 = vmatpush.msra.mxu0 0.0
    %472 = vmatpush.msra.mxu0 %v129
    %473 = vmatpush.msra.mxu0 %v125
    %474 = vmatpush.msra.mxu0 %v121
    %475 = vmatpush.msra.mxu0 %v117
    %476 = vmatmul.f32.gmra.mxu0 %v232
    %v477 = vpop.f32.mrf.mxu0
    %v478 = vadd.f32 %v335, %v477
    %479 = vmatmul.f32.gmra.mxu0 %v235
    %v480 = vpop.f32.mrf.mxu0
    %v481 = vadd.f32 %v332, %v480
    %482 = vmatmul.f32.gmra.mxu0 %v238
    %v483 = vpop.f32.mrf.mxu0
    %v484 = vadd.f32 %v329, %v483
    %485 = vmatmul.f32.gmra.mxu0 %v241
    %v486 = vpop.f32.mrf.mxu0
    %v487 = vadd.f32 %v326, %v486
    %488 = vmatmul.f32.gmra.mxu0 %v244
    %v489 = vpop.f32.mrf.mxu0
    %v490 = vadd.f32 %v323, %v489
    %491 = vmatmul.f32.gmra.mxu0 %v247
    %v492 = vpop.f32.mrf.mxu0
    %v493 = vadd.f32 %v320, %v492
    %494 = vmatmul.f32.gmra.mxu0 %v250
    %v495 = vpop.f32.mrf.mxu0
    %v496 = vadd.f32 %v317, %v495
    %497 = vmatmul.f32.gmra.mxu0 %v253
    %v498 = vpop.f32.mrf.mxu0
    %v499 = vadd.f32 %v314, %v498
    %500 = vdwg.mxu0
    %501 = vmatpush.msra.mxu0 0.0
    %502 = vmatpush.msra.mxu0 0.0
    %503 = vmatpush.msra.mxu0 0.0
    %504 = vmatpush.msra.mxu0 0.0
    %505 = vmatpush.msra.mxu0 0.0
    %506 = vmatpush.msra.mxu0 0.0
    %507 = vmatpush.msra.mxu0 0.0
    %508 = vmatpush.msra.mxu0 0.0
    %509 = vmatpush.msra.mxu0 0.0
    %510 = vmatpush.msra.mxu0 0.0
    %511 = vmatpush.msra.mxu0 0.0
    %512 = vmatpush.msra.mxu0 0.0
    %513 = vmatpush.msra.mxu0 %v130
    %514 = vmatpush.msra.mxu0 %v126
    %515 = vmatpush.msra.mxu0 %v122
    %516 = vmatpush.msra.mxu0 %v118
    %517 = vmatmul.f32.gmra.mxu0 %v232
    %v518 = vpop.f32.mrf.mxu0
    %v519 = vadd.f32 %v376, %v518
    %520 = vmatmul.f32.gmra.mxu0 %v235
    %v521 = vpop.f32.mrf.mxu0
    %v522 = vadd.f32 %v373, %v521
    %523 = vmatmul.f32.gmra.mxu0 %v238
    %v524 = vpop.f32.mrf.mxu0
    %v525 = vadd.f32 %v370, %v524
    %526 = vmatmul.f32.gmra.mxu0 %v241
    %v527 = vpop.f32.mrf.mxu0
    %v528 = vadd.f32 %v367, %v527
    %529 = vmatmul.f32.gmra.mxu0 %v244
    %v530 = vpop.f32.mrf.mxu0
    %v531 = vadd.f32 %v364, %v530
    %532 = vmatmul.f32.gmra.mxu0 %v247
    %v533 = vpop.f32.mrf.mxu0
    %v534 = vadd.f32 %v361, %v533
    %535 = vmatmul.f32.gmra.mxu0 %v250
    %v536 = vpop.f32.mrf.mxu0
    %v537 = vadd.f32 %v358, %v536
    %538 = vmatmul.f32.gmra.mxu0 %v253
    %v539 = vpop.f32.mrf.mxu0
    %v540 = vadd.f32 %v355, %v539
    %541 = vdwg.mxu0
    %542 = vmatpush.msra.mxu0 0.0
    %543 = vmatpush.msra.mxu0 0.0
    %544 = vmatpush.msra.mxu0 0.0
    %545 = vmatpush.msra.mxu0 0.0
    %546 = vmatpush.msra.mxu0 0.0
    %547 = vmatpush.msra.mxu0 0.0
    %548 = vmatpush.msra.mxu0 0.0
    %549 = vmatpush.msra.mxu0 0.0
    %550 = vmatpush.msra.mxu0 0.0
    %551 = vmatpush.msra.mxu0 0.0
    %552 = vmatpush.msra.mxu0 0.0
    %553 = vmatpush.msra.mxu0 0.0
    %554 = vmatpush.msra.mxu0 %v131
    %555 = vmatpush.msra.mxu0 %v127
    %556 = vmatpush.msra.mxu0 %v123
    %557 = vmatpush.msra.mxu0 %v119
    %558 = vmatmul.f32.gmra.mxu0 %v232
    %v559 = vpop.f32.mrf.mxu0
    %v560 = vadd.f32 %v417, %v559
    %561 = vmatmul.f32.gmra.mxu0 %v235
    %v562 = vpop.f32.mrf.mxu0
    %v563 = vadd.f32 %v414, %v562
    %564 = vmatmul.f32.gmra.mxu0 %v238
    %v565 = vpop.f32.mrf.mxu0
    %v566 = vadd.f32 %v411, %v565
    %567 = vmatmul.f32.gmra.mxu0 %v241
    %v568 = vpop.f32.mrf.mxu0
    %v569 = vadd.f32 %v408, %v568
    %570 = vmatmul.f32.gmra.mxu0 %v244
    %v571 = vpop.f32.mrf.mxu0
    %v572 = vadd.f32 %v405, %v571
    %573 = vmatmul.f32.gmra.mxu0 %v247
    %v574 = vpop.f32.mrf.mxu0
    %v575 = vadd.f32 %v402, %v574
    %576 = vmatmul.f32.gmra.mxu0 %v250
    %v577 = vpop.f32.mrf.mxu0
    %v578 = vadd.f32 %v399, %v577
    %579 = vmatmul.f32.gmra.mxu0 %v253
    %v580 = vpop.f32.mrf.mxu0
    %v581 = vadd.f32 %v396, %v580
    %582 = vdwg.mxu0
    %v584 = vperm.slane %v148, 0
    %v585 = vperm.slane %v148, 1
    %v586 = vperm.slane %v148, 2
    %v587 = vperm.slane %v148, 3
    %v592 = vadd.f32 %v437, %v584
    %v593 = vadd.f32 %v478, %v585
    %v594 = vadd.f32 %v519, %v586
    %v595 = vadd.f32 %v560, %v587
    %v596 = vadd.f32 %v440, %v584
    %v597 = vadd.f32 %v481, %v585
    %v598 = vadd.f32 %v522, %v586
    %v599 = vadd.f32 %v563, %v587
    %v600 = vadd.f32 %v443, %v584
    %v601 = vadd.f32 %v484, %v585
    %v602 = vadd.f32 %v525, %v586
    %v603 = vadd.f32 %v566, %v587
    %v604 = vadd.f32 %v446, %v584
    %v605 = vadd.f32 %v487, %v585
    %v606 = vadd.f32 %v528, %v586
    %v607 = vadd.f32 %v569, %v587
    %v608 = vadd.f32 %v449, %v584
    %v609 = vadd.f32 %v490, %v585
    %v610 = vadd.f32 %v531, %v586
    %v611 = vadd.f32 %v572, %v587
    %v612 = vadd.f32 %v452, %v584
    %v613 = vadd.f32 %v493, %v585
    %v614 = vadd.f32 %v534, %v586
    %v615 = vadd.f32 %v575, %v587
    %v616 = vadd.f32 %v455, %v584
    %v617 = vadd.f32 %v496, %v585
    %v618 = vadd.f32 %v537, %v586
    %v619 = vadd.f32 %v578, %v587
    %v620 = vadd.f32 %v458, %v584
    %v621 = vadd.f32 %v499, %v585
    %v622 = vadd.f32 %v540, %v586
    %v623 = vadd.f32 %v581, %v587
    %v624 = vlaneseq
    %v625 = vand.u32 %v624, 127
    %vm626 = vcmp.lt.s32.totalorder %v625, 32
    %v627 = vsel %vm626, 1, 0
    %v628 = vcvt.s32.f32 %v627
    %vm629 = vcmp.ge.s32.totalorder %v625, 32
    %vm630 = vcmp.lt.s32.totalorder %v625, 64
    %vm631 = vmand %vm629, %vm630
    %v632 = vsel %vm631, 1, 0
    %v633 = vcvt.s32.f32 %v632
    %634 = vmatpush.msra.mxu0 %v209
    %635 = vmatpush.msra.mxu0 %v205
    %636 = vmatpush.msra.mxu0 %v201
    %637 = vmatpush.msra.mxu0 %v197
    %638 = vmatpush.msra.mxu0 %v193
    %639 = vmatpush.msra.mxu0 %v189
    %640 = vmatpush.msra.mxu0 %v185
    %641 = vmatpush.msra.mxu0 %v181
    %642 = vmatpush.msra.mxu0 %v177
    %643 = vmatpush.msra.mxu0 %v173
    %644 = vmatpush.msra.mxu0 %v169
    %645 = vmatpush.msra.mxu0 %v165
    %646 = vmatpush.msra.mxu0 %v161
    %647 = vmatpush.msra.mxu0 %v157
    %648 = vmatpush.msra.mxu0 %v153
    %649 = vmatpush.msra.mxu0 %v149
    %650 = vmatmul.f32.gmra.mxu0 0.0
    %v651 = vpop.f32.mrf.mxu0
    %v652 = vadd.f32 0.0, %v651
    %653 = vdwg.mxu0
    %654 = vmatpush.msra.mxu0 %v210
    %655 = vmatpush.msra.mxu0 %v206
    %656 = vmatpush.msra.mxu0 %v202
    %657 = vmatpush.msra.mxu0 %v198
    %658 = vmatpush.msra.mxu0 %v194
    %659 = vmatpush.msra.mxu0 %v190
    %660 = vmatpush.msra.mxu0 %v186
    %661 = vmatpush.msra.mxu0 %v182
    %662 = vmatpush.msra.mxu0 %v178
    %663 = vmatpush.msra.mxu0 %v174
    %664 = vmatpush.msra.mxu0 %v170
    %665 = vmatpush.msra.mxu0 %v166
    %666 = vmatpush.msra.mxu0 %v162
    %667 = vmatpush.msra.mxu0 %v158
    %668 = vmatpush.msra.mxu0 %v154
    %669 = vmatpush.msra.mxu0 %v150
    %670 = vmatmul.f32.gmra.mxu0 0.0
    %v671 = vpop.f32.mrf.mxu0
    %v672 = vadd.f32 0.0, %v671
    %673 = vdwg.mxu0
    %674 = vmatpush.msra.mxu0 %v211
    %675 = vmatpush.msra.mxu0 %v207
    %676 = vmatpush.msra.mxu0 %v203
    %677 = vmatpush.msra.mxu0 %v199
    %678 = vmatpush.msra.mxu0 %v195
    %679 = vmatpush.msra.mxu0 %v191
    %680 = vmatpush.msra.mxu0 %v187
    %681 = vmatpush.msra.mxu0 %v183
    %682 = vmatpush.msra.mxu0 %v179
    %683 = vmatpush.msra.mxu0 %v175
    %684 = vmatpush.msra.mxu0 %v171
    %685 = vmatpush.msra.mxu0 %v167
    %686 = vmatpush.msra.mxu0 %v163
    %687 = vmatpush.msra.mxu0 %v159
    %688 = vmatpush.msra.mxu0 %v155
    %689 = vmatpush.msra.mxu0 %v151
    %690 = vmatmul.f32.gmra.mxu0 0.0
    %v691 = vpop.f32.mrf.mxu0
    %v692 = vadd.f32 0.0, %v691
    %693 = vdwg.mxu0
    %694 = vmatpush.msra.mxu0 %v212
    %695 = vmatpush.msra.mxu0 %v208
    %696 = vmatpush.msra.mxu0 %v204
    %697 = vmatpush.msra.mxu0 %v200
    %698 = vmatpush.msra.mxu0 %v196
    %699 = vmatpush.msra.mxu0 %v192
    %700 = vmatpush.msra.mxu0 %v188
    %701 = vmatpush.msra.mxu0 %v184
    %702 = vmatpush.msra.mxu0 %v180
    %703 = vmatpush.msra.mxu0 %v176
    %704 = vmatpush.msra.mxu0 %v172
    %705 = vmatpush.msra.mxu0 %v168
    %706 = vmatpush.msra.mxu0 %v164
    %707 = vmatpush.msra.mxu0 %v160
    %708 = vmatpush.msra.mxu0 %v156
    %709 = vmatpush.msra.mxu0 %v152
    %710 = vmatmul.f32.gmra.mxu0 0.0
    %v711 = vpop.f32.mrf.mxu0
    %v712 = vadd.f32 0.0, %v711
    %713 = vdwg.mxu0
    %v714 = vadd.f32 %v592, %v652
    %v715 = vadd.f32 %v593, %v672
    %v716 = vadd.f32 %v594, %v692
    %v717 = vadd.f32 %v595, %v712
    %v718 = vmul.f32 %v714, 0.5
    %v719 = vtanh.pop %v718
    %v720 = vmul.f32 %v719, 0.5
    %v721 = vadd.f32 %v720, 0.5
    %v722 = vmul.f32 %v715, 0.5
    %v723 = vtanh.pop %v722
    %v724 = vmul.f32 %v723, 0.5
    %v725 = vadd.f32 %v724, 0.5
    %v726 = vtanh.pop %v716
    %v727 = vmul.f32 %v717, 0.5
    %v728 = vtanh.pop %v727
    %v729 = vmul.f32 %v728, 0.5
    %v730 = vadd.f32 %v729, 0.5
    %v731 = vmul.f32 %v725, 0.0
    %v732 = vmul.f32 %v721, %v726
    %v733 = vadd.f32 %v731, %v732
    %v734 = vtanh.pop %v733
    %v735 = vmul.f32 %v730, %v734
    %736 = vmatpush.msra.mxu0 %v209
    %737 = vmatpush.msra.mxu0 %v205
    %738 = vmatpush.msra.mxu0 %v201
    %739 = vmatpush.msra.mxu0 %v197
    %740 = vmatpush.msra.mxu0 %v193
    %741 = vmatpush.msra.mxu0 %v189
    %742 = vmatpush.msra.mxu0 %v185
    %743 = vmatpush.msra.mxu0 %v181
    %744 = vmatpush.msra.mxu0 %v177
    %745 = vmatpush.msra.mxu0 %v173
    %746 = vmatpush.msra.mxu0 %v169
    %747 = vmatpush.msra.mxu0 %v165
    %748 = vmatpush.msra.mxu0 %v161
    %749 = vmatpush.msra.mxu0 %v157
    %750 = vmatpush.msra.mxu0 %v153
    %751 = vmatpush.msra.mxu0 %v149
    %752 = vmatmul.f32.gmra.mxu0 %v735
    %v753 = vpop.f32.mrf.mxu0
    %v754 = vadd.f32 0.0, %v753
    %755 = vdwg.mxu0
    %756 = vmatpush.msra.mxu0 %v210
    %757 = vmatpush.msra.mxu0 %v206
    %758 = vmatpush.msra.mxu0 %v202
    %759 = vmatpush.msra.mxu0 %v198
    %760 = vmatpush.msra.mxu0 %v194
    %761 = vmatpush.msra.mxu0 %v190
    %762 = vmatpush.msra.mxu0 %v186
    %763 = vmatpush.msra.mxu0 %v182
    %764 = vmatpush.msra.mxu0 %v178
    %765 = vmatpush.msra.mxu0 %v174
    %766 = vmatpush.msra.mxu0 %v170
    %767 = vmatpush.msra.mxu0 %v166
    %768 = vmatpush.msra.mxu0 %v162
    %769 = vmatpush.msra.mxu0 %v158
    %770 = vmatpush.msra.mxu0 %v154
    %771 = vmatpush.msra.mxu0 %v150
    %772 = vmatmul.f32.gmra.mxu0 %v735
    %v773 = vpop.f32.mrf.mxu0
    %v774 = vadd.f32 0.0, %v773
    %775 = vdwg.mxu0
    %776 = vmatpush.msra.mxu0 %v211
    %777 = vmatpush.msra.mxu0 %v207
    %778 = vmatpush.msra.mxu0 %v203
    %779 = vmatpush.msra.mxu0 %v199
    %780 = vmatpush.msra.mxu0 %v195
    %781 = vmatpush.msra.mxu0 %v191
    %782 = vmatpush.msra.mxu0 %v187
    %783 = vmatpush.msra.mxu0 %v183
    %784 = vmatpush.msra.mxu0 %v179
    %785 = vmatpush.msra.mxu0 %v175
    %786 = vmatpush.msra.mxu0 %v171
    %787 = vmatpush.msra.mxu0 %v167
    %788 = vmatpush.msra.mxu0 %v163
    %789 = vmatpush.msra.mxu0 %v159
    %790 = vmatpush.msra.mxu0 %v155
    %791 = vmatpush.msra.mxu0 %v151
    %792 = vmatmul.f32.gmra.mxu0 %v735
    %v793 = vpop.f32.mrf.mxu0
    %v794 = vadd.f32 0.0, %v793
    %795 = vdwg.mxu0
    %796 = vmatpush.msra.mxu0 %v212
    %797 = vmatpush.msra.mxu0 %v208
    %798 = vmatpush.msra.mxu0 %v204
    %799 = vmatpush.msra.mxu0 %v200
    %800 = vmatpush.msra.mxu0 %v196
    %801 = vmatpush.msra.mxu0 %v192
    %802 = vmatpush.msra.mxu0 %v188
    %803 = vmatpush.msra.mxu0 %v184
    %804 = vmatpush.msra.mxu0 %v180
    %805 = vmatpush.msra.mxu0 %v176
    %806 = vmatpush.msra.mxu0 %v172
    %807 = vmatpush.msra.mxu0 %v168
    %808 = vmatpush.msra.mxu0 %v164
    %809 = vmatpush.msra.mxu0 %v160
    %810 = vmatpush.msra.mxu0 %v156
    %811 = vmatpush.msra.mxu0 %v152
    %812 = vmatmul.f32.gmra.mxu0 %v735
    %v813 = vpop.f32.mrf.mxu0
    %v814 = vadd.f32 0.0, %v813
    %815 = vdwg.mxu0
    %v816 = vadd.f32 %v596, %v754
    %v817 = vadd.f32 %v597, %v774
    %v818 = vadd.f32 %v598, %v794
    %v819 = vadd.f32 %v599, %v814
    %v820 = vmul.f32 %v816, 0.5
    %v821 = vtanh.pop %v820
    %v822 = vmul.f32 %v821, 0.5
    %v823 = vadd.f32 %v822, 0.5
    %v824 = vmul.f32 %v817, 0.5
    %v825 = vtanh.pop %v824
    %v826 = vmul.f32 %v825, 0.5
    %v827 = vadd.f32 %v826, 0.5
    %v828 = vtanh.pop %v818
    %v829 = vmul.f32 %v819, 0.5
    %v830 = vtanh.pop %v829
    %v831 = vmul.f32 %v830, 0.5
    %v832 = vadd.f32 %v831, 0.5
    %v833 = vmul.f32 %v827, %v733
    %v834 = vmul.f32 %v823, %v828
    %v835 = vadd.f32 %v833, %v834
    %v836 = vtanh.pop %v835
    %v837 = vmul.f32 %v832, %v836
    %838 = vmatpush.msra.mxu0 %v209
    %839 = vmatpush.msra.mxu0 %v205
    %840 = vmatpush.msra.mxu0 %v201
    %841 = vmatpush.msra.mxu0 %v197
    %842 = vmatpush.msra.mxu0 %v193
    %843 = vmatpush.msra.mxu0 %v189
    %844 = vmatpush.msra.mxu0 %v185
    %845 = vmatpush.msra.mxu0 %v181
    %846 = vmatpush.msra.mxu0 %v177
    %847 = vmatpush.msra.mxu0 %v173
    %848 = vmatpush.msra.mxu0 %v169
    %849 = vmatpush.msra.mxu0 %v165
    %850 = vmatpush.msra.mxu0 %v161
    %851 = vmatpush.msra.mxu0 %v157
    %852 = vmatpush.msra.mxu0 %v153
    %853 = vmatpush.msra.mxu0 %v149
    %854 = vmatmul.f32.gmra.mxu0 %v837
    %v855 = vpop.f32.mrf.mxu0
    %v856 = vadd.f32 0.0, %v855
    %857 = vdwg.mxu0
    %858 = vmatpush.msra.mxu0 %v210
    %859 = vmatpush.msra.mxu0 %v206
    %860 = vmatpush.msra.mxu0 %v202
    %861 = vmatpush.msra.mxu0 %v198
    %862 = vmatpush.msra.mxu0 %v194
    %863 = vmatpush.msra.mxu0 %v190
    %864 = vmatpush.msra.mxu0 %v186
    %865 = vmatpush.msra.mxu0 %v182
    %866 = vmatpush.msra.mxu0 %v178
    %867 = vmatpush.msra.mxu0 %v174
    %868 = vmatpush.msra.mxu0 %v170
    %869 = vmatpush.msra.mxu0 %v166
    %870 = vmatpush.msra.mxu0 %v162
    %871 = vmatpush.msra.mxu0 %v158
    %872 = vmatpush.msra.mxu0 %v154
    %873 = vmatpush.msra.mxu0 %v150
    %874 = vmatmul.f32.gmra.mxu0 %v837
    %v875 = vpop.f32.mrf.mxu0
    %v876 = vadd.f32 0.0, %v875
    %877 = vdwg.mxu0
    %878 = vmatpush.msra.mxu0 %v211
    %879 = vmatpush.msra.mxu0 %v207
    %880 = vmatpush.msra.mxu0 %v203
    %881 = vmatpush.msra.mxu0 %v199
    %882 = vmatpush.msra.mxu0 %v195
    %883 = vmatpush.msra.mxu0 %v191
    %884 = vmatpush.msra.mxu0 %v187
    %885 = vmatpush.msra.mxu0 %v183
    %886 = vmatpush.msra.mxu0 %v179
    %887 = vmatpush.msra.mxu0 %v175
    %888 = vmatpush.msra.mxu0 %v171
    %889 = vmatpush.msra.mxu0 %v167
    %890 = vmatpush.msra.mxu0 %v163
    %891 = vmatpush.msra.mxu0 %v159
    %892 = vmatpush.msra.mxu0 %v155
    %893 = vmatpush.msra.mxu0 %v151
    %894 = vmatmul.f32.gmra.mxu0 %v837
    %v895 = vpop.f32.mrf.mxu0
    %v896 = vadd.f32 0.0, %v895
    %897 = vdwg.mxu0
    %898 = vmatpush.msra.mxu0 %v212
    %899 = vmatpush.msra.mxu0 %v208
    %900 = vmatpush.msra.mxu0 %v204
    %901 = vmatpush.msra.mxu0 %v200
    %902 = vmatpush.msra.mxu0 %v196
    %903 = vmatpush.msra.mxu0 %v192
    %904 = vmatpush.msra.mxu0 %v188
    %905 = vmatpush.msra.mxu0 %v184
    %906 = vmatpush.msra.mxu0 %v180
    %907 = vmatpush.msra.mxu0 %v176
    %908 = vmatpush.msra.mxu0 %v172
    %909 = vmatpush.msra.mxu0 %v168
    %910 = vmatpush.msra.mxu0 %v164
    %911 = vmatpush.msra.mxu0 %v160
    %912 = vmatpush.msra.mxu0 %v156
    %913 = vmatpush.msra.mxu0 %v152
    %914 = vmatmul.f32.gmra.mxu0 %v837
    %v915 = vpop.f32.mrf.mxu0
    %v916 = vadd.f32 0.0, %v915
    %917 = vdwg.mxu0
    %v918 = vadd.f32 %v600, %v856
    %v919 = vadd.f32 %v601, %v876
    %v920 = vadd.f32 %v602, %v896
    %v921 = vadd.f32 %v603, %v916
    %v922 = vmul.f32 %v918, 0.5
    %v923 = vtanh.pop %v922
    %v924 = vmul.f32 %v923, 0.5
    %v925 = vadd.f32 %v924, 0.5
    %v926 = vmul.f32 %v919, 0.5
    %v927 = vtanh.pop %v926
    %v928 = vmul.f32 %v927, 0.5
    %v929 = vadd.f32 %v928, 0.5
    %v930 = vtanh.pop %v920
    %v931 = vmul.f32 %v921, 0.5
    %v932 = vtanh.pop %v931
    %v933 = vmul.f32 %v932, 0.5
    %v934 = vadd.f32 %v933, 0.5
    %v935 = vmul.f32 %v929, %v835
    %v936 = vmul.f32 %v925, %v930
    %v937 = vadd.f32 %v935, %v936
    %v938 = vtanh.pop %v937
    %v939 = vmul.f32 %v934, %v938
    %940 = vmatpush.msra.mxu0 %v209
    %941 = vmatpush.msra.mxu0 %v205
    %942 = vmatpush.msra.mxu0 %v201
    %943 = vmatpush.msra.mxu0 %v197
    %944 = vmatpush.msra.mxu0 %v193
    %945 = vmatpush.msra.mxu0 %v189
    %946 = vmatpush.msra.mxu0 %v185
    %947 = vmatpush.msra.mxu0 %v181
    %948 = vmatpush.msra.mxu0 %v177
    %949 = vmatpush.msra.mxu0 %v173
    %950 = vmatpush.msra.mxu0 %v169
    %951 = vmatpush.msra.mxu0 %v165
    %952 = vmatpush.msra.mxu0 %v161
    %953 = vmatpush.msra.mxu0 %v157
    %954 = vmatpush.msra.mxu0 %v153
    %955 = vmatpush.msra.mxu0 %v149
    %956 = vmatmul.f32.gmra.mxu0 %v939
    %v957 = vpop.f32.mrf.mxu0
    %v958 = vadd.f32 0.0, %v957
    %959 = vdwg.mxu0
    %960 = vmatpush.msra.mxu0 %v210
    %961 = vmatpush.msra.mxu0 %v206
    %962 = vmatpush.msra.mxu0 %v202
    %963 = vmatpush.msra.mxu0 %v198
    %964 = vmatpush.msra.mxu0 %v194
    %965 = vmatpush.msra.mxu0 %v190
    %966 = vmatpush.msra.mxu0 %v186
    %967 = vmatpush.msra.mxu0 %v182
    %968 = vmatpush.msra.mxu0 %v178
    %969 = vmatpush.msra.mxu0 %v174
    %970 = vmatpush.msra.mxu0 %v170
    %971 = vmatpush.msra.mxu0 %v166
    %972 = vmatpush.msra.mxu0 %v162
    %973 = vmatpush.msra.mxu0 %v158
    %974 = vmatpush.msra.mxu0 %v154
    %975 = vmatpush.msra.mxu0 %v150
    %976 = vmatmul.f32.gmra.mxu0 %v939
    %v977 = vpop.f32.mrf.mxu0
    %v978 = vadd.f32 0.0, %v977
    %979 = vdwg.mxu0
    %980 = vmatpush.msra.mxu0 %v211
    %981 = vmatpush.msra.mxu0 %v207
    %982 = vmatpush.msra.mxu0 %v203
    %983 = vmatpush.msra.mxu0 %v199
    %984 = vmatpush.msra.mxu0 %v195
    %985 = vmatpush.msra.mxu0 %v191
    %986 = vmatpush.msra.mxu0 %v187
    %987 = vmatpush.msra.mxu0 %v183
    %988 = vmatpush.msra.mxu0 %v179
    %989 = vmatpush.msra.mxu0 %v175
    %990 = vmatpush.msra.mxu0 %v171
    %991 = vmatpush.msra.mxu0 %v167
    %992 = vmatpush.msra.mxu0 %v163
    %993 = vmatpush.msra.mxu0 %v159
    %994 = vmatpush.msra.mxu0 %v155
    %995 = vmatpush.msra.mxu0 %v151
    %996 = vmatmul.f32.gmra.mxu0 %v939
    %v997 = vpop.f32.mrf.mxu0
    %v998 = vadd.f32 0.0, %v997
    %999 = vdwg.mxu0
    %1000 = vmatpush.msra.mxu0 %v212
    %1001 = vmatpush.msra.mxu0 %v208
    %1002 = vmatpush.msra.mxu0 %v204
    %1003 = vmatpush.msra.mxu0 %v200
    %1004 = vmatpush.msra.mxu0 %v196
    %1005 = vmatpush.msra.mxu0 %v192
    %1006 = vmatpush.msra.mxu0 %v188
    %1007 = vmatpush.msra.mxu0 %v184
    %1008 = vmatpush.msra.mxu0 %v180
    %1009 = vmatpush.msra.mxu0 %v176
    %1010 = vmatpush.msra.mxu0 %v172
    %1011 = vmatpush.msra.mxu0 %v168
    %1012 = vmatpush.msra.mxu0 %v164
    %1013 = vmatpush.msra.mxu0 %v160
    %1014 = vmatpush.msra.mxu0 %v156
    %1015 = vmatpush.msra.mxu0 %v152
    %1016 = vmatmul.f32.gmra.mxu0 %v939
    %v1017 = vpop.f32.mrf.mxu0
    %v1018 = vadd.f32 0.0, %v1017
    %1019 = vdwg.mxu0
    %v1020 = vadd.f32 %v604, %v958
    %v1021 = vadd.f32 %v605, %v978
    %v1022 = vadd.f32 %v606, %v998
    %v1023 = vadd.f32 %v607, %v1018
    %v1024 = vmul.f32 %v1020, 0.5
    %v1025 = vtanh.pop %v1024
    %v1026 = vmul.f32 %v1025, 0.5
    %v1027 = vadd.f32 %v1026, 0.5
    %v1028 = vmul.f32 %v1021, 0.5
    %v1029 = vtanh.pop %v1028
    %v1030 = vmul.f32 %v1029, 0.5
    %v1031 = vadd.f32 %v1030, 0.5
    %v1032 = vtanh.pop %v1022
    %v1033 = vmul.f32 %v1023, 0.5
    %v1034 = vtanh.pop %v1033
    %v1035 = vmul.f32 %v1034, 0.5
    %v1036 = vadd.f32 %v1035, 0.5
    %v1037 = vmul.f32 %v1031, %v937
    %v1038 = vmul.f32 %v1027, %v1032
    %v1039 = vadd.f32 %v1037, %v1038
    %v1040 = vtanh.pop %v1039
    %v1041 = vmul.f32 %v1036, %v1040
    %1042 = vmatpush.msra.mxu0 %v209
    %1043 = vmatpush.msra.mxu0 %v205
    %1044 = vmatpush.msra.mxu0 %v201
    %1045 = vmatpush.msra.mxu0 %v197
    %1046 = vmatpush.msra.mxu0 %v193
    %1047 = vmatpush.msra.mxu0 %v189
    %1048 = vmatpush.msra.mxu0 %v185
    %1049 = vmatpush.msra.mxu0 %v181
    %1050 = vmatpush.msra.mxu0 %v177
    %1051 = vmatpush.msra.mxu0 %v173
    %1052 = vmatpush.msra.mxu0 %v169
    %1053 = vmatpush.msra.mxu0 %v165
    %1054 = vmatpush.msra.mxu0 %v161
    %1055 = vmatpush.msra.mxu0 %v157
    %1056 = vmatpush.msra.mxu0 %v153
    %1057 = vmatpush.msra.mxu0 %v149
    %1058 = vmatmul.f32.gmra.mxu0 %v1041
    %v1059 = vpop.f32.mrf.mxu0
    %v1060 = vadd.f32 0.0, %v1059
    %1061 = vdwg.mxu0
    %1062 = vmatpush.msra.mxu0 %v210
    %1063 = vmatpush.msra.mxu0 %v206
    %1064 = vmatpush.msra.mxu0 %v202
    %1065 = vmatpush.msra.mxu0 %v198
    %1066 = vmatpush.msra.mxu0 %v194
    %1067 = vmatpush.msra.mxu0 %v190
    %1068 = vmatpush.msra.mxu0 %v186
    %1069 = vmatpush.msra.mxu0 %v182
    %1070 = vmatpush.msra.mxu0 %v178
    %1071 = vmatpush.msra.mxu0 %v174
    %1072 = vmatpush.msra.mxu0 %v170
    %1073 = vmatpush.msra.mxu0 %v166
    %1074 = vmatpush.msra.mxu0 %v162
    %1075 = vmatpush.msra.mxu0 %v158
    %1076 = vmatpush.msra.mxu0 %v154
    %1077 = vmatpush.msra.mxu0 %v150
    %1078 = vmatmul.f32.gmra.mxu0 %v1041
    %v1079 = vpop.f32.mrf.mxu0
    %v1080 = vadd.f32 0.0, %v1079
    %1081 = vdwg.mxu0
    %1082 = vmatpush.msra.mxu0 %v211
    %1083 = vmatpush.msra.mxu0 %v207
    %1084 = vmatpush.msra.mxu0 %v203
    %1085 = vmatpush.msra.mxu0 %v199
    %1086 = vmatpush.msra.mxu0 %v195
    %1087 = vmatpush.msra.mxu0 %v191
    %1088 = vmatpush.msra.mxu0 %v187
    %1089 = vmatpush.msra.mxu0 %v183
    %1090 = vmatpush.msra.mxu0 %v179
    %1091 = vmatpush.msra.mxu0 %v175
    %1092 = vmatpush.msra.mxu0 %v171
    %1093 = vmatpush.msra.mxu0 %v167
    %1094 = vmatpush.msra.mxu0 %v163
    %1095 = vmatpush.msra.mxu0 %v159
    %1096 = vmatpush.msra.mxu0 %v155
    %1097 = vmatpush.msra.mxu0 %v151
    %1098 = vmatmul.f32.gmra.mxu0 %v1041
    %v1099 = vpop.f32.mrf.mxu0
    %v1100 = vadd.f32 0.0, %v1099
    %1101 = vdwg.mxu0
    %1102 = vmatpush.msra.mxu0 %v212
    %1103 = vmatpush.msra.mxu0 %v208
    %1104 = vmatpush.msra.mxu0 %v204
    %1105 = vmatpush.msra.mxu0 %v200
    %1106 = vmatpush.msra.mxu0 %v196
    %1107 = vmatpush.msra.mxu0 %v192
    %1108 = vmatpush.msra.mxu0 %v188
    %1109 = vmatpush.msra.mxu0 %v184
    %1110 = vmatpush.msra.mxu0 %v180
    %1111 = vmatpush.msra.mxu0 %v176
    %1112 = vmatpush.msra.mxu0 %v172
    %1113 = vmatpush.msra.mxu0 %v168
    %1114 = vmatpush.msra.mxu0 %v164
    %1115 = vmatpush.msra.mxu0 %v160
    %1116 = vmatpush.msra.mxu0 %v156
    %1117 = vmatpush.msra.mxu0 %v152
    %1118 = vmatmul.f32.gmra.mxu0 %v1041
    %v1119 = vpop.f32.mrf.mxu0
    %v1120 = vadd.f32 0.0, %v1119
    %1121 = vdwg.mxu0
    %v1122 = vadd.f32 %v608, %v1060
    %v1123 = vadd.f32 %v609, %v1080
    %v1124 = vadd.f32 %v610, %v1100
    %v1125 = vadd.f32 %v611, %v1120
    %v1126 = vmul.f32 %v1122, 0.5
    %v1127 = vtanh.pop %v1126
    %v1128 = vmul.f32 %v1127, 0.5
    %v1129 = vadd.f32 %v1128, 0.5
    %v1130 = vmul.f32 %v1123, 0.5
    %v1131 = vtanh.pop %v1130
    %v1132 = vmul.f32 %v1131, 0.5
    %v1133 = vadd.f32 %v1132, 0.5
    %v1134 = vtanh.pop %v1124
    %v1135 = vmul.f32 %v1125, 0.5
    %v1136 = vtanh.pop %v1135
    %v1137 = vmul.f32 %v1136, 0.5
    %v1138 = vadd.f32 %v1137, 0.5
    %v1139 = vmul.f32 %v1133, %v1039
    %v1140 = vmul.f32 %v1129, %v1134
    %v1141 = vadd.f32 %v1139, %v1140
    %v1142 = vtanh.pop %v1141
    %v1143 = vmul.f32 %v1138, %v1142
    %1144 = vmatpush.msra.mxu0 %v209
    %1145 = vmatpush.msra.mxu0 %v205
    %1146 = vmatpush.msra.mxu0 %v201
    %1147 = vmatpush.msra.mxu0 %v197
    %1148 = vmatpush.msra.mxu0 %v193
    %1149 = vmatpush.msra.mxu0 %v189
    %1150 = vmatpush.msra.mxu0 %v185
    %1151 = vmatpush.msra.mxu0 %v181
    %1152 = vmatpush.msra.mxu0 %v177
    %1153 = vmatpush.msra.mxu0 %v173
    %1154 = vmatpush.msra.mxu0 %v169
    %1155 = vmatpush.msra.mxu0 %v165
    %1156 = vmatpush.msra.mxu0 %v161
    %1157 = vmatpush.msra.mxu0 %v157
    %1158 = vmatpush.msra.mxu0 %v153
    %1159 = vmatpush.msra.mxu0 %v149
    %1160 = vmatmul.f32.gmra.mxu0 %v1143
    %v1161 = vpop.f32.mrf.mxu0
    %v1162 = vadd.f32 0.0, %v1161
    %1163 = vdwg.mxu0
    %1164 = vmatpush.msra.mxu0 %v210
    %1165 = vmatpush.msra.mxu0 %v206
    %1166 = vmatpush.msra.mxu0 %v202
    %1167 = vmatpush.msra.mxu0 %v198
    %1168 = vmatpush.msra.mxu0 %v194
    %1169 = vmatpush.msra.mxu0 %v190
    %1170 = vmatpush.msra.mxu0 %v186
    %1171 = vmatpush.msra.mxu0 %v182
    %1172 = vmatpush.msra.mxu0 %v178
    %1173 = vmatpush.msra.mxu0 %v174
    %1174 = vmatpush.msra.mxu0 %v170
    %1175 = vmatpush.msra.mxu0 %v166
    %1176 = vmatpush.msra.mxu0 %v162
    %1177 = vmatpush.msra.mxu0 %v158
    %1178 = vmatpush.msra.mxu0 %v154
    %1179 = vmatpush.msra.mxu0 %v150
    %1180 = vmatmul.f32.gmra.mxu0 %v1143
    %v1181 = vpop.f32.mrf.mxu0
    %v1182 = vadd.f32 0.0, %v1181
    %1183 = vdwg.mxu0
    %1184 = vmatpush.msra.mxu0 %v211
    %1185 = vmatpush.msra.mxu0 %v207
    %1186 = vmatpush.msra.mxu0 %v203
    %1187 = vmatpush.msra.mxu0 %v199
    %1188 = vmatpush.msra.mxu0 %v195
    %1189 = vmatpush.msra.mxu0 %v191
    %1190 = vmatpush.msra.mxu0 %v187
    %1191 = vmatpush.msra.mxu0 %v183
    %1192 = vmatpush.msra.mxu0 %v179
    %1193 = vmatpush.msra.mxu0 %v175
    %1194 = vmatpush.msra.mxu0 %v171
    %1195 = vmatpush.msra.mxu0 %v167
    %1196 = vmatpush.msra.mxu0 %v163
    %1197 = vmatpush.msra.mxu0 %v159
    %1198 = vmatpush.msra.mxu0 %v155
    %1199 = vmatpush.msra.mxu0 %v151
    %1200 = vmatmul.f32.gmra.mxu0 %v1143
    %v1201 = vpop.f32.mrf.mxu0
    %v1202 = vadd.f32 0.0, %v1201
    %1203 = vdwg.mxu0
    %1204 = vmatpush.msra.mxu0 %v212
    %1205 = vmatpush.msra.mxu0 %v208
    %1206 = vmatpush.msra.mxu0 %v204
    %1207 = vmatpush.msra.mxu0 %v200
    %1208 = vmatpush.msra.mxu0 %v196
    %1209 = vmatpush.msra.mxu0 %v192
    %1210 = vmatpush.msra.mxu0 %v188
    %1211 = vmatpush.msra.mxu0 %v184
    %1212 = vmatpush.msra.mxu0 %v180
    %1213 = vmatpush.msra.mxu0 %v176
    %1214 = vmatpush.msra.mxu0 %v172
    %1215 = vmatpush.msra.mxu0 %v168
    %1216 = vmatpush.msra.mxu0 %v164
    %1217 = vmatpush.msra.mxu0 %v160
    %1218 = vmatpush.msra.mxu0 %v156
    %1219 = vmatpush.msra.mxu0 %v152
    %1220 = vmatmul.f32.gmra.mxu0 %v1143
    %v1221 = vpop.f32.mrf.mxu0
    %v1222 = vadd.f32 0.0, %v1221
    %1223 = vdwg.mxu0
    %v1224 = vadd.f32 %v612, %v1162
    %v1225 = vadd.f32 %v613, %v1182
    %v1226 = vadd.f32 %v614, %v1202
    %v1227 = vadd.f32 %v615, %v1222
    %v1228 = vmul.f32 %v1224, 0.5
    %v1229 = vtanh.pop %v1228
    %v1230 = vmul.f32 %v1229, 0.5
    %v1231 = vadd.f32 %v1230, 0.5
    %v1232 = vmul.f32 %v1225, 0.5
    %v1233 = vtanh.pop %v1232
    %v1234 = vmul.f32 %v1233, 0.5
    %v1235 = vadd.f32 %v1234, 0.5
    %v1236 = vtanh.pop %v1226
    %v1237 = vmul.f32 %v1227, 0.5
    %v1238 = vtanh.pop %v1237
    %v1239 = vmul.f32 %v1238, 0.5
    %v1240 = vadd.f32 %v1239, 0.5
    %v1241 = vmul.f32 %v1235, %v1141
    %v1242 = vmul.f32 %v1231, %v1236
    %v1243 = vadd.f32 %v1241, %v1242
    %v1244 = vtanh.pop %v1243
    %v1245 = vmul.f32 %v1240, %v1244
    %1246 = vmatpush.msra.mxu0 %v209
    %1247 = vmatpush.msra.mxu0 %v205
    %1248 = vmatpush.msra.mxu0 %v201
    %1249 = vmatpush.msra.mxu0 %v197
    %1250 = vmatpush.msra.mxu0 %v193
    %1251 = vmatpush.msra.mxu0 %v189
    %1252 = vmatpush.msra.mxu0 %v185
    %1253 = vmatpush.msra.mxu0 %v181
    %1254 = vmatpush.msra.mxu0 %v177
    %1255 = vmatpush.msra.mxu0 %v173
    %1256 = vmatpush.msra.mxu0 %v169
    %1257 = vmatpush.msra.mxu0 %v165
    %1258 = vmatpush.msra.mxu0 %v161
    %1259 = vmatpush.msra.mxu0 %v157
    %1260 = vmatpush.msra.mxu0 %v153
    %1261 = vmatpush.msra.mxu0 %v149
    %1262 = vmatmul.f32.gmra.mxu0 %v1245
    %v1263 = vpop.f32.mrf.mxu0
    %v1264 = vadd.f32 0.0, %v1263
    %1265 = vdwg.mxu0
    %1266 = vmatpush.msra.mxu0 %v210
    %1267 = vmatpush.msra.mxu0 %v206
    %1268 = vmatpush.msra.mxu0 %v202
    %1269 = vmatpush.msra.mxu0 %v198
    %1270 = vmatpush.msra.mxu0 %v194
    %1271 = vmatpush.msra.mxu0 %v190
    %1272 = vmatpush.msra.mxu0 %v186
    %1273 = vmatpush.msra.mxu0 %v182
    %1274 = vmatpush.msra.mxu0 %v178
    %1275 = vmatpush.msra.mxu0 %v174
    %1276 = vmatpush.msra.mxu0 %v170
    %1277 = vmatpush.msra.mxu0 %v166
    %1278 = vmatpush.msra.mxu0 %v162
    %1279 = vmatpush.msra.mxu0 %v158
    %1280 = vmatpush.msra.mxu0 %v154
    %1281 = vmatpush.msra.mxu0 %v150
    %1282 = vmatmul.f32.gmra.mxu0 %v1245
    %v1283 = vpop.f32.mrf.mxu0
    %v1284 = vadd.f32 0.0, %v1283
    %1285 = vdwg.mxu0
    %1286 = vmatpush.msra.mxu0 %v211
    %1287 = vmatpush.msra.mxu0 %v207
    %1288 = vmatpush.msra.mxu0 %v203
    %1289 = vmatpush.msra.mxu0 %v199
    %1290 = vmatpush.msra.mxu0 %v195
    %1291 = vmatpush.msra.mxu0 %v191
    %1292 = vmatpush.msra.mxu0 %v187
    %1293 = vmatpush.msra.mxu0 %v183
    %1294 = vmatpush.msra.mxu0 %v179
    %1295 = vmatpush.msra.mxu0 %v175
    %1296 = vmatpush.msra.mxu0 %v171
    %1297 = vmatpush.msra.mxu0 %v167
    %1298 = vmatpush.msra.mxu0 %v163
    %1299 = vmatpush.msra.mxu0 %v159
    %1300 = vmatpush.msra.mxu0 %v155
    %1301 = vmatpush.msra.mxu0 %v151
    %1302 = vmatmul.f32.gmra.mxu0 %v1245
    %v1303 = vpop.f32.mrf.mxu0
    %v1304 = vadd.f32 0.0, %v1303
    %1305 = vdwg.mxu0
    %1306 = vmatpush.msra.mxu0 %v212
    %1307 = vmatpush.msra.mxu0 %v208
    %1308 = vmatpush.msra.mxu0 %v204
    %1309 = vmatpush.msra.mxu0 %v200
    %1310 = vmatpush.msra.mxu0 %v196
    %1311 = vmatpush.msra.mxu0 %v192
    %1312 = vmatpush.msra.mxu0 %v188
    %1313 = vmatpush.msra.mxu0 %v184
    %1314 = vmatpush.msra.mxu0 %v180
    %1315 = vmatpush.msra.mxu0 %v176
    %1316 = vmatpush.msra.mxu0 %v172
    %1317 = vmatpush.msra.mxu0 %v168
    %1318 = vmatpush.msra.mxu0 %v164
    %1319 = vmatpush.msra.mxu0 %v160
    %1320 = vmatpush.msra.mxu0 %v156
    %1321 = vmatpush.msra.mxu0 %v152
    %1322 = vmatmul.f32.gmra.mxu0 %v1245
    %v1323 = vpop.f32.mrf.mxu0
    %v1324 = vadd.f32 0.0, %v1323
    %1325 = vdwg.mxu0
    %v1326 = vadd.f32 %v616, %v1264
    %v1327 = vadd.f32 %v617, %v1284
    %v1328 = vadd.f32 %v618, %v1304
    %v1329 = vadd.f32 %v619, %v1324
    %v1330 = vmul.f32 %v1326, 0.5
    %v1331 = vtanh.pop %v1330
    %v1332 = vmul.f32 %v1331, 0.5
    %v1333 = vadd.f32 %v1332, 0.5
    %v1334 = vmul.f32 %v1327, 0.5
    %v1335 = vtanh.pop %v1334
    %v1336 = vmul.f32 %v1335, 0.5
    %v1337 = vadd.f32 %v1336, 0.5
    %v1338 = vtanh.pop %v1328
    %v1339 = vmul.f32 %v1329, 0.5
    %v1340 = vtanh.pop %v1339
    %v1341 = vmul.f32 %v1340, 0.5
    %v1342 = vadd.f32 %v1341, 0.5
    %v1343 = vmul.f32 %v1337, %v1243
    %v1344 = vmul.f32 %v1333, %v1338
    %v1345 = vadd.f32 %v1343, %v1344
    %v1346 = vtanh.pop %v1345
    %v1347 = vmul.f32 %v1342, %v1346
    %1348 = vmatpush.msra.mxu0 %v209
    %1349 = vmatpush.msra.mxu0 %v205
    %1350 = vmatpush.msra.mxu0 %v201
    %1351 = vmatpush.msra.mxu0 %v197
    %1352 = vmatpush.msra.mxu0 %v193
    %1353 = vmatpush.msra.mxu0 %v189
    %1354 = vmatpush.msra.mxu0 %v185
    %1355 = vmatpush.msra.mxu0 %v181
    %1356 = vmatpush.msra.mxu0 %v177
    %1357 = vmatpush.msra.mxu0 %v173
    %1358 = vmatpush.msra.mxu0 %v169
    %1359 = vmatpush.msra.mxu0 %v165
    %1360 = vmatpush.msra.mxu0 %v161
    %1361 = vmatpush.msra.mxu0 %v157
    %1362 = vmatpush.msra.mxu0 %v153
    %1363 = vmatpush.msra.mxu0 %v149
    %1364 = vmatmul.f32.gmra.mxu0 %v1347
    %v1365 = vpop.f32.mrf.mxu0
    %v1366 = vadd.f32 0.0, %v1365
    %1367 = vdwg.mxu0
    %1368 = vmatpush.msra.mxu0 %v210
    %1369 = vmatpush.msra.mxu0 %v206
    %1370 = vmatpush.msra.mxu0 %v202
    %1371 = vmatpush.msra.mxu0 %v198
    %1372 = vmatpush.msra.mxu0 %v194
    %1373 = vmatpush.msra.mxu0 %v190
    %1374 = vmatpush.msra.mxu0 %v186
    %1375 = vmatpush.msra.mxu0 %v182
    %1376 = vmatpush.msra.mxu0 %v178
    %1377 = vmatpush.msra.mxu0 %v174
    %1378 = vmatpush.msra.mxu0 %v170
    %1379 = vmatpush.msra.mxu0 %v166
    %1380 = vmatpush.msra.mxu0 %v162
    %1381 = vmatpush.msra.mxu0 %v158
    %1382 = vmatpush.msra.mxu0 %v154
    %1383 = vmatpush.msra.mxu0 %v150
    %1384 = vmatmul.f32.gmra.mxu0 %v1347
    %v1385 = vpop.f32.mrf.mxu0
    %v1386 = vadd.f32 0.0, %v1385
    %1387 = vdwg.mxu0
    %1388 = vmatpush.msra.mxu0 %v211
    %1389 = vmatpush.msra.mxu0 %v207
    %1390 = vmatpush.msra.mxu0 %v203
    %1391 = vmatpush.msra.mxu0 %v199
    %1392 = vmatpush.msra.mxu0 %v195
    %1393 = vmatpush.msra.mxu0 %v191
    %1394 = vmatpush.msra.mxu0 %v187
    %1395 = vmatpush.msra.mxu0 %v183
    %1396 = vmatpush.msra.mxu0 %v179
    %1397 = vmatpush.msra.mxu0 %v175
    %1398 = vmatpush.msra.mxu0 %v171
    %1399 = vmatpush.msra.mxu0 %v167
    %1400 = vmatpush.msra.mxu0 %v163
    %1401 = vmatpush.msra.mxu0 %v159
    %1402 = vmatpush.msra.mxu0 %v155
    %1403 = vmatpush.msra.mxu0 %v151
    %1404 = vmatmul.f32.gmra.mxu0 %v1347
    %v1405 = vpop.f32.mrf.mxu0
    %v1406 = vadd.f32 0.0, %v1405
    %1407 = vdwg.mxu0
    %1408 = vmatpush.msra.mxu0 %v212
    %1409 = vmatpush.msra.mxu0 %v208
    %1410 = vmatpush.msra.mxu0 %v204
    %1411 = vmatpush.msra.mxu0 %v200
    %1412 = vmatpush.msra.mxu0 %v196
    %1413 = vmatpush.msra.mxu0 %v192
    %1414 = vmatpush.msra.mxu0 %v188
    %1415 = vmatpush.msra.mxu0 %v184
    %1416 = vmatpush.msra.mxu0 %v180
    %1417 = vmatpush.msra.mxu0 %v176
    %1418 = vmatpush.msra.mxu0 %v172
    %1419 = vmatpush.msra.mxu0 %v168
    %1420 = vmatpush.msra.mxu0 %v164
    %1421 = vmatpush.msra.mxu0 %v160
    %1422 = vmatpush.msra.mxu0 %v156
    %1423 = vmatpush.msra.mxu0 %v152
    %1424 = vmatmul.f32.gmra.mxu0 %v1347
    %v1425 = vpop.f32.mrf.mxu0
    %v1426 = vadd.f32 0.0, %v1425
    %1427 = vdwg.mxu0
    %v1428 = vadd.f32 %v620, %v1366
    %v1429 = vadd.f32 %v621, %v1386
    %v1430 = vadd.f32 %v622, %v1406
    %v1431 = vadd.f32 %v623, %v1426
    %v1432 = vmul.f32 %v1428, 0.5
    %v1433 = vtanh.pop %v1432
    %v1434 = vmul.f32 %v1433, 0.5
    %v1435 = vadd.f32 %v1434, 0.5
    %v1436 = vmul.f32 %v1429, 0.5
    %v1437 = vtanh.pop %v1436
    %v1438 = vmul.f32 %v1437, 0.5
    %v1439 = vadd.f32 %v1438, 0.5
    %v1440 = vtanh.pop %v1430
    %v1441 = vmul.f32 %v1431, 0.5
    %v1442 = vtanh.pop %v1441
    %v1443 = vmul.f32 %v1442, 0.5
    %v1444 = vadd.f32 %v1443, 0.5
    %v1445 = vmul.f32 %v1439, %v1345
    %v1446 = vmul.f32 %v1435, %v1440
    %v1447 = vadd.f32 %v1445, %v1446
    %v1448 = vtanh.pop %v1447
    %v1449 = vmul.f32 %v1444, %v1448
    %v1450 = vmul.f32 %v735, %v628
    %v1451 = vmul.f32 %v1449, %v633
    %v1452 = vadd.f32 %v1450, %v1451
    %v1453 = vmul.f32 %v837, %v628
    %v1454 = vmul.f32 %v1347, %v633
    %v1455 = vadd.f32 %v1453, %v1454
    %v1456 = vmul.f32 %v939, %v628
    %v1457 = vmul.f32 %v1245, %v633
    %v1458 = vadd.f32 %v1456, %v1457
    %v1459 = vmul.f32 %v1041, %v628
    %v1460 = vmul.f32 %v1143, %v633
    %v1461 = vadd.f32 %v1459, %v1460
    %v1462 = vmul.f32 %v1143, %v628
    %v1463 = vmul.f32 %v1041, %v633
    %v1464 = vadd.f32 %v1462, %v1463
    %v1465 = vmul.f32 %v1245, %v628
    %v1466 = vmul.f32 %v939, %v633
    %v1467 = vadd.f32 %v1465, %v1466
    %v1468 = vmul.f32 %v1347, %v628
    %v1469 = vmul.f32 %v837, %v633
    %v1470 = vadd.f32 %v1468, %v1469
    %v1471 = vmul.f32 %v1449, %v628
    %v1472 = vmul.f32 %v735, %v633
    %v1473 = vadd.f32 %v1471, %v1472
    %1474 = vadd.xlane.f32.xlu0 %v1452
    %v1475 = vpop.xlane.xlu0 %1474
    %1476 = vadd.xlane.f32.xlu0 %v1455
    %v1477 = vpop.xlane.xlu0 %1476
    %1478 = vadd.xlane.f32.xlu0 %v1458
    %v1479 = vpop.xlane.xlu0 %1478
    %1480 = vadd.xlane.f32.xlu0 %v1461
    %v1481 = vpop.xlane.xlu0 %1480
    %1482 = vadd.xlane.f32.xlu0 %v1464
    %v1483 = vpop.xlane.xlu0 %1482
    %1484 = vadd.xlane.f32.xlu0 %v1467
    %v1485 = vpop.xlane.xlu0 %1484
    %1486 = vadd.xlane.f32.xlu0 %v1470
    %v1487 = vpop.xlane.xlu0 %1486
    %1488 = vadd.xlane.f32.xlu0 %v1473
    %v1489 = vpop.xlane.xlu0 %1488
    %v1490 = vmul.f32 %v1475, 0.015625
    %v1491 = vmul.f32 %v1477, 0.015625
    %v1492 = vmul.f32 %v1479, 0.015625
    %v1493 = vmul.f32 %v1481, 0.015625
    %v1494 = vmul.f32 %v1483, 0.015625
    %v1495 = vmul.f32 %v1485, 0.015625
    %v1496 = vmul.f32 %v1487, 0.015625
    %v1497 = vmul.f32 %v1489, 0.015625
    %v1498 = vmul.f32 %v1452, %v1452
    %v1499 = vmul.f32 %v1455, %v1455
    %v1500 = vmul.f32 %v1458, %v1458
    %v1501 = vmul.f32 %v1461, %v1461
    %v1502 = vmul.f32 %v1464, %v1464
    %v1503 = vmul.f32 %v1467, %v1467
    %v1504 = vmul.f32 %v1470, %v1470
    %v1505 = vmul.f32 %v1473, %v1473
    %1506 = vadd.xlane.f32.xlu0 %v1498
    %v1507 = vpop.xlane.xlu0 %1506
    %1508 = vadd.xlane.f32.xlu0 %v1499
    %v1509 = vpop.xlane.xlu0 %1508
    %1510 = vadd.xlane.f32.xlu0 %v1500
    %v1511 = vpop.xlane.xlu0 %1510
    %1512 = vadd.xlane.f32.xlu0 %v1501
    %v1513 = vpop.xlane.xlu0 %1512
    %1514 = vadd.xlane.f32.xlu0 %v1502
    %v1515 = vpop.xlane.xlu0 %1514
    %1516 = vadd.xlane.f32.xlu0 %v1503
    %v1517 = vpop.xlane.xlu0 %1516
    %1518 = vadd.xlane.f32.xlu0 %v1504
    %v1519 = vpop.xlane.xlu0 %1518
    %1520 = vadd.xlane.f32.xlu0 %v1505
    %v1521 = vpop.xlane.xlu0 %1520
    %v1522 = vmul.f32 %v1507, 0.015625
    %v1523 = vmul.f32 %v1509, 0.015625
    %v1524 = vmul.f32 %v1511, 0.015625
    %v1525 = vmul.f32 %v1513, 0.015625
    %v1526 = vmul.f32 %v1515, 0.015625
    %v1527 = vmul.f32 %v1517, 0.015625
    %v1528 = vmul.f32 %v1519, 0.015625
    %v1529 = vmul.f32 %v1521, 0.015625
    %v1530 = vmul.f32 %v1490, %v1490
    %v1531 = vmul.f32 %v1491, %v1491
    %v1532 = vmul.f32 %v1492, %v1492
    %v1533 = vmul.f32 %v1493, %v1493
    %v1534 = vmul.f32 %v1494, %v1494
    %v1535 = vmul.f32 %v1495, %v1495
    %v1536 = vmul.f32 %v1496, %v1496
    %v1537 = vmul.f32 %v1497, %v1497
    %v1538 = vsub.f32 %v1522, %v1530
    %v1539 = vsub.f32 %v1523, %v1531
    %v1540 = vsub.f32 %v1524, %v1532
    %v1541 = vsub.f32 %v1525, %v1533
    %v1542 = vsub.f32 %v1526, %v1534
    %v1543 = vsub.f32 %v1527, %v1535
    %v1544 = vsub.f32 %v1528, %v1536
    %v1545 = vsub.f32 %v1529, %v1537
    %v1546 = vadd.f32 %v1538, 1e-05
    %v1547 = vadd.f32 %v1539, 1e-05
    %v1548 = vadd.f32 %v1540, 1e-05
    %v1549 = vadd.f32 %v1541, 1e-05
    %v1550 = vadd.f32 %v1542, 1e-05
    %v1551 = vadd.f32 %v1543, 1e-05
    %v1552 = vadd.f32 %v1544, 1e-05
    %v1553 = vadd.f32 %v1545, 1e-05
    %v1554 = vrsqrt.pop %v1546
    %v1555 = vmul.f32 %v1554, %v1546
    %v1556 = vmul.f32 %v1555, %v1554
    %v1557 = vmul.f32 0.5, %v1556
    %v1558 = vsub.f32 1.5, %v1557
    %v1559 = vmul.f32 %v1554, %v1558
    %vm1560 = vweird.f32 %v1546
    %vm1561 = vweird.f32 %v1554
    %vm1562 = vmor %vm1560, %vm1561
    %v1563 = vsel %vm1562, %v1554, %v1559
    %v1564 = vrsqrt.pop %v1547
    %v1565 = vmul.f32 %v1564, %v1547
    %v1566 = vmul.f32 %v1565, %v1564
    %v1567 = vmul.f32 0.5, %v1566
    %v1568 = vsub.f32 1.5, %v1567
    %v1569 = vmul.f32 %v1564, %v1568
    %vm1570 = vweird.f32 %v1547
    %vm1571 = vweird.f32 %v1564
    %vm1572 = vmor %vm1570, %vm1571
    %v1573 = vsel %vm1572, %v1564, %v1569
    %v1574 = vrsqrt.pop %v1548
    %v1575 = vmul.f32 %v1574, %v1548
    %v1576 = vmul.f32 %v1575, %v1574
    %v1577 = vmul.f32 0.5, %v1576
    %v1578 = vsub.f32 1.5, %v1577
    %v1579 = vmul.f32 %v1574, %v1578
    %vm1580 = vweird.f32 %v1548
    %vm1581 = vweird.f32 %v1574
    %vm1582 = vmor %vm1580, %vm1581
    %v1583 = vsel %vm1582, %v1574, %v1579
    %v1584 = vrsqrt.pop %v1549
    %v1585 = vmul.f32 %v1584, %v1549
    %v1586 = vmul.f32 %v1585, %v1584
    %v1587 = vmul.f32 0.5, %v1586
    %v1588 = vsub.f32 1.5, %v1587
    %v1589 = vmul.f32 %v1584, %v1588
    %vm1590 = vweird.f32 %v1549
    %vm1591 = vweird.f32 %v1584
    %vm1592 = vmor %vm1590, %vm1591
    %v1593 = vsel %vm1592, %v1584, %v1589
    %v1594 = vrsqrt.pop %v1550
    %v1595 = vmul.f32 %v1594, %v1550
    %v1596 = vmul.f32 %v1595, %v1594
    %v1597 = vmul.f32 0.5, %v1596
    %v1598 = vsub.f32 1.5, %v1597
    %v1599 = vmul.f32 %v1594, %v1598
    %vm1600 = vweird.f32 %v1550
    %vm1601 = vweird.f32 %v1594
    %vm1602 = vmor %vm1600, %vm1601
    %v1603 = vsel %vm1602, %v1594, %v1599
    %v1604 = vrsqrt.pop %v1551
    %v1605 = vmul.f32 %v1604, %v1551
    %v1606 = vmul.f32 %v1605, %v1604
    %v1607 = vmul.f32 0.5, %v1606
    %v1608 = vsub.f32 1.5, %v1607
    %v1609 = vmul.f32 %v1604, %v1608
    %vm1610 = vweird.f32 %v1551
    %vm1611 = vweird.f32 %v1604
    %vm1612 = vmor %vm1610, %vm1611
    %v1613 = vsel %vm1612, %v1604, %v1609
    %v1614 = vrsqrt.pop %v1552
    %v1615 = vmul.f32 %v1614, %v1552
    %v1616 = vmul.f32 %v1615, %v1614
    %v1617 = vmul.f32 0.5, %v1616
    %v1618 = vsub.f32 1.5, %v1617
    %v1619 = vmul.f32 %v1614, %v1618
    %vm1620 = vweird.f32 %v1552
    %vm1621 = vweird.f32 %v1614
    %vm1622 = vmor %vm1620, %vm1621
    %v1623 = vsel %vm1622, %v1614, %v1619
    %v1624 = vrsqrt.pop %v1553
    %v1625 = vmul.f32 %v1624, %v1553
    %v1626 = vmul.f32 %v1625, %v1624
    %v1627 = vmul.f32 0.5, %v1626
    %v1628 = vsub.f32 1.5, %v1627
    %v1629 = vmul.f32 %v1624, %v1628
    %vm1630 = vweird.f32 %v1553
    %vm1631 = vweird.f32 %v1624
    %vm1632 = vmor %vm1630, %vm1631
    %v1633 = vsel %vm1632, %v1624, %v1629
    %1634 = vmatpush.msra.mxu0 %v228
    %1635 = vmatpush.msra.mxu0 %v227
    %1636 = vmatpush.msra.mxu0 %v226
    %1637 = vmatpush.msra.mxu0 %v225
    %1638 = vmatpush.msra.mxu0 %v224
    %1639 = vmatpush.msra.mxu0 %v223
    %1640 = vmatpush.msra.mxu0 %v222
    %1641 = vmatpush.msra.mxu0 %v221
    %1642 = vmatpush.msra.mxu0 %v220
    %1643 = vmatpush.msra.mxu0 %v219
    %1644 = vmatpush.msra.mxu0 %v218
    %1645 = vmatpush.msra.mxu0 %v217
    %1646 = vmatpush.msra.mxu0 %v216
    %1647 = vmatpush.msra.mxu0 %v215
    %1648 = vmatpush.msra.mxu0 %v214
    %1649 = vmatpush.msra.mxu0 %v213
    %1650 = vmatmul.f32.gmra.mxu0 %v1452
    %v1651 = vpop.f32.mrf.mxu0
    %v1652 = vadd.f32 0.0, %v1651
    %1653 = vmatmul.f32.gmra.mxu0 %v1455
    %v1654 = vpop.f32.mrf.mxu0
    %v1655 = vadd.f32 0.0, %v1654
    %1656 = vmatmul.f32.gmra.mxu0 %v1458
    %v1657 = vpop.f32.mrf.mxu0
    %v1658 = vadd.f32 0.0, %v1657
    %1659 = vmatmul.f32.gmra.mxu0 %v1461
    %v1660 = vpop.f32.mrf.mxu0
    %v1661 = vadd.f32 0.0, %v1660
    %1662 = vmatmul.f32.gmra.mxu0 %v1464
    %v1663 = vpop.f32.mrf.mxu0
    %v1664 = vadd.f32 0.0, %v1663
    %1665 = vmatmul.f32.gmra.mxu0 %v1467
    %v1666 = vpop.f32.mrf.mxu0
    %v1667 = vadd.f32 0.0, %v1666
    %1668 = vmatmul.f32.gmra.mxu0 %v1470
    %v1669 = vpop.f32.mrf.mxu0
    %v1670 = vadd.f32 0.0, %v1669
    %1671 = vmatmul.f32.gmra.mxu0 %v1473
    %v1672 = vpop.f32.mrf.mxu0
    %v1673 = vadd.f32 0.0, %v1672
    %1674 = vdwg.mxu0
    %v1675 = vperm.slane %v229, 0
    %v1676 = vperm.slane %v229, 1
    %v1677 = vmul.f32 %v1490, %v1675
    %v1678 = vmul.f32 %v1491, %v1675
    %v1679 = vmul.f32 %v1492, %v1675
    %v1680 = vmul.f32 %v1493, %v1675
    %v1681 = vmul.f32 %v1494, %v1675
    %v1682 = vmul.f32 %v1495, %v1675
    %v1683 = vmul.f32 %v1496, %v1675
    %v1684 = vmul.f32 %v1497, %v1675
    %v1685 = vsub.f32 %v1652, %v1677
    %v1686 = vsub.f32 %v1655, %v1678
    %v1687 = vsub.f32 %v1658, %v1679
    %v1688 = vsub.f32 %v1661, %v1680
    %v1689 = vsub.f32 %v1664, %v1681
    %v1690 = vsub.f32 %v1667, %v1682
    %v1691 = vsub.f32 %v1670, %v1683
    %v1692 = vsub.f32 %v1673, %v1684
    %v1693 = vmul.f32 %v1563, %v1685
    %v1694 = vmul.f32 %v1573, %v1686
    %v1695 = vmul.f32 %v1583, %v1687
    %v1696 = vmul.f32 %v1593, %v1688
    %v1697 = vmul.f32 %v1603, %v1689
    %v1698 = vmul.f32 %v1613, %v1690
    %v1699 = vmul.f32 %v1623, %v1691
    %v1700 = vmul.f32 %v1633, %v1692
    %v1701 = vadd.f32 %v1693, %v1676
    %v1702 = vadd.f32 %v1694, %v1676
    %v1703 = vadd.f32 %v1695, %v1676
    %v1704 = vadd.f32 %v1696, %v1676
    %v1705 = vadd.f32 %v1697, %v1676
    %v1706 = vadd.f32 %v1698, %v1676
    %v1707 = vadd.f32 %v1699, %v1676
    %v1708 = vadd.f32 %v1700, %v1676
    %v1709 = vld [vmem:[#allocation5] sm:$0xff]
    %v1710 = vld [vmem:[#allocation5 + $0x8] sm:$0xff]
    %v1711 = vld [vmem:[#allocation5 + $0x10] sm:$0xff]
    %v1712 = vld [vmem:[#allocation5 + $0x18] sm:$0xff]
    %v1713 = vld [vmem:[#allocation5 + $0x20] sm:$0xff]
    %v1714 = vld [vmem:[#allocation5 + $0x28] sm:$0xff]
    %v1715 = vld [vmem:[#allocation5 + $0x30] sm:$0xff]
    %v1716 = vld [vmem:[#allocation5 + $0x38] sm:$0xff]
    %v1717 = vld [vmem:[#allocation5 + $0x40] sm:$0xff]
    %v1718 = vld [vmem:[#allocation5 + $0x48] sm:$0xff]
    %v1719 = vld [vmem:[#allocation5 + $0x50] sm:$0xff]
    %v1720 = vld [vmem:[#allocation5 + $0x58] sm:$0xff]
    %v1721 = vld [vmem:[#allocation5 + $0x60] sm:$0xff]
    %v1722 = vld [vmem:[#allocation5 + $0x68] sm:$0xff]
    %v1723 = vld [vmem:[#allocation5 + $0x70] sm:$0xff]
    %v1724 = vld [vmem:[#allocation5 + $0x78] sm:$0xff]
    %v1725 = vld [vmem:[#allocation7] sm:$0xff]
    %v1726 = vld [vmem:[#allocation7 + $0x8] sm:$0xff]
    %v1727 = vld [vmem:[#allocation7 + $0x10] sm:$0xff]
    %v1728 = vld [vmem:[#allocation7 + $0x18] sm:$0xff]
    %v1729 = vld [vmem:[#allocation7 + $0x20] sm:$0xff]
    %v1730 = vld [vmem:[#allocation7 + $0x28] sm:$0xff]
    %v1731 = vld [vmem:[#allocation7 + $0x30] sm:$0xff]
    %v1732 = vld [vmem:[#allocation7 + $0x38] sm:$0xff]
    %v1733 = vld [vmem:[#allocation7 + $0x40] sm:$0xff]
    %v1734 = vld [vmem:[#allocation7 + $0x48] sm:$0xff]
    %v1735 = vld [vmem:[#allocation7 + $0x50] sm:$0xff]
    %v1736 = vld [vmem:[#allocation7 + $0x58] sm:$0xff]
    %v1737 = vld [vmem:[#allocation7 + $0x60] sm:$0xff]
    %v1738 = vld [vmem:[#allocation7 + $0x68] sm:$0xff]
    %v1739 = vld [vmem:[#allocation7 + $0x70] sm:$0xff]
    %v1740 = vld [vmem:[#allocation7 + $0x78] sm:$0xff]
    %v1741 = vld [vmem:[%s9] sm:$0xf]
    %v1742 = vld [vmem:[#allocation8] sm:$0xff]
    %v1743 = vld [vmem:[#allocation8 + $0x8] sm:$0xff]
    %v1744 = vld [vmem:[#allocation8 + $0x10] sm:$0xff]
    %v1745 = vld [vmem:[#allocation8 + $0x18] sm:$0xff]
    %v1746 = vld [vmem:[#allocation8 + $0x20] sm:$0xff]
    %v1747 = vld [vmem:[#allocation8 + $0x28] sm:$0xff]
    %v1748 = vld [vmem:[#allocation8 + $0x30] sm:$0xff]
    %v1749 = vld [vmem:[#allocation8 + $0x38] sm:$0xff]
    %v1750 = vld [vmem:[#allocation8 + $0x40] sm:$0xff]
    %v1751 = vld [vmem:[#allocation8 + $0x48] sm:$0xff]
    %v1752 = vld [vmem:[#allocation8 + $0x50] sm:$0xff]
    %v1753 = vld [vmem:[#allocation8 + $0x58] sm:$0xff]
    %v1754 = vld [vmem:[#allocation8 + $0x60] sm:$0xff]
    %v1755 = vld [vmem:[#allocation8 + $0x68] sm:$0xff]
    %v1756 = vld [vmem:[#allocation8 + $0x70] sm:$0xff]
    %v1757 = vld [vmem:[#allocation8 + $0x78] sm:$0xff]
    %v1758 = vld [vmem:[#allocation8 + $0x80] sm:$0xff]
    %v1759 = vld [vmem:[#allocation8 + $0x88] sm:$0xff]
    %v1760 = vld [vmem:[#allocation8 + $0x90] sm:$0xff]
    %v1761 = vld [vmem:[#allocation8 + $0x98] sm:$0xff]
    %v1762 = vld [vmem:[#allocation8 + $0xa0] sm:$0xff]
    %v1763 = vld [vmem:[#allocation8 + $0xa8] sm:$0xff]
    %v1764 = vld [vmem:[#allocation8 + $0xb0] sm:$0xff]
    %v1765 = vld [vmem:[#allocation8 + $0xb8] sm:$0xff]
    %v1766 = vld [vmem:[#allocation8 + $0xc0] sm:$0xff]
    %v1767 = vld [vmem:[#allocation8 + $0xc8] sm:$0xff]
    %v1768 = vld [vmem:[#allocation8 + $0xd0] sm:$0xff]
    %v1769 = vld [vmem:[#allocation8 + $0xd8] sm:$0xff]
    %v1770 = vld [vmem:[#allocation8 + $0xe0] sm:$0xff]
    %v1771 = vld [vmem:[#allocation8 + $0xe8] sm:$0xff]
    %v1772 = vld [vmem:[#allocation8 + $0xf0] sm:$0xff]
    %v1773 = vld [vmem:[#allocation8 + $0xf8] sm:$0xff]
    %v1774 = vld [vmem:[#allocation8 + $0x100] sm:$0xff]
    %v1775 = vld [vmem:[#allocation8 + $0x108] sm:$0xff]
    %v1776 = vld [vmem:[#allocation8 + $0x110] sm:$0xff]
    %v1777 = vld [vmem:[#allocation8 + $0x118] sm:$0xff]
    %v1778 = vld [vmem:[#allocation8 + $0x120] sm:$0xff]
    %v1779 = vld [vmem:[#allocation8 + $0x128] sm:$0xff]
    %v1780 = vld [vmem:[#allocation8 + $0x130] sm:$0xff]
    %v1781 = vld [vmem:[#allocation8 + $0x138] sm:$0xff]
    %v1782 = vld [vmem:[#allocation8 + $0x140] sm:$0xff]
    %v1783 = vld [vmem:[#allocation8 + $0x148] sm:$0xff]
    %v1784 = vld [vmem:[#allocation8 + $0x150] sm:$0xff]
    %v1785 = vld [vmem:[#allocation8 + $0x158] sm:$0xff]
    %v1786 = vld [vmem:[#allocation8 + $0x160] sm:$0xff]
    %v1787 = vld [vmem:[#allocation8 + $0x168] sm:$0xff]
    %v1788 = vld [vmem:[#allocation8 + $0x170] sm:$0xff]
    %v1789 = vld [vmem:[#allocation8 + $0x178] sm:$0xff]
    %v1790 = vld [vmem:[#allocation8 + $0x180] sm:$0xff]
    %v1791 = vld [vmem:[#allocation8 + $0x188] sm:$0xff]
    %v1792 = vld [vmem:[#allocation8 + $0x190] sm:$0xff]
    %v1793 = vld [vmem:[#allocation8 + $0x198] sm:$0xff]
    %v1794 = vld [vmem:[#allocation8 + $0x1a0] sm:$0xff]
    %v1795 = vld [vmem:[#allocation8 + $0x1a8] sm:$0xff]
    %v1796 = vld [vmem:[#allocation8 + $0x1b0] sm:$0xff]
    %v1797 = vld [vmem:[#allocation8 + $0x1b8] sm:$0xff]
    %v1798 = vld [vmem:[#allocation8 + $0x1c0] sm:$0xff]
    %v1799 = vld [vmem:[#allocation8 + $0x1c8] sm:$0xff]
    %v1800 = vld [vmem:[#allocation8 + $0x1d0] sm:$0xff]
    %v1801 = vld [vmem:[#allocation8 + $0x1d8] sm:$0xff]
    %v1802 = vld [vmem:[#allocation8 + $0x1e0] sm:$0xff]
    %v1803 = vld [vmem:[#allocation8 + $0x1e8] sm:$0xff]
    %v1804 = vld [vmem:[#allocation8 + $0x1f0] sm:$0xff]
    %v1805 = vld [vmem:[#allocation8 + $0x1f8] sm:$0xff]
    %v1806 = vld [vmem:[%s11] sm:$0xff]
    %v1807 = vld [vmem:[%s11 + $0x8] sm:$0xff]
    %v1808 = vld [vmem:[%s11 + $0x10] sm:$0xff]
    %v1809 = vld [vmem:[%s11 + $0x18] sm:$0xff]
    %v1810 = vld [vmem:[%s11 + $0x20] sm:$0xff]
    %v1811 = vld [vmem:[%s11 + $0x28] sm:$0xff]
    %v1812 = vld [vmem:[%s11 + $0x30] sm:$0xff]
    %v1813 = vld [vmem:[%s11 + $0x38] sm:$0xff]
    %v1814 = vld [vmem:[%s11 + $0x40] sm:$0xff]
    %v1815 = vld [vmem:[%s11 + $0x48] sm:$0xff]
    %v1816 = vld [vmem:[%s11 + $0x50] sm:$0xff]
    %v1817 = vld [vmem:[%s11 + $0x58] sm:$0xff]
    %v1818 = vld [vmem:[%s11 + $0x60] sm:$0xff]
    %v1819 = vld [vmem:[%s11 + $0x68] sm:$0xff]
    %v1820 = vld [vmem:[%s11 + $0x70] sm:$0xff]
    %v1821 = vld [vmem:[%s11 + $0x78] sm:$0xff]
    %v1822 = vld [vmem:[%s12] sm:$0x3]
    %v1824 = vsel %vm230, %v1701, 0
    %v1827 = vsel %vm230, %v1702, 0
    %v1830 = vsel %vm230, %v1703, 0
    %v1833 = vsel %vm230, %v1704, 0
    %v1836 = vsel %vm230, %v1705, 0
    %v1839 = vsel %vm230, %v1706, 0
    %v1842 = vsel %vm230, %v1707, 0
    %v1845 = vsel %vm230, %v1708, 0
    %1847 = vmatpush.msra.mxu0 0.0
    %1848 = vmatpush.msra.mxu0 0.0
    %1849 = vmatpush.msra.mxu0 0.0
    %1850 = vmatpush.msra.mxu0 0.0
    %1851 = vmatpush.msra.mxu0 0.0
    %1852 = vmatpush.msra.mxu0 0.0
    %1853 = vmatpush.msra.mxu0 0.0
    %1854 = vmatpush.msra.mxu0 0.0
    %1855 = vmatpush.msra.mxu0 0.0
    %1856 = vmatpush.msra.mxu0 0.0
    %1857 = vmatpush.msra.mxu0 0.0
    %1858 = vmatpush.msra.mxu0 0.0
    %1859 = vmatpush.msra.mxu0 %v1737
    %1860 = vmatpush.msra.mxu0 %v1733
    %1861 = vmatpush.msra.mxu0 %v1729
    %1862 = vmatpush.msra.mxu0 %v1725
    %1863 = vmatmul.f32.gmra.mxu0 %v1824
    %v1864 = vpop.f32.mrf.mxu0
    %v1865 = vadd.f32 0.0, %v1864
    %1866 = vmatmul.f32.gmra.mxu0 %v1827
    %v1867 = vpop.f32.mrf.mxu0
    %v1868 = vadd.f32 0.0, %v1867
    %1869 = vmatmul.f32.gmra.mxu0 %v1830
    %v1870 = vpop.f32.mrf.mxu0
    %v1871 = vadd.f32 0.0, %v1870
    %1872 = vmatmul.f32.gmra.mxu0 %v1833
    %v1873 = vpop.f32.mrf.mxu0
    %v1874 = vadd.f32 0.0, %v1873
    %1875 = vmatmul.f32.gmra.mxu0 %v1836
    %v1876 = vpop.f32.mrf.mxu0
    %v1877 = vadd.f32 0.0, %v1876
    %1878 = vmatmul.f32.gmra.mxu0 %v1839
    %v1879 = vpop.f32.mrf.mxu0
    %v1880 = vadd.f32 0.0, %v1879
    %1881 = vmatmul.f32.gmra.mxu0 %v1842
    %v1882 = vpop.f32.mrf.mxu0
    %v1883 = vadd.f32 0.0, %v1882
    %1884 = vmatmul.f32.gmra.mxu0 %v1845
    %v1885 = vpop.f32.mrf.mxu0
    %v1886 = vadd.f32 0.0, %v1885
    %1887 = vdwg.mxu0
    %1888 = vmatpush.msra.mxu0 0.0
    %1889 = vmatpush.msra.mxu0 0.0
    %1890 = vmatpush.msra.mxu0 0.0
    %1891 = vmatpush.msra.mxu0 0.0
    %1892 = vmatpush.msra.mxu0 0.0
    %1893 = vmatpush.msra.mxu0 0.0
    %1894 = vmatpush.msra.mxu0 0.0
    %1895 = vmatpush.msra.mxu0 0.0
    %1896 = vmatpush.msra.mxu0 0.0
    %1897 = vmatpush.msra.mxu0 0.0
    %1898 = vmatpush.msra.mxu0 0.0
    %1899 = vmatpush.msra.mxu0 0.0
    %1900 = vmatpush.msra.mxu0 %v1738
    %1901 = vmatpush.msra.mxu0 %v1734
    %1902 = vmatpush.msra.mxu0 %v1730
    %1903 = vmatpush.msra.mxu0 %v1726
    %1904 = vmatmul.f32.gmra.mxu0 %v1824
    %v1905 = vpop.f32.mrf.mxu0
    %v1906 = vadd.f32 0.0, %v1905
    %1907 = vmatmul.f32.gmra.mxu0 %v1827
    %v1908 = vpop.f32.mrf.mxu0
    %v1909 = vadd.f32 0.0, %v1908
    %1910 = vmatmul.f32.gmra.mxu0 %v1830
    %v1911 = vpop.f32.mrf.mxu0
    %v1912 = vadd.f32 0.0, %v1911
    %1913 = vmatmul.f32.gmra.mxu0 %v1833
    %v1914 = vpop.f32.mrf.mxu0
    %v1915 = vadd.f32 0.0, %v1914
    %1916 = vmatmul.f32.gmra.mxu0 %v1836
    %v1917 = vpop.f32.mrf.mxu0
    %v1918 = vadd.f32 0.0, %v1917
    %1919 = vmatmul.f32.gmra.mxu0 %v1839
    %v1920 = vpop.f32.mrf.mxu0
    %v1921 = vadd.f32 0.0, %v1920
    %1922 = vmatmul.f32.gmra.mxu0 %v1842
    %v1923 = vpop.f32.mrf.mxu0
    %v1924 = vadd.f32 0.0, %v1923
    %1925 = vmatmul.f32.gmra.mxu0 %v1845
    %v1926 = vpop.f32.mrf.mxu0
    %v1927 = vadd.f32 0.0, %v1926
    %1928 = vdwg.mxu0
    %1929 = vmatpush.msra.mxu0 0.0
    %1930 = vmatpush.msra.mxu0 0.0
    %1931 = vmatpush.msra.mxu0 0.0
    %1932 = vmatpush.msra.mxu0 0.0
    %1933 = vmatpush.msra.mxu0 0.0
    %1934 = vmatpush.msra.mxu0 0.0
    %1935 = vmatpush.msra.mxu0 0.0
    %1936 = vmatpush.msra.mxu0 0.0
    %1937 = vmatpush.msra.mxu0 0.0
    %1938 = vmatpush.msra.mxu0 0.0
    %1939 = vmatpush.msra.mxu0 0.0
    %1940 = vmatpush.msra.mxu0 0.0
    %1941 = vmatpush.msra.mxu0 %v1739
    %1942 = vmatpush.msra.mxu0 %v1735
    %1943 = vmatpush.msra.mxu0 %v1731
    %1944 = vmatpush.msra.mxu0 %v1727
    %1945 = vmatmul.f32.gmra.mxu0 %v1824
    %v1946 = vpop.f32.mrf.mxu0
    %v1947 = vadd.f32 0.0, %v1946
    %1948 = vmatmul.f32.gmra.mxu0 %v1827
    %v1949 = vpop.f32.mrf.mxu0
    %v1950 = vadd.f32 0.0, %v1949
    %1951 = vmatmul.f32.gmra.mxu0 %v1830
    %v1952 = vpop.f32.mrf.mxu0
    %v1953 = vadd.f32 0.0, %v1952
    %1954 = vmatmul.f32.gmra.mxu0 %v1833
    %v1955 = vpop.f32.mrf.mxu0
    %v1956 = vadd.f32 0.0, %v1955
    %1957 = vmatmul.f32.gmra.mxu0 %v1836
    %v1958 = vpop.f32.mrf.mxu0
    %v1959 = vadd.f32 0.0, %v1958
    %1960 = vmatmul.f32.gmra.mxu0 %v1839
    %v1961 = vpop.f32.mrf.mxu0
    %v1962 = vadd.f32 0.0, %v1961
    %1963 = vmatmul.f32.gmra.mxu0 %v1842
    %v1964 = vpop.f32.mrf.mxu0
    %v1965 = vadd.f32 0.0, %v1964
    %1966 = vmatmul.f32.gmra.mxu0 %v1845
    %v1967 = vpop.f32.mrf.mxu0
    %v1968 = vadd.f32 0.0, %v1967
    %1969 = vdwg.mxu0
    %1970 = vmatpush.msra.mxu0 0.0
    %1971 = vmatpush.msra.mxu0 0.0
    %1972 = vmatpush.msra.mxu0 0.0
    %1973 = vmatpush.msra.mxu0 0.0
    %1974 = vmatpush.msra.mxu0 0.0
    %1975 = vmatpush.msra.mxu0 0.0
    %1976 = vmatpush.msra.mxu0 0.0
    %1977 = vmatpush.msra.mxu0 0.0
    %1978 = vmatpush.msra.mxu0 0.0
    %1979 = vmatpush.msra.mxu0 0.0
    %1980 = vmatpush.msra.mxu0 0.0
    %1981 = vmatpush.msra.mxu0 0.0
    %1982 = vmatpush.msra.mxu0 %v1740
    %1983 = vmatpush.msra.mxu0 %v1736
    %1984 = vmatpush.msra.mxu0 %v1732
    %1985 = vmatpush.msra.mxu0 %v1728
    %1986 = vmatmul.f32.gmra.mxu0 %v1824
    %v1987 = vpop.f32.mrf.mxu0
    %v1988 = vadd.f32 0.0, %v1987
    %1989 = vmatmul.f32.gmra.mxu0 %v1827
    %v1990 = vpop.f32.mrf.mxu0
    %v1991 = vadd.f32 0.0, %v1990
    %1992 = vmatmul.f32.gmra.mxu0 %v1830
    %v1993 = vpop.f32.mrf.mxu0
    %v1994 = vadd.f32 0.0, %v1993
    %1995 = vmatmul.f32.gmra.mxu0 %v1833
    %v1996 = vpop.f32.mrf.mxu0
    %v1997 = vadd.f32 0.0, %v1996
    %1998 = vmatmul.f32.gmra.mxu0 %v1836
    %v1999 = vpop.f32.mrf.mxu0
    %v2000 = vadd.f32 0.0, %v1999
    %2001 = vmatmul.f32.gmra.mxu0 %v1839
    %v2002 = vpop.f32.mrf.mxu0
    %v2003 = vadd.f32 0.0, %v2002
    %2004 = vmatmul.f32.gmra.mxu0 %v1842
    %v2005 = vpop.f32.mrf.mxu0
    %v2006 = vadd.f32 0.0, %v2005
    %2007 = vmatmul.f32.gmra.mxu0 %v1845
    %v2008 = vpop.f32.mrf.mxu0
    %v2009 = vadd.f32 0.0, %v2008
    %2010 = vdwg.mxu0
    %2011 = vmatpush.msra.mxu0 0.0
    %2012 = vmatpush.msra.mxu0 0.0
    %2013 = vmatpush.msra.mxu0 0.0
    %2014 = vmatpush.msra.mxu0 0.0
    %2015 = vmatpush.msra.mxu0 0.0
    %2016 = vmatpush.msra.mxu0 0.0
    %2017 = vmatpush.msra.mxu0 0.0
    %2018 = vmatpush.msra.mxu0 0.0
    %2019 = vmatpush.msra.mxu0 0.0
    %2020 = vmatpush.msra.mxu0 0.0
    %2021 = vmatpush.msra.mxu0 0.0
    %2022 = vmatpush.msra.mxu0 0.0
    %2023 = vmatpush.msra.mxu0 %v1721
    %2024 = vmatpush.msra.mxu0 %v1717
    %2025 = vmatpush.msra.mxu0 %v1713
    %2026 = vmatpush.msra.mxu0 %v1709
    %2027 = vmatmul.f32.gmra.mxu0 %v1824
    %v2028 = vpop.f32.mrf.mxu0
    %v2029 = vadd.f32 %v1886, %v2028
    %2030 = vmatmul.f32.gmra.mxu0 %v1827
    %v2031 = vpop.f32.mrf.mxu0
    %v2032 = vadd.f32 %v1883, %v2031
    %2033 = vmatmul.f32.gmra.mxu0 %v1830
    %v2034 = vpop.f32.mrf.mxu0
    %v2035 = vadd.f32 %v1880, %v2034
    %2036 = vmatmul.f32.gmra.mxu0 %v1833
    %v2037 = vpop.f32.mrf.mxu0
    %v2038 = vadd.f32 %v1877, %v2037
    %2039 = vmatmul.f32.gmra.mxu0 %v1836
    %v2040 = vpop.f32.mrf.mxu0
    %v2041 = vadd.f32 %v1874, %v2040
    %2042 = vmatmul.f32.gmra.mxu0 %v1839
    %v2043 = vpop.f32.mrf.mxu0
    %v2044 = vadd.f32 %v1871, %v2043
    %2045 = vmatmul.f32.gmra.mxu0 %v1842
    %v2046 = vpop.f32.mrf.mxu0
    %v2047 = vadd.f32 %v1868, %v2046
    %2048 = vmatmul.f32.gmra.mxu0 %v1845
    %v2049 = vpop.f32.mrf.mxu0
    %v2050 = vadd.f32 %v1865, %v2049
    %2051 = vdwg.mxu0
    %2052 = vmatpush.msra.mxu0 0.0
    %2053 = vmatpush.msra.mxu0 0.0
    %2054 = vmatpush.msra.mxu0 0.0
    %2055 = vmatpush.msra.mxu0 0.0
    %2056 = vmatpush.msra.mxu0 0.0
    %2057 = vmatpush.msra.mxu0 0.0
    %2058 = vmatpush.msra.mxu0 0.0
    %2059 = vmatpush.msra.mxu0 0.0
    %2060 = vmatpush.msra.mxu0 0.0
    %2061 = vmatpush.msra.mxu0 0.0
    %2062 = vmatpush.msra.mxu0 0.0
    %2063 = vmatpush.msra.mxu0 0.0
    %2064 = vmatpush.msra.mxu0 %v1722
    %2065 = vmatpush.msra.mxu0 %v1718
    %2066 = vmatpush.msra.mxu0 %v1714
    %2067 = vmatpush.msra.mxu0 %v1710
    %2068 = vmatmul.f32.gmra.mxu0 %v1824
    %v2069 = vpop.f32.mrf.mxu0
    %v2070 = vadd.f32 %v1927, %v2069
    %2071 = vmatmul.f32.gmra.mxu0 %v1827
    %v2072 = vpop.f32.mrf.mxu0
    %v2073 = vadd.f32 %v1924, %v2072
    %2074 = vmatmul.f32.gmra.mxu0 %v1830
    %v2075 = vpop.f32.mrf.mxu0
    %v2076 = vadd.f32 %v1921, %v2075
    %2077 = vmatmul.f32.gmra.mxu0 %v1833
    %v2078 = vpop.f32.mrf.mxu0
    %v2079 = vadd.f32 %v1918, %v2078
    %2080 = vmatmul.f32.gmra.mxu0 %v1836
    %v2081 = vpop.f32.mrf.mxu0
    %v2082 = vadd.f32 %v1915, %v2081
    %2083 = vmatmul.f32.gmra.mxu0 %v1839
    %v2084 = vpop.f32.mrf.mxu0
    %v2085 = vadd.f32 %v1912, %v2084
    %2086 = vmatmul.f32.gmra.mxu0 %v1842
    %v2087 = vpop.f32.mrf.mxu0
    %v2088 = vadd.f32 %v1909, %v2087
    %2089 = vmatmul.f32.gmra.mxu0 %v1845
    %v2090 = vpop.f32.mrf.mxu0
    %v2091 = vadd.f32 %v1906, %v2090
    %2092 = vdwg.mxu0
    %2093 = vmatpush.msra.mxu0 0.0
    %2094 = vmatpush.msra.mxu0 0.0
    %2095 = vmatpush.msra.mxu0 0.0
    %2096 = vmatpush.msra.mxu0 0.0
    %2097 = vmatpush.msra.mxu0 0.0
    %2098 = vmatpush.msra.mxu0 0.0
    %2099 = vmatpush.msra.mxu0 0.0
    %2100 = vmatpush.msra.mxu0 0.0
    %2101 = vmatpush.msra.mxu0 0.0
    %2102 = vmatpush.msra.mxu0 0.0
    %2103 = vmatpush.msra.mxu0 0.0
    %2104 = vmatpush.msra.mxu0 0.0
    %2105 = vmatpush.msra.mxu0 %v1723
    %2106 = vmatpush.msra.mxu0 %v1719
    %2107 = vmatpush.msra.mxu0 %v1715
    %2108 = vmatpush.msra.mxu0 %v1711
    %2109 = vmatmul.f32.gmra.mxu0 %v1824
    %v2110 = vpop.f32.mrf.mxu0
    %v2111 = vadd.f32 %v1968, %v2110
    %2112 = vmatmul.f32.gmra.mxu0 %v1827
    %v2113 = vpop.f32.mrf.mxu0
    %v2114 = vadd.f32 %v1965, %v2113
    %2115 = vmatmul.f32.gmra.mxu0 %v1830
    %v2116 = vpop.f32.mrf.mxu0
    %v2117 = vadd.f32 %v1962, %v2116
    %2118 = vmatmul.f32.gmra.mxu0 %v1833
    %v2119 = vpop.f32.mrf.mxu0
    %v2120 = vadd.f32 %v1959, %v2119
    %2121 = vmatmul.f32.gmra.mxu0 %v1836
    %v2122 = vpop.f32.mrf.mxu0
    %v2123 = vadd.f32 %v1956, %v2122
    %2124 = vmatmul.f32.gmra.mxu0 %v1839
    %v2125 = vpop.f32.mrf.mxu0
    %v2126 = vadd.f32 %v1953, %v2125
    %2127 = vmatmul.f32.gmra.mxu0 %v1842
    %v2128 = vpop.f32.mrf.mxu0
    %v2129 = vadd.f32 %v1950, %v2128
    %2130 = vmatmul.f32.gmra.mxu0 %v1845
    %v2131 = vpop.f32.mrf.mxu0
    %v2132 = vadd.f32 %v1947, %v2131
    %2133 = vdwg.mxu0
    %2134 = vmatpush.msra.mxu0 0.0
    %2135 = vmatpush.msra.mxu0 0.0
    %2136 = vmatpush.msra.mxu0 0.0
    %2137 = vmatpush.msra.mxu0 0.0
    %2138 = vmatpush.msra.mxu0 0.0
    %2139 = vmatpush.msra.mxu0 0.0
    %2140 = vmatpush.msra.mxu0 0.0
    %2141 = vmatpush.msra.mxu0 0.0
    %2142 = vmatpush.msra.mxu0 0.0
    %2143 = vmatpush.msra.mxu0 0.0
    %2144 = vmatpush.msra.mxu0 0.0
    %2145 = vmatpush.msra.mxu0 0.0
    %2146 = vmatpush.msra.mxu0 %v1724
    %2147 = vmatpush.msra.mxu0 %v1720
    %2148 = vmatpush.msra.mxu0 %v1716
    %2149 = vmatpush.msra.mxu0 %v1712
    %2150 = vmatmul.f32.gmra.mxu0 %v1824
    %v2151 = vpop.f32.mrf.mxu0
    %v2152 = vadd.f32 %v2009, %v2151
    %2153 = vmatmul.f32.gmra.mxu0 %v1827
    %v2154 = vpop.f32.mrf.mxu0
    %v2155 = vadd.f32 %v2006, %v2154
    %2156 = vmatmul.f32.gmra.mxu0 %v1830
    %v2157 = vpop.f32.mrf.mxu0
    %v2158 = vadd.f32 %v2003, %v2157
    %2159 = vmatmul.f32.gmra.mxu0 %v1833
    %v2160 = vpop.f32.mrf.mxu0
    %v2161 = vadd.f32 %v2000, %v2160
    %2162 = vmatmul.f32.gmra.mxu0 %v1836
    %v2163 = vpop.f32.mrf.mxu0
    %v2164 = vadd.f32 %v1997, %v2163
    %2165 = vmatmul.f32.gmra.mxu0 %v1839
    %v2166 = vpop.f32.mrf.mxu0
    %v2167 = vadd.f32 %v1994, %v2166
    %2168 = vmatmul.f32.gmra.mxu0 %v1842
    %v2169 = vpop.f32.mrf.mxu0
    %v2170 = vadd.f32 %v1991, %v2169
    %2171 = vmatmul.f32.gmra.mxu0 %v1845
    %v2172 = vpop.f32.mrf.mxu0
    %v2173 = vadd.f32 %v1988, %v2172
    %2174 = vdwg.mxu0
    %v2176 = vperm.slane %v1741, 0
    %v2177 = vperm.slane %v1741, 1
    %v2178 = vperm.slane %v1741, 2
    %v2179 = vperm.slane %v1741, 3
    %v2184 = vadd.f32 %v2029, %v2176
    %v2185 = vadd.f32 %v2070, %v2177
    %v2186 = vadd.f32 %v2111, %v2178
    %v2187 = vadd.f32 %v2152, %v2179
    %v2188 = vadd.f32 %v2032, %v2176
    %v2189 = vadd.f32 %v2073, %v2177
    %v2190 = vadd.f32 %v2114, %v2178
    %v2191 = vadd.f32 %v2155, %v2179
    %v2192 = vadd.f32 %v2035, %v2176
    %v2193 = vadd.f32 %v2076, %v2177
    %v2194 = vadd.f32 %v2117, %v2178
    %v2195 = vadd.f32 %v2158, %v2179
    %v2196 = vadd.f32 %v2038, %v2176
    %v2197 = vadd.f32 %v2079, %v2177
    %v2198 = vadd.f32 %v2120, %v2178
    %v2199 = vadd.f32 %v2161, %v2179
    %v2200 = vadd.f32 %v2041, %v2176
    %v2201 = vadd.f32 %v2082, %v2177
    %v2202 = vadd.f32 %v2123, %v2178
    %v2203 = vadd.f32 %v2164, %v2179
    %v2204 = vadd.f32 %v2044, %v2176
    %v2205 = vadd.f32 %v2085, %v2177
    %v2206 = vadd.f32 %v2126, %v2178
    %v2207 = vadd.f32 %v2167, %v2179
    %v2208 = vadd.f32 %v2047, %v2176
    %v2209 = vadd.f32 %v2088, %v2177
    %v2210 = vadd.f32 %v2129, %v2178
    %v2211 = vadd.f32 %v2170, %v2179
    %v2212 = vadd.f32 %v2050, %v2176
    %v2213 = vadd.f32 %v2091, %v2177
    %v2214 = vadd.f32 %v2132, %v2178
    %v2215 = vadd.f32 %v2173, %v2179
    %vm2216 = vcmp.lt.s32.totalorder %v625, 16
    %v2217 = vsel %vm2216, 1, 0
    %v2218 = vcvt.s32.f32 %v2217
    %vm2219 = vcmp.ge.s32.totalorder %v625, 16
    %vm2220 = vmand %vm2219, %vm626
    %v2221 = vsel %vm2220, 1, 0
    %v2222 = vcvt.s32.f32 %v2221
    %2223 = vmatpush.msra.mxu0 %v1802
    %2224 = vmatpush.msra.mxu0 %v1798
    %2225 = vmatpush.msra.mxu0 %v1794
    %2226 = vmatpush.msra.mxu0 %v1790
    %2227 = vmatpush.msra.mxu0 %v1786
    %2228 = vmatpush.msra.mxu0 %v1782
    %2229 = vmatpush.msra.mxu0 %v1778
    %2230 = vmatpush.msra.mxu0 %v1774
    %2231 = vmatpush.msra.mxu0 %v1770
    %2232 = vmatpush.msra.mxu0 %v1766
    %2233 = vmatpush.msra.mxu0 %v1762
    %2234 = vmatpush.msra.mxu0 %v1758
    %2235 = vmatpush.msra.mxu0 %v1754
    %2236 = vmatpush.msra.mxu0 %v1750
    %2237 = vmatpush.msra.mxu0 %v1746
    %2238 = vmatpush.msra.mxu0 %v1742
    %2239 = vmatmul.f32.gmra.mxu0 0.0
    %v2240 = vpop.f32.mrf.mxu0
    %v2241 = vadd.f32 0.0, %v2240
    %2242 = vdwg.mxu0
    %2243 = vmatpush.msra.mxu0 %v1803
    %2244 = vmatpush.msra.mxu0 %v1799
    %2245 = vmatpush.msra.mxu0 %v1795
    %2246 = vmatpush.msra.mxu0 %v1791
    %2247 = vmatpush.msra.mxu0 %v1787
    %2248 = vmatpush.msra.mxu0 %v1783
    %2249 = vmatpush.msra.mxu0 %v1779
    %2250 = vmatpush.msra.mxu0 %v1775
    %2251 = vmatpush.msra.mxu0 %v1771
    %2252 = vmatpush.msra.mxu0 %v1767
    %2253 = vmatpush.msra.mxu0 %v1763
    %2254 = vmatpush.msra.mxu0 %v1759
    %2255 = vmatpush.msra.mxu0 %v1755
    %2256 = vmatpush.msra.mxu0 %v1751
    %2257 = vmatpush.msra.mxu0 %v1747
    %2258 = vmatpush.msra.mxu0 %v1743
    %2259 = vmatmul.f32.gmra.mxu0 0.0
    %v2260 = vpop.f32.mrf.mxu0
    %v2261 = vadd.f32 0.0, %v2260
    %2262 = vdwg.mxu0
    %2263 = vmatpush.msra.mxu0 %v1804
    %2264 = vmatpush.msra.mxu0 %v1800
    %2265 = vmatpush.msra.mxu0 %v1796
    %2266 = vmatpush.msra.mxu0 %v1792
    %2267 = vmatpush.msra.mxu0 %v1788
    %2268 = vmatpush.msra.mxu0 %v1784
    %2269 = vmatpush.msra.mxu0 %v1780
    %2270 = vmatpush.msra.mxu0 %v1776
    %2271 = vmatpush.msra.mxu0 %v1772
    %2272 = vmatpush.msra.mxu0 %v1768
    %2273 = vmatpush.msra.mxu0 %v1764
    %2274 = vmatpush.msra.mxu0 %v1760
    %2275 = vmatpush.msra.mxu0 %v1756
    %2276 = vmatpush.msra.mxu0 %v1752
    %2277 = vmatpush.msra.mxu0 %v1748
    %2278 = vmatpush.msra.mxu0 %v1744
    %2279 = vmatmul.f32.gmra.mxu0 0.0
    %v2280 = vpop.f32.mrf.mxu0
    %v2281 = vadd.f32 0.0, %v2280
    %2282 = vdwg.mxu0
    %2283 = vmatpush.msra.mxu0 %v1805
    %2284 = vmatpush.msra.mxu0 %v1801
    %2285 = vmatpush.msra.mxu0 %v1797
    %2286 = vmatpush.msra.mxu0 %v1793
    %2287 = vmatpush.msra.mxu0 %v1789
    %2288 = vmatpush.msra.mxu0 %v1785
    %2289 = vmatpush.msra.mxu0 %v1781
    %2290 = vmatpush.msra.mxu0 %v1777
    %2291 = vmatpush.msra.mxu0 %v1773
    %2292 = vmatpush.msra.mxu0 %v1769
    %2293 = vmatpush.msra.mxu0 %v1765
    %2294 = vmatpush.msra.mxu0 %v1761
    %2295 = vmatpush.msra.mxu0 %v1757
    %2296 = vmatpush.msra.mxu0 %v1753
    %2297 = vmatpush.msra.mxu0 %v1749
    %2298 = vmatpush.msra.mxu0 %v1745
    %2299 = vmatmul.f32.gmra.mxu0 0.0
    %v2300 = vpop.f32.mrf.mxu0
    %v2301 = vadd.f32 0.0, %v2300
    %2302 = vdwg.mxu0
    %v2303 = vadd.f32 %v2184, %v2241
    %v2304 = vadd.f32 %v2185, %v2261
    %v2305 = vadd.f32 %v2186, %v2281
    %v2306 = vadd.f32 %v2187, %v2301
    %v2307 = vmul.f32 %v2303, 0.5
    %v2308 = vtanh.pop %v2307
    %v2309 = vmul.f32 %v2308, 0.5
    %v2310 = vadd.f32 %v2309, 0.5
    %v2311 = vmul.f32 %v2304, 0.5
    %v2312 = vtanh.pop %v2311
    %v2313 = vmul.f32 %v2312, 0.5
    %v2314 = vadd.f32 %v2313, 0.5
    %v2315 = vtanh.pop %v2305
    %v2316 = vmul.f32 %v2306, 0.5
    %v2317 = vtanh.pop %v2316
    %v2318 = vmul.f32 %v2317, 0.5
    %v2319 = vadd.f32 %v2318, 0.5
    %v2320 = vmul.f32 %v2314, 0.0
    %v2321 = vmul.f32 %v2310, %v2315
    %v2322 = vadd.f32 %v2320, %v2321
    %v2323 = vtanh.pop %v2322
    %v2324 = vmul.f32 %v2319, %v2323
    %2325 = vmatpush.msra.mxu0 %v1802
    %2326 = vmatpush.msra.mxu0 %v1798
    %2327 = vmatpush.msra.mxu0 %v1794
    %2328 = vmatpush.msra.mxu0 %v1790
    %2329 = vmatpush.msra.mxu0 %v1786
    %2330 = vmatpush.msra.mxu0 %v1782
    %2331 = vmatpush.msra.mxu0 %v1778
    %2332 = vmatpush.msra.mxu0 %v1774
    %2333 = vmatpush.msra.mxu0 %v1770
    %2334 = vmatpush.msra.mxu0 %v1766
    %2335 = vmatpush.msra.mxu0 %v1762
    %2336 = vmatpush.msra.mxu0 %v1758
    %2337 = vmatpush.msra.mxu0 %v1754
    %2338 = vmatpush.msra.mxu0 %v1750
    %2339 = vmatpush.msra.mxu0 %v1746
    %2340 = vmatpush.msra.mxu0 %v1742
    %2341 = vmatmul.f32.gmra.mxu0 %v2324
    %v2342 = vpop.f32.mrf.mxu0
    %v2343 = vadd.f32 0.0, %v2342
    %2344 = vdwg.mxu0
    %2345 = vmatpush.msra.mxu0 %v1803
    %2346 = vmatpush.msra.mxu0 %v1799
    %2347 = vmatpush.msra.mxu0 %v1795
    %2348 = vmatpush.msra.mxu0 %v1791
    %2349 = vmatpush.msra.mxu0 %v1787
    %2350 = vmatpush.msra.mxu0 %v1783
    %2351 = vmatpush.msra.mxu0 %v1779
    %2352 = vmatpush.msra.mxu0 %v1775
    %2353 = vmatpush.msra.mxu0 %v1771
    %2354 = vmatpush.msra.mxu0 %v1767
    %2355 = vmatpush.msra.mxu0 %v1763
    %2356 = vmatpush.msra.mxu0 %v1759
    %2357 = vmatpush.msra.mxu0 %v1755
    %2358 = vmatpush.msra.mxu0 %v1751
    %2359 = vmatpush.msra.mxu0 %v1747
    %2360 = vmatpush.msra.mxu0 %v1743
    %2361 = vmatmul.f32.gmra.mxu0 %v2324
    %v2362 = vpop.f32.mrf.mxu0
    %v2363 = vadd.f32 0.0, %v2362
    %2364 = vdwg.mxu0
    %2365 = vmatpush.msra.mxu0 %v1804
    %2366 = vmatpush.msra.mxu0 %v1800
    %2367 = vmatpush.msra.mxu0 %v1796
    %2368 = vmatpush.msra.mxu0 %v1792
    %2369 = vmatpush.msra.mxu0 %v1788
    %2370 = vmatpush.msra.mxu0 %v1784
    %2371 = vmatpush.msra.mxu0 %v1780
    %2372 = vmatpush.msra.mxu0 %v1776
    %2373 = vmatpush.msra.mxu0 %v1772
    %2374 = vmatpush.msra.mxu0 %v1768
    %2375 = vmatpush.msra.mxu0 %v1764
    %2376 = vmatpush.msra.mxu0 %v1760
    %2377 = vmatpush.msra.mxu0 %v1756
    %2378 = vmatpush.msra.mxu0 %v1752
    %2379 = vmatpush.msra.mxu0 %v1748
    %2380 = vmatpush.msra.mxu0 %v1744
    %2381 = vmatmul.f32.gmra.mxu0 %v2324
    %v2382 = vpop.f32.mrf.mxu0
    %v2383 = vadd.f32 0.0, %v2382
    %2384 = vdwg.mxu0
    %2385 = vmatpush.msra.mxu0 %v1805
    %2386 = vmatpush.msra.mxu0 %v1801
    %2387 = vmatpush.msra.mxu0 %v1797
    %2388 = vmatpush.msra.mxu0 %v1793
    %2389 = vmatpush.msra.mxu0 %v1789
    %2390 = vmatpush.msra.mxu0 %v1785
    %2391 = vmatpush.msra.mxu0 %v1781
    %2392 = vmatpush.msra.mxu0 %v1777
    %2393 = vmatpush.msra.mxu0 %v1773
    %2394 = vmatpush.msra.mxu0 %v1769
    %2395 = vmatpush.msra.mxu0 %v1765
    %2396 = vmatpush.msra.mxu0 %v1761
    %2397 = vmatpush.msra.mxu0 %v1757
    %2398 = vmatpush.msra.mxu0 %v1753
    %2399 = vmatpush.msra.mxu0 %v1749
    %2400 = vmatpush.msra.mxu0 %v1745
    %2401 = vmatmul.f32.gmra.mxu0 %v2324
    %v2402 = vpop.f32.mrf.mxu0
    %v2403 = vadd.f32 0.0, %v2402
    %2404 = vdwg.mxu0
    %v2405 = vadd.f32 %v2188, %v2343
    %v2406 = vadd.f32 %v2189, %v2363
    %v2407 = vadd.f32 %v2190, %v2383
    %v2408 = vadd.f32 %v2191, %v2403
    %v2409 = vmul.f32 %v2405, 0.5
    %v2410 = vtanh.pop %v2409
    %v2411 = vmul.f32 %v2410, 0.5
    %v2412 = vadd.f32 %v2411, 0.5
    %v2413 = vmul.f32 %v2406, 0.5
    %v2414 = vtanh.pop %v2413
    %v2415 = vmul.f32 %v2414, 0.5
    %v2416 = vadd.f32 %v2415, 0.5
    %v2417 = vtanh.pop %v2407
    %v2418 = vmul.f32 %v2408, 0.5
    %v2419 = vtanh.pop %v2418
    %v2420 = vmul.f32 %v2419, 0.5
    %v2421 = vadd.f32 %v2420, 0.5
    %v2422 = vmul.f32 %v2416, %v2322
    %v2423 = vmul.f32 %v2412, %v2417
    %v2424 = vadd.f32 %v2422, %v2423
    %v2425 = vtanh.pop %v2424
    %v2426 = vmul.f32 %v2421, %v2425
    %2427 = vmatpush.msra.mxu0 %v1802
    %2428 = vmatpush.msra.mxu0 %v1798
    %2429 = vmatpush.msra.mxu0 %v1794
    %2430 = vmatpush.msra.mxu0 %v1790
    %2431 = vmatpush.msra.mxu0 %v1786
    %2432 = vmatpush.msra.mxu0 %v1782
    %2433 = vmatpush.msra.mxu0 %v1778
    %2434 = vmatpush.msra.mxu0 %v1774
    %2435 = vmatpush.msra.mxu0 %v1770
    %2436 = vmatpush.msra.mxu0 %v1766
    %2437 = vmatpush.msra.mxu0 %v1762
    %2438 = vmatpush.msra.mxu0 %v1758
    %2439 = vmatpush.msra.mxu0 %v1754
    %2440 = vmatpush.msra.mxu0 %v1750
    %2441 = vmatpush.msra.mxu0 %v1746
    %2442 = vmatpush.msra.mxu0 %v1742
    %2443 = vmatmul.f32.gmra.mxu0 %v2426
    %v2444 = vpop.f32.mrf.mxu0
    %v2445 = vadd.f32 0.0, %v2444
    %2446 = vdwg.mxu0
    %2447 = vmatpush.msra.mxu0 %v1803
    %2448 = vmatpush.msra.mxu0 %v1799
    %2449 = vmatpush.msra.mxu0 %v1795
    %2450 = vmatpush.msra.mxu0 %v1791
    %2451 = vmatpush.msra.mxu0 %v1787
    %2452 = vmatpush.msra.mxu0 %v1783
    %2453 = vmatpush.msra.mxu0 %v1779
    %2454 = vmatpush.msra.mxu0 %v1775
    %2455 = vmatpush.msra.mxu0 %v1771
    %2456 = vmatpush.msra.mxu0 %v1767
    %2457 = vmatpush.msra.mxu0 %v1763
    %2458 = vmatpush.msra.mxu0 %v1759
    %2459 = vmatpush.msra.mxu0 %v1755
    %2460 = vmatpush.msra.mxu0 %v1751
    %2461 = vmatpush.msra.mxu0 %v1747
    %2462 = vmatpush.msra.mxu0 %v1743
    %2463 = vmatmul.f32.gmra.mxu0 %v2426
    %v2464 = vpop.f32.mrf.mxu0
    %v2465 = vadd.f32 0.0, %v2464
    %2466 = vdwg.mxu0
    %2467 = vmatpush.msra.mxu0 %v1804
    %2468 = vmatpush.msra.mxu0 %v1800
    %2469 = vmatpush.msra.mxu0 %v1796
    %2470 = vmatpush.msra.mxu0 %v1792
    %2471 = vmatpush.msra.mxu0 %v1788
    %2472 = vmatpush.msra.mxu0 %v1784
    %2473 = vmatpush.msra.mxu0 %v1780
    %2474 = vmatpush.msra.mxu0 %v1776
    %2475 = vmatpush.msra.mxu0 %v1772
    %2476 = vmatpush.msra.mxu0 %v1768
    %2477 = vmatpush.msra.mxu0 %v1764
    %2478 = vmatpush.msra.mxu0 %v1760
    %2479 = vmatpush.msra.mxu0 %v1756
    %2480 = vmatpush.msra.mxu0 %v1752
    %2481 = vmatpush.msra.mxu0 %v1748
    %2482 = vmatpush.msra.mxu0 %v1744
    %2483 = vmatmul.f32.gmra.mxu0 %v2426
    %v2484 = vpop.f32.mrf.mxu0
    %v2485 = vadd.f32 0.0, %v2484
    %2486 = vdwg.mxu0
    %2487 = vmatpush.msra.mxu0 %v1805
    %2488 = vmatpush.msra.mxu0 %v1801
    %2489 = vmatpush.msra.mxu0 %v1797
    %2490 = vmatpush.msra.mxu0 %v1793
    %2491 = vmatpush.msra.mxu0 %v1789
    %2492 = vmatpush.msra.mxu0 %v1785
    %2493 = vmatpush.msra.mxu0 %v1781
    %2494 = vmatpush.msra.mxu0 %v1777
    %2495 = vmatpush.msra.mxu0 %v1773
    %2496 = vmatpush.msra.mxu0 %v1769
    %2497 = vmatpush.msra.mxu0 %v1765
    %2498 = vmatpush.msra.mxu0 %v1761
    %2499 = vmatpush.msra.mxu0 %v1757
    %2500 = vmatpush.msra.mxu0 %v1753
    %2501 = vmatpush.msra.mxu0 %v1749
    %2502 = vmatpush.msra.mxu0 %v1745
    %2503 = vmatmul.f32.gmra.mxu0 %v2426
    %v2504 = vpop.f32.mrf.mxu0
    %v2505 = vadd.f32 0.0, %v2504
    %2506 = vdwg.mxu0
    %v2507 = vadd.f32 %v2192, %v2445
    %v2508 = vadd.f32 %v2193, %v2465
    %v2509 = vadd.f32 %v2194, %v2485
    %v2510 = vadd.f32 %v2195, %v2505
    %v2511 = vmul.f32 %v2507, 0.5
    %v2512 = vtanh.pop %v2511
    %v2513 = vmul.f32 %v2512, 0.5
    %v2514 = vadd.f32 %v2513, 0.5
    %v2515 = vmul.f32 %v2508, 0.5
    %v2516 = vtanh.pop %v2515
    %v2517 = vmul.f32 %v2516, 0.5
    %v2518 = vadd.f32 %v2517, 0.5
    %v2519 = vtanh.pop %v2509
    %v2520 = vmul.f32 %v2510, 0.5
    %v2521 = vtanh.pop %v2520
    %v2522 = vmul.f32 %v2521, 0.5
    %v2523 = vadd.f32 %v2522, 0.5
    %v2524 = vmul.f32 %v2518, %v2424
    %v2525 = vmul.f32 %v2514, %v2519
    %v2526 = vadd.f32 %v2524, %v2525
    %v2527 = vtanh.pop %v2526
    %v2528 = vmul.f32 %v2523, %v2527
    %2529 = vmatpush.msra.mxu0 %v1802
    %2530 = vmatpush.msra.mxu0 %v1798
    %2531 = vmatpush.msra.mxu0 %v1794
    %2532 = vmatpush.msra.mxu0 %v1790
    %2533 = vmatpush.msra.mxu0 %v1786
    %2534 = vmatpush.msra.mxu0 %v1782
    %2535 = vmatpush.msra.mxu0 %v1778
    %2536 = vmatpush.msra.mxu0 %v1774
    %2537 = vmatpush.msra.mxu0 %v1770
    %2538 = vmatpush.msra.mxu0 %v1766
    %2539 = vmatpush.msra.mxu0 %v1762
    %2540 = vmatpush.msra.mxu0 %v1758
    %2541 = vmatpush.msra.mxu0 %v1754
    %2542 = vmatpush.msra.mxu0 %v1750
    %2543 = vmatpush.msra.mxu0 %v1746
    %2544 = vmatpush.msra.mxu0 %v1742
    %2545 = vmatmul.f32.gmra.mxu0 %v2528
    %v2546 = vpop.f32.mrf.mxu0
    %v2547 = vadd.f32 0.0, %v2546
    %2548 = vdwg.mxu0
    %2549 = vmatpush.msra.mxu0 %v1803
    %2550 = vmatpush.msra.mxu0 %v1799
    %2551 = vmatpush.msra.mxu0 %v1795
    %2552 = vmatpush.msra.mxu0 %v1791
    %2553 = vmatpush.msra.mxu0 %v1787
    %2554 = vmatpush.msra.mxu0 %v1783
    %2555 = vmatpush.msra.mxu0 %v1779
    %2556 = vmatpush.msra.mxu0 %v1775
    %2557 = vmatpush.msra.mxu0 %v1771
    %2558 = vmatpush.msra.mxu0 %v1767
    %2559 = vmatpush.msra.mxu0 %v1763
    %2560 = vmatpush.msra.mxu0 %v1759
    %2561 = vmatpush.msra.mxu0 %v1755
    %2562 = vmatpush.msra.mxu0 %v1751
    %2563 = vmatpush.msra.mxu0 %v1747
    %2564 = vmatpush.msra.mxu0 %v1743
    %2565 = vmatmul.f32.gmra.mxu0 %v2528
    %v2566 = vpop.f32.mrf.mxu0
    %v2567 = vadd.f32 0.0, %v2566
    %2568 = vdwg.mxu0
    %2569 = vmatpush.msra.mxu0 %v1804
    %2570 = vmatpush.msra.mxu0 %v1800
    %2571 = vmatpush.msra.mxu0 %v1796
    %2572 = vmatpush.msra.mxu0 %v1792
    %2573 = vmatpush.msra.mxu0 %v1788
    %2574 = vmatpush.msra.mxu0 %v1784
    %2575 = vmatpush.msra.mxu0 %v1780
    %2576 = vmatpush.msra.mxu0 %v1776
    %2577 = vmatpush.msra.mxu0 %v1772
    %2578 = vmatpush.msra.mxu0 %v1768
    %2579 = vmatpush.msra.mxu0 %v1764
    %2580 = vmatpush.msra.mxu0 %v1760
    %2581 = vmatpush.msra.mxu0 %v1756
    %2582 = vmatpush.msra.mxu0 %v1752
    %2583 = vmatpush.msra.mxu0 %v1748
    %2584 = vmatpush.msra.mxu0 %v1744
    %2585 = vmatmul.f32.gmra.mxu0 %v2528
    %v2586 = vpop.f32.mrf.mxu0
    %v2587 = vadd.f32 0.0, %v2586
    %2588 = vdwg.mxu0
    %2589 = vmatpush.msra.mxu0 %v1805
    %2590 = vmatpush.msra.mxu0 %v1801
    %2591 = vmatpush.msra.mxu0 %v1797
    %2592 = vmatpush.msra.mxu0 %v1793
    %2593 = vmatpush.msra.mxu0 %v1789
    %2594 = vmatpush.msra.mxu0 %v1785
    %2595 = vmatpush.msra.mxu0 %v1781
    %2596 = vmatpush.msra.mxu0 %v1777
    %2597 = vmatpush.msra.mxu0 %v1773
    %2598 = vmatpush.msra.mxu0 %v1769
    %2599 = vmatpush.msra.mxu0 %v1765
    %2600 = vmatpush.msra.mxu0 %v1761
    %2601 = vmatpush.msra.mxu0 %v1757
    %2602 = vmatpush.msra.mxu0 %v1753
    %2603 = vmatpush.msra.mxu0 %v1749
    %2604 = vmatpush.msra.mxu0 %v1745
    %2605 = vmatmul.f32.gmra.mxu0 %v2528
    %v2606 = vpop.f32.mrf.mxu0
    %v2607 = vadd.f32 0.0, %v2606
    %2608 = vdwg.mxu0
    %v2609 = vadd.f32 %v2196, %v2547
    %v2610 = vadd.f32 %v2197, %v2567
    %v2611 = vadd.f32 %v2198, %v2587
    %v2612 = vadd.f32 %v2199, %v2607
    %v2613 = vmul.f32 %v2609, 0.5
    %v2614 = vtanh.pop %v2613
    %v2615 = vmul.f32 %v2614, 0.5
    %v2616 = vadd.f32 %v2615, 0.5
    %v2617 = vmul.f32 %v2610, 0.5
    %v2618 = vtanh.pop %v2617
    %v2619 = vmul.f32 %v2618, 0.5
    %v2620 = vadd.f32 %v2619, 0.5
    %v2621 = vtanh.pop %v2611
    %v2622 = vmul.f32 %v2612, 0.5
    %v2623 = vtanh.pop %v2622
    %v2624 = vmul.f32 %v2623, 0.5
    %v2625 = vadd.f32 %v2624, 0.5
    %v2626 = vmul.f32 %v2620, %v2526
    %v2627 = vmul.f32 %v2616, %v2621
    %v2628 = vadd.f32 %v2626, %v2627
    %v2629 = vtanh.pop %v2628
    %v2630 = vmul.f32 %v2625, %v2629
    %2631 = vmatpush.msra.mxu0 %v1802
    %2632 = vmatpush.msra.mxu0 %v1798
    %2633 = vmatpush.msra.mxu0 %v1794
    %2634 = vmatpush.msra.mxu0 %v1790
    %2635 = vmatpush.msra.mxu0 %v1786
    %2636 = vmatpush.msra.mxu0 %v1782
    %2637 = vmatpush.msra.mxu0 %v1778
    %2638 = vmatpush.msra.mxu0 %v1774
    %2639 = vmatpush.msra.mxu0 %v1770
    %2640 = vmatpush.msra.mxu0 %v1766
    %2641 = vmatpush.msra.mxu0 %v1762
    %2642 = vmatpush.msra.mxu0 %v1758
    %2643 = vmatpush.msra.mxu0 %v1754
    %2644 = vmatpush.msra.mxu0 %v1750
    %2645 = vmatpush.msra.mxu0 %v1746
    %2646 = vmatpush.msra.mxu0 %v1742
    %2647 = vmatmul.f32.gmra.mxu0 %v2630
    %v2648 = vpop.f32.mrf.mxu0
    %v2649 = vadd.f32 0.0, %v2648
    %2650 = vdwg.mxu0
    %2651 = vmatpush.msra.mxu0 %v1803
    %2652 = vmatpush.msra.mxu0 %v1799
    %2653 = vmatpush.msra.mxu0 %v1795
    %2654 = vmatpush.msra.mxu0 %v1791
    %2655 = vmatpush.msra.mxu0 %v1787
    %2656 = vmatpush.msra.mxu0 %v1783
    %2657 = vmatpush.msra.mxu0 %v1779
    %2658 = vmatpush.msra.mxu0 %v1775
    %2659 = vmatpush.msra.mxu0 %v1771
    %2660 = vmatpush.msra.mxu0 %v1767
    %2661 = vmatpush.msra.mxu0 %v1763
    %2662 = vmatpush.msra.mxu0 %v1759
    %2663 = vmatpush.msra.mxu0 %v1755
    %2664 = vmatpush.msra.mxu0 %v1751
    %2665 = vmatpush.msra.mxu0 %v1747
    %2666 = vmatpush.msra.mxu0 %v1743
    %2667 = vmatmul.f32.gmra.mxu0 %v2630
    %v2668 = vpop.f32.mrf.mxu0
    %v2669 = vadd.f32 0.0, %v2668
    %2670 = vdwg.mxu0
    %2671 = vmatpush.msra.mxu0 %v1804
    %2672 = vmatpush.msra.mxu0 %v1800
    %2673 = vmatpush.msra.mxu0 %v1796
    %2674 = vmatpush.msra.mxu0 %v1792
    %2675 = vmatpush.msra.mxu0 %v1788
    %2676 = vmatpush.msra.mxu0 %v1784
    %2677 = vmatpush.msra.mxu0 %v1780
    %2678 = vmatpush.msra.mxu0 %v1776
    %2679 = vmatpush.msra.mxu0 %v1772
    %2680 = vmatpush.msra.mxu0 %v1768
    %2681 = vmatpush.msra.mxu0 %v1764
    %2682 = vmatpush.msra.mxu0 %v1760
    %2683 = vmatpush.msra.mxu0 %v1756
    %2684 = vmatpush.msra.mxu0 %v1752
    %2685 = vmatpush.msra.mxu0 %v1748
    %2686 = vmatpush.msra.mxu0 %v1744
    %2687 = vmatmul.f32.gmra.mxu0 %v2630
    %v2688 = vpop.f32.mrf.mxu0
    %v2689 = vadd.f32 0.0, %v2688
    %2690 = vdwg.mxu0
    %2691 = vmatpush.msra.mxu0 %v1805
    %2692 = vmatpush.msra.mxu0 %v1801
    %2693 = vmatpush.msra.mxu0 %v1797
    %2694 = vmatpush.msra.mxu0 %v1793
    %2695 = vmatpush.msra.mxu0 %v1789
    %2696 = vmatpush.msra.mxu0 %v1785
    %2697 = vmatpush.msra.mxu0 %v1781
    %2698 = vmatpush.msra.mxu0 %v1777
    %2699 = vmatpush.msra.mxu0 %v1773
    %2700 = vmatpush.msra.mxu0 %v1769
    %2701 = vmatpush.msra.mxu0 %v1765
    %2702 = vmatpush.msra.mxu0 %v1761
    %2703 = vmatpush.msra.mxu0 %v1757
    %2704 = vmatpush.msra.mxu0 %v1753
    %2705 = vmatpush.msra.mxu0 %v1749
    %2706 = vmatpush.msra.mxu0 %v1745
    %2707 = vmatmul.f32.gmra.mxu0 %v2630
    %v2708 = vpop.f32.mrf.mxu0
    %v2709 = vadd.f32 0.0, %v2708
    %2710 = vdwg.mxu0
    %v2711 = vadd.f32 %v2200, %v2649
    %v2712 = vadd.f32 %v2201, %v2669
    %v2713 = vadd.f32 %v2202, %v2689
    %v2714 = vadd.f32 %v2203, %v2709
    %v2715 = vmul.f32 %v2711, 0.5
    %v2716 = vtanh.pop %v2715
    %v2717 = vmul.f32 %v2716, 0.5
    %v2718 = vadd.f32 %v2717, 0.5
    %v2719 = vmul.f32 %v2712, 0.5
    %v2720 = vtanh.pop %v2719
    %v2721 = vmul.f32 %v2720, 0.5
    %v2722 = vadd.f32 %v2721, 0.5
    %v2723 = vtanh.pop %v2713
    %v2724 = vmul.f32 %v2714, 0.5
    %v2725 = vtanh.pop %v2724
    %v2726 = vmul.f32 %v2725, 0.5
    %v2727 = vadd.f32 %v2726, 0.5
    %v2728 = vmul.f32 %v2722, %v2628
    %v2729 = vmul.f32 %v2718, %v2723
    %v2730 = vadd.f32 %v2728, %v2729
    %v2731 = vtanh.pop %v2730
    %v2732 = vmul.f32 %v2727, %v2731
    %2733 = vmatpush.msra.mxu0 %v1802
    %2734 = vmatpush.msra.mxu0 %v1798
    %2735 = vmatpush.msra.mxu0 %v1794
    %2736 = vmatpush.msra.mxu0 %v1790
    %2737 = vmatpush.msra.mxu0 %v1786
    %2738 = vmatpush.msra.mxu0 %v1782
    %2739 = vmatpush.msra.mxu0 %v1778
    %2740 = vmatpush.msra.mxu0 %v1774
    %2741 = vmatpush.msra.mxu0 %v1770
    %2742 = vmatpush.msra.mxu0 %v1766
    %2743 = vmatpush.msra.mxu0 %v1762
    %2744 = vmatpush.msra.mxu0 %v1758
    %2745 = vmatpush.msra.mxu0 %v1754
    %2746 = vmatpush.msra.mxu0 %v1750
    %2747 = vmatpush.msra.mxu0 %v1746
    %2748 = vmatpush.msra.mxu0 %v1742
    %2749 = vmatmul.f32.gmra.mxu0 %v2732
    %v2750 = vpop.f32.mrf.mxu0
    %v2751 = vadd.f32 0.0, %v2750
    %2752 = vdwg.mxu0
    %2753 = vmatpush.msra.mxu0 %v1803
    %2754 = vmatpush.msra.mxu0 %v1799
    %2755 = vmatpush.msra.mxu0 %v1795
    %2756 = vmatpush.msra.mxu0 %v1791
    %2757 = vmatpush.msra.mxu0 %v1787
    %2758 = vmatpush.msra.mxu0 %v1783
    %2759 = vmatpush.msra.mxu0 %v1779
    %2760 = vmatpush.msra.mxu0 %v1775
    %2761 = vmatpush.msra.mxu0 %v1771
    %2762 = vmatpush.msra.mxu0 %v1767
    %2763 = vmatpush.msra.mxu0 %v1763
    %2764 = vmatpush.msra.mxu0 %v1759
    %2765 = vmatpush.msra.mxu0 %v1755
    %2766 = vmatpush.msra.mxu0 %v1751
    %2767 = vmatpush.msra.mxu0 %v1747
    %2768 = vmatpush.msra.mxu0 %v1743
    %2769 = vmatmul.f32.gmra.mxu0 %v2732
    %v2770 = vpop.f32.mrf.mxu0
    %v2771 = vadd.f32 0.0, %v2770
    %2772 = vdwg.mxu0
    %2773 = vmatpush.msra.mxu0 %v1804
    %2774 = vmatpush.msra.mxu0 %v1800
    %2775 = vmatpush.msra.mxu0 %v1796
    %2776 = vmatpush.msra.mxu0 %v1792
    %2777 = vmatpush.msra.mxu0 %v1788
    %2778 = vmatpush.msra.mxu0 %v1784
    %2779 = vmatpush.msra.mxu0 %v1780
    %2780 = vmatpush.msra.mxu0 %v1776
    %2781 = vmatpush.msra.mxu0 %v1772
    %2782 = vmatpush.msra.mxu0 %v1768
    %2783 = vmatpush.msra.mxu0 %v1764
    %2784 = vmatpush.msra.mxu0 %v1760
    %2785 = vmatpush.msra.mxu0 %v1756
    %2786 = vmatpush.msra.mxu0 %v1752
    %2787 = vmatpush.msra.mxu0 %v1748
    %2788 = vmatpush.msra.mxu0 %v1744
    %2789 = vmatmul.f32.gmra.mxu0 %v2732
    %v2790 = vpop.f32.mrf.mxu0
    %v2791 = vadd.f32 0.0, %v2790
    %2792 = vdwg.mxu0
    %2793 = vmatpush.msra.mxu0 %v1805
    %2794 = vmatpush.msra.mxu0 %v1801
    %2795 = vmatpush.msra.mxu0 %v1797
    %2796 = vmatpush.msra.mxu0 %v1793
    %2797 = vmatpush.msra.mxu0 %v1789
    %2798 = vmatpush.msra.mxu0 %v1785
    %2799 = vmatpush.msra.mxu0 %v1781
    %2800 = vmatpush.msra.mxu0 %v1777
    %2801 = vmatpush.msra.mxu0 %v1773
    %2802 = vmatpush.msra.mxu0 %v1769
    %2803 = vmatpush.msra.mxu0 %v1765
    %2804 = vmatpush.msra.mxu0 %v1761
    %2805 = vmatpush.msra.mxu0 %v1757
    %2806 = vmatpush.msra.mxu0 %v1753
    %2807 = vmatpush.msra.mxu0 %v1749
    %2808 = vmatpush.msra.mxu0 %v1745
    %2809 = vmatmul.f32.gmra.mxu0 %v2732
    %v2810 = vpop.f32.mrf.mxu0
    %v2811 = vadd.f32 0.0, %v2810
    %2812 = vdwg.mxu0
    %v2813 = vadd.f32 %v2204, %v2751
    %v2814 = vadd.f32 %v2205, %v2771
    %v2815 = vadd.f32 %v2206, %v2791
    %v2816 = vadd.f32 %v2207, %v2811
    %v2817 = vmul.f32 %v2813, 0.5
    %v2818 = vtanh.pop %v2817
    %v2819 = vmul.f32 %v2818, 0.5
    %v2820 = vadd.f32 %v2819, 0.5
    %v2821 = vmul.f32 %v2814, 0.5
    %v2822 = vtanh.pop %v2821
    %v2823 = vmul.f32 %v2822, 0.5
    %v2824 = vadd.f32 %v2823, 0.5
    %v2825 = vtanh.pop %v2815
    %v2826 = vmul.f32 %v2816, 0.5
    %v2827 = vtanh.pop %v2826
    %v2828 = vmul.f32 %v2827, 0.5
    %v2829 = vadd.f32 %v2828, 0.5
    %v2830 = vmul.f32 %v2824, %v2730
    %v2831 = vmul.f32 %v2820, %v2825
    %v2832 = vadd.f32 %v2830, %v2831
    %v2833 = vtanh.pop %v2832
    %v2834 = vmul.f32 %v2829, %v2833
    %2835 = vmatpush.msra.mxu0 %v1802
    %2836 = vmatpush.msra.mxu0 %v1798
    %2837 = vmatpush.msra.mxu0 %v1794
    %2838 = vmatpush.msra.mxu0 %v1790
    %2839 = vmatpush.msra.mxu0 %v1786
    %2840 = vmatpush.msra.mxu0 %v1782
    %2841 = vmatpush.msra.mxu0 %v1778
    %2842 = vmatpush.msra.mxu0 %v1774
    %2843 = vmatpush.msra.mxu0 %v1770
    %2844 = vmatpush.msra.mxu0 %v1766
    %2845 = vmatpush.msra.mxu0 %v1762
    %2846 = vmatpush.msra.mxu0 %v1758
    %2847 = vmatpush.msra.mxu0 %v1754
    %2848 = vmatpush.msra.mxu0 %v1750
    %2849 = vmatpush.msra.mxu0 %v1746
    %2850 = vmatpush.msra.mxu0 %v1742
    %2851 = vmatmul.f32.gmra.mxu0 %v2834
    %v2852 = vpop.f32.mrf.mxu0
    %v2853 = vadd.f32 0.0, %v2852
    %2854 = vdwg.mxu0
    %2855 = vmatpush.msra.mxu0 %v1803
    %2856 = vmatpush.msra.mxu0 %v1799
    %2857 = vmatpush.msra.mxu0 %v1795
    %2858 = vmatpush.msra.mxu0 %v1791
    %2859 = vmatpush.msra.mxu0 %v1787
    %2860 = vmatpush.msra.mxu0 %v1783
    %2861 = vmatpush.msra.mxu0 %v1779
    %2862 = vmatpush.msra.mxu0 %v1775
    %2863 = vmatpush.msra.mxu0 %v1771
    %2864 = vmatpush.msra.mxu0 %v1767
    %2865 = vmatpush.msra.mxu0 %v1763
    %2866 = vmatpush.msra.mxu0 %v1759
    %2867 = vmatpush.msra.mxu0 %v1755
    %2868 = vmatpush.msra.mxu0 %v1751
    %2869 = vmatpush.msra.mxu0 %v1747
    %2870 = vmatpush.msra.mxu0 %v1743
    %2871 = vmatmul.f32.gmra.mxu0 %v2834
    %v2872 = vpop.f32.mrf.mxu0
    %v2873 = vadd.f32 0.0, %v2872
    %2874 = vdwg.mxu0
    %2875 = vmatpush.msra.mxu0 %v1804
    %2876 = vmatpush.msra.mxu0 %v1800
    %2877 = vmatpush.msra.mxu0 %v1796
    %2878 = vmatpush.msra.mxu0 %v1792
    %2879 = vmatpush.msra.mxu0 %v1788
    %2880 = vmatpush.msra.mxu0 %v1784
    %2881 = vmatpush.msra.mxu0 %v1780
    %2882 = vmatpush.msra.mxu0 %v1776
    %2883 = vmatpush.msra.mxu0 %v1772
    %2884 = vmatpush.msra.mxu0 %v1768
    %2885 = vmatpush.msra.mxu0 %v1764
    %2886 = vmatpush.msra.mxu0 %v1760
    %2887 = vmatpush.msra.mxu0 %v1756
    %2888 = vmatpush.msra.mxu0 %v1752
    %2889 = vmatpush.msra.mxu0 %v1748
    %2890 = vmatpush.msra.mxu0 %v1744
    %2891 = vmatmul.f32.gmra.mxu0 %v2834
    %v2892 = vpop.f32.mrf.mxu0
    %v2893 = vadd.f32 0.0, %v2892
    %2894 = vdwg.mxu0
    %2895 = vmatpush.msra.mxu0 %v1805
    %2896 = vmatpush.msra.mxu0 %v1801
    %2897 = vmatpush.msra.mxu0 %v1797
    %2898 = vmatpush.msra.mxu0 %v1793
    %2899 = vmatpush.msra.mxu0 %v1789
    %2900 = vmatpush.msra.mxu0 %v1785
    %2901 = vmatpush.msra.mxu0 %v1781
    %2902 = vmatpush.msra.mxu0 %v1777
    %2903 = vmatpush.msra.mxu0 %v1773
    %2904 = vmatpush.msra.mxu0 %v1769
    %2905 = vmatpush.msra.mxu0 %v1765
    %2906 = vmatpush.msra.mxu0 %v1761
    %2907 = vmatpush.msra.mxu0 %v1757
    %2908 = vmatpush.msra.mxu0 %v1753
    %2909 = vmatpush.msra.mxu0 %v1749
    %2910 = vmatpush.msra.mxu0 %v1745
    %2911 = vmatmul.f32.gmra.mxu0 %v2834
    %v2912 = vpop.f32.mrf.mxu0
    %v2913 = vadd.f32 0.0, %v2912
    %2914 = vdwg.mxu0
    %v2915 = vadd.f32 %v2208, %v2853
    %v2916 = vadd.f32 %v2209, %v2873
    %v2917 = vadd.f32 %v2210, %v2893
    %v2918 = vadd.f32 %v2211, %v2913
    %v2919 = vmul.f32 %v2915, 0.5
    %v2920 = vtanh.pop %v2919
    %v2921 = vmul.f32 %v2920, 0.5
    %v2922 = vadd.f32 %v2921, 0.5
    %v2923 = vmul.f32 %v2916, 0.5
    %v2924 = vtanh.pop %v2923
    %v2925 = vmul.f32 %v2924, 0.5
    %v2926 = vadd.f32 %v2925, 0.5
    %v2927 = vtanh.pop %v2917
    %v2928 = vmul.f32 %v2918, 0.5
    %v2929 = vtanh.pop %v2928
    %v2930 = vmul.f32 %v2929, 0.5
    %v2931 = vadd.f32 %v2930, 0.5
    %v2932 = vmul.f32 %v2926, %v2832
    %v2933 = vmul.f32 %v2922, %v2927
    %v2934 = vadd.f32 %v2932, %v2933
    %v2935 = vtanh.pop %v2934
    %v2936 = vmul.f32 %v2931, %v2935
    %2937 = vmatpush.msra.mxu0 %v1802
    %2938 = vmatpush.msra.mxu0 %v1798
    %2939 = vmatpush.msra.mxu0 %v1794
    %2940 = vmatpush.msra.mxu0 %v1790
    %2941 = vmatpush.msra.mxu0 %v1786
    %2942 = vmatpush.msra.mxu0 %v1782
    %2943 = vmatpush.msra.mxu0 %v1778
    %2944 = vmatpush.msra.mxu0 %v1774
    %2945 = vmatpush.msra.mxu0 %v1770
    %2946 = vmatpush.msra.mxu0 %v1766
    %2947 = vmatpush.msra.mxu0 %v1762
    %2948 = vmatpush.msra.mxu0 %v1758
    %2949 = vmatpush.msra.mxu0 %v1754
    %2950 = vmatpush.msra.mxu0 %v1750
    %2951 = vmatpush.msra.mxu0 %v1746
    %2952 = vmatpush.msra.mxu0 %v1742
    %2953 = vmatmul.f32.gmra.mxu0 %v2936
    %v2954 = vpop.f32.mrf.mxu0
    %v2955 = vadd.f32 0.0, %v2954
    %2956 = vdwg.mxu0
    %2957 = vmatpush.msra.mxu0 %v1803
    %2958 = vmatpush.msra.mxu0 %v1799
    %2959 = vmatpush.msra.mxu0 %v1795
    %2960 = vmatpush.msra.mxu0 %v1791
    %2961 = vmatpush.msra.mxu0 %v1787
    %2962 = vmatpush.msra.mxu0 %v1783
    %2963 = vmatpush.msra.mxu0 %v1779
    %2964 = vmatpush.msra.mxu0 %v1775
    %2965 = vmatpush.msra.mxu0 %v1771
    %2966 = vmatpush.msra.mxu0 %v1767
    %2967 = vmatpush.msra.mxu0 %v1763
    %2968 = vmatpush.msra.mxu0 %v1759
    %2969 = vmatpush.msra.mxu0 %v1755
    %2970 = vmatpush.msra.mxu0 %v1751
    %2971 = vmatpush.msra.mxu0 %v1747
    %2972 = vmatpush.msra.mxu0 %v1743
    %2973 = vmatmul.f32.gmra.mxu0 %v2936
    %v2974 = vpop.f32.mrf.mxu0
    %v2975 = vadd.f32 0.0, %v2974
    %2976 = vdwg.mxu0
    %2977 = vmatpush.msra.mxu0 %v1804
    %2978 = vmatpush.msra.mxu0 %v1800
    %2979 = vmatpush.msra.mxu0 %v1796
    %2980 = vmatpush.msra.mxu0 %v1792
    %2981 = vmatpush.msra.mxu0 %v1788
    %2982 = vmatpush.msra.mxu0 %v1784
    %2983 = vmatpush.msra.mxu0 %v1780
    %2984 = vmatpush.msra.mxu0 %v1776
    %2985 = vmatpush.msra.mxu0 %v1772
    %2986 = vmatpush.msra.mxu0 %v1768
    %2987 = vmatpush.msra.mxu0 %v1764
    %2988 = vmatpush.msra.mxu0 %v1760
    %2989 = vmatpush.msra.mxu0 %v1756
    %2990 = vmatpush.msra.mxu0 %v1752
    %2991 = vmatpush.msra.mxu0 %v1748
    %2992 = vmatpush.msra.mxu0 %v1744
    %2993 = vmatmul.f32.gmra.mxu0 %v2936
    %v2994 = vpop.f32.mrf.mxu0
    %v2995 = vadd.f32 0.0, %v2994
    %2996 = vdwg.mxu0
    %2997 = vmatpush.msra.mxu0 %v1805
    %2998 = vmatpush.msra.mxu0 %v1801
    %2999 = vmatpush.msra.mxu0 %v1797
    %3000 = vmatpush.msra.mxu0 %v1793
    %3001 = vmatpush.msra.mxu0 %v1789
    %3002 = vmatpush.msra.mxu0 %v1785
    %3003 = vmatpush.msra.mxu0 %v1781
    %3004 = vmatpush.msra.mxu0 %v1777
    %3005 = vmatpush.msra.mxu0 %v1773
    %3006 = vmatpush.msra.mxu0 %v1769
    %3007 = vmatpush.msra.mxu0 %v1765
    %3008 = vmatpush.msra.mxu0 %v1761
    %3009 = vmatpush.msra.mxu0 %v1757
    %3010 = vmatpush.msra.mxu0 %v1753
    %3011 = vmatpush.msra.mxu0 %v1749
    %3012 = vmatpush.msra.mxu0 %v1745
    %3013 = vmatmul.f32.gmra.mxu0 %v2936
    %v3014 = vpop.f32.mrf.mxu0
    %v3015 = vadd.f32 0.0, %v3014
    %3016 = vdwg.mxu0
    %v3017 = vadd.f32 %v2212, %v2955
    %v3018 = vadd.f32 %v2213, %v2975
    %v3019 = vadd.f32 %v2214, %v2995
    %v3020 = vadd.f32 %v2215, %v3015
    %v3021 = vmul.f32 %v3017, 0.5
    %v3022 = vtanh.pop %v3021
    %v3023 = vmul.f32 %v3022, 0.5
    %v3024 = vadd.f32 %v3023, 0.5
    %v3025 = vmul.f32 %v3018, 0.5
    %v3026 = vtanh.pop %v3025
    %v3027 = vmul.f32 %v3026, 0.5
    %v3028 = vadd.f32 %v3027, 0.5
    %v3029 = vtanh.pop %v3019
    %v3030 = vmul.f32 %v3020, 0.5
    %v3031 = vtanh.pop %v3030
    %v3032 = vmul.f32 %v3031, 0.5
    %v3033 = vadd.f32 %v3032, 0.5
    %v3034 = vmul.f32 %v3028, %v2934
    %v3035 = vmul.f32 %v3024, %v3029
    %v3036 = vadd.f32 %v3034, %v3035
    %v3037 = vtanh.pop %v3036
    %v3038 = vmul.f32 %v3033, %v3037
    %v3039 = vmul.f32 %v3038, %v2218
    %v3040 = vmul.f32 %v2324, %v2222
    %v3041 = vadd.f32 %v3039, %v3040
    %3042 = vadd.xlane.f32.xlu0 %v3041
    %v3043 = vpop.xlane.xlu0 %3042
    %v3044 = vmul.f32 %v3043, 0.03125
    %v3045 = vmul.f32 %v3041, %v3041
    %3046 = vadd.xlane.f32.xlu0 %v3045
    %v3047 = vpop.xlane.xlu0 %3046
    %v3048 = vmul.f32 %v3047, 0.03125
    %v3049 = vmul.f32 %v3044, %v3044
    %v3050 = vsub.f32 %v3048, %v3049
    %v3051 = vadd.f32 %v3050, 1e-05
    %v3052 = vrsqrt.pop %v3051
    %v3053 = vmul.f32 %v3052, %v3051
    %v3054 = vmul.f32 %v3053, %v3052
    %v3055 = vmul.f32 0.5, %v3054
    %v3056 = vsub.f32 1.5, %v3055
    %v3057 = vmul.f32 %v3052, %v3056
    %vm3058 = vweird.f32 %v3051
    %vm3059 = vweird.f32 %v3052
    %vm3060 = vmor %vm3058, %vm3059
    %v3061 = vsel %vm3060, %v3052, %v3057
    %3062 = vmatpush.msra.mxu0 %v1821
    %3063 = vmatpush.msra.mxu0 %v1820
    %3064 = vmatpush.msra.mxu0 %v1819
    %3065 = vmatpush.msra.mxu0 %v1818
    %3066 = vmatpush.msra.mxu0 %v1817
    %3067 = vmatpush.msra.mxu0 %v1816
    %3068 = vmatpush.msra.mxu0 %v1815
    %3069 = vmatpush.msra.mxu0 %v1814
    %3070 = vmatpush.msra.mxu0 %v1813
    %3071 = vmatpush.msra.mxu0 %v1812
    %3072 = vmatpush.msra.mxu0 %v1811
    %3073 = vmatpush.msra.mxu0 %v1810
    %3074 = vmatpush.msra.mxu0 %v1809
    %3075 = vmatpush.msra.mxu0 %v1808
    %3076 = vmatpush.msra.mxu0 %v1807
    %3077 = vmatpush.msra.mxu0 %v1806
    %3078 = vmatmul.f32.gmra.mxu0 %v3041
    %v3079 = vpop.f32.mrf.mxu0
    %v3080 = vadd.f32 0.0, %v3079
    %3081 = vdwg.mxu0
    %v3082 = vperm.slane %v1822, 0
    %v3083 = vperm.slane %v1822, 1
    %v3084 = vmul.f32 %v3044, %v3082
    %v3085 = vsub.f32 %v3080, %v3084
    %v3086 = vmul.f32 %v3061, %v3085
    %v3087 = vadd.f32 %v3086, %v3083
    %vm3088 = vcmask 130048
    %3089 = vst.msk [vmem:[#allocation10] sm:$0xff] %vm3088, %v3087
    // Predicated region
    $region70: #{tpu_custom_call.1} parent=1 // pred_check
      _
    $region71: #{tpu_custom_call.1} parent=1 // pred_check_branch
      %3091 = sbr.rel (0) target = $region73
    $region72: #{tpu_custom_call.1} parent=1 // pred_region
      %3093 = vsyncadd [#allocation4], 0
      %s3095 = sshll.u32 [#allocation10], 4
      %s3096 = int_to_ptr.vmem [resolvable:$true] %s3095
      %s3097 = sshll.u32 %s13, 4
      %s3098 = int_to_ptr.hbm [resolvable:$true] %s3097
      %3100 = dma.vmem_to_hbm [thread:$0]  %s3096, 128, %s3098, [#allocation4]
    $region73: #{tpu_custom_call.1} parent=1 // pred_fallthru
      _
    // Predicated region
    $region74: #{tpu_custom_call.1} parent=1 // pred_check
      _
    $region75: #{tpu_custom_call.1} parent=1 // pred_check_branch
      %3102 = sbr.rel (0) target = $region77
    $region76: #{tpu_custom_call.1} parent=1 // pred_region
      %3104 = dma.done [#allocation4], 128
    $region77: #{tpu_custom_call.1} parent=1 // pred_fallthru
      _
    %3105 = vsyncpa [#allocation3], 1
    %3106 = vsyncpa [#allocation6], 1
    %3107 = vsyncpa [#allocation9], 1
    %3108 = vsyncpa [#allocation4], 1

</llo_original>
